<compile_context>
chip_gen: v7x
topology: tpu7x:2x2x1
jax: 0.10.0
libtpu: 0.0.40
codegen_flags: <defaults>
</compile_context>

<pallas_src>
import functools

import jax
import jax.numpy as jnp
from jax.experimental import pallas as pl
from jax.experimental.pallas import tpu as pltpu


_UNROLL_ROWS = 64  # fully unroll the per-row loops when Ho <= this


# ----------------------------------------------------------------------------
# Pallas kernel: per batch  LeakyReLU -> parity-select -> 1x1 convs -> IN.
# ----------------------------------------------------------------------------
def _factorized_reduce_kernel(x_ref, w_ref, s_ref, gamma_ref, beta_ref,
                              o_ref, acc_ref, accsq_ref, *, ho, wo):
    # x_ref:     (1, C_in, Ho, 2W) f32   row 2i | row 2i+1 concatenated on lanes
    # w_ref:     (2, C_half, C_in) bf16  (conv_1, conv_2) weights
    # s_ref:     (2, 2W, Wo)       bf16  0/1 parity-selection matrices
    # gamma_ref: (2, C_half, 1)    f32
    # beta_ref:  (2, C_half, 1)    f32
    # o_ref:     (1, 2, C_half, Ho, Wo) f32
    # acc_ref / accsq_ref: VMEM (2, C_half, Wo) f32 (InstanceNorm partial sums)
    c_half = w_ref.shape[1]

    w0 = w_ref[0]          # (C_half, C_in) bf16, resident
    w1 = w_ref[1]
    s0 = s_ref[0]          # (2W, Wo) bf16, resident
    s1 = s_ref[1]

    acc_ref[...] = jnp.zeros_like(acc_ref)
    accsq_ref[...] = jnp.zeros_like(accsq_ref)

    def conv_row(t):
        xr = x_ref[0, :, t, :]                             # (C_in, 2W) f32
        # LeakyReLU (negative_slope=0.01, PyTorch default), f32 math.
        xr = jnp.where(xr >= 0.0, xr, 0.01 * xr)
        xb = xr.astype(jnp.bfloat16)
        # Parity selection on the MXU (exact: one 1.0 per output column).
        #   branch 0 -> input row 2t,   even columns
        #   branch 1 -> input row 2t+1, odd  columns
        x0 = jnp.dot(xb, s0, preferred_element_type=jnp.float32
                     ).astype(jnp.bfloat16)                # (C_in, Wo)
        x1 = jnp.dot(xb, s1, preferred_element_type=jnp.float32
                     ).astype(jnp.bfloat16)
        # 1x1 convs: bf16 MXU, f32 accumulation.
        y0 = jnp.dot(w0, x0, preferred_element_type=jnp.float32)  # (C_half, Wo)
        y1 = jnp.dot(w1, x1, preferred_element_type=jnp.float32)
        o_ref[0, 0, :, t, :] = y0
        o_ref[0, 1, :, t, :] = y1
        acc_ref[0] += y0
        acc_ref[1] += y1
        accsq_ref[0] += y0 * y0
        accsq_ref[1] += y1 * y1

    if ho <= _UNROLL_ROWS:
        for t in range(ho):
            conv_row(t)
    else:
        def _body(t, carry):
            conv_row(t)
            return carry
        jax.lax.fori_loop(0, ho, _body, 0)

    # InstanceNorm2d statistics: per (branch, channel) over Ho*Wo, single pass
    # (sum / sum-of-squares) with a max(var, 0) guard against f32 cancellation.
    inv_n = 1.0 / float(ho * wo)
    s = jnp.sum(acc_ref[...], axis=2, keepdims=True)       # (2, C_half, 1)
    ss = jnp.sum(accsq_ref[...], axis=2, keepdims=True)
    mean = s * inv_n
    var = jnp.maximum(ss * inv_n - mean * mean, 0.0)
    inv_std = jax.lax.rsqrt(var + 1e-5)
    scale = inv_std * gamma_ref[...]                        # (2, C_half, 1)
    shift = beta_ref[...] - mean * scale
    # Hoist the lane broadcast out of the row loop (JAX doesn't CSE it).
    scale_b = jnp.broadcast_to(scale, (2, c_half, wo))
    shift_b = jnp.broadcast_to(shift, (2, c_half, wo))

    def norm_row(t):
        row = o_ref[0, :, :, t, :]                          # (2, C_half, Wo)
        o_ref[0, :, :, t, :] = row * scale_b + shift_b

    if ho <= _UNROLL_ROWS:
        for t in range(ho):
            norm_row(t)
    else:
        def _body2(t, carry):
            norm_row(t)
            return carry
        jax.lax.fori_loop(0, ho, _body2, 0)


# ----------------------------------------------------------------------------
# Wrapper (NCHW in / NCHW out, matching the PyTorch module).
# ----------------------------------------------------------------------------
def _padded_block_bytes(shape, itembytes):
    """VMEM footprint of a block: sublane dim -> mult of 8, lane dim -> mult of 128."""
    *lead, sub, lane = shape
    sub_p = -(-sub // 8) * 8
    lane_p = -(-lane // 128) * 128
    b = itembytes * sub_p * lane_p
    for d in lead:
        b *= d
    return b


def factorized_reduce(x, w1, w2, gamma, beta):
    """FactorizedReduce forward.

    x:      (N, C_in, H, W) float32, H and W even
    w1:     (C_half, C_in, 1, 1)  conv_1 weight
    w2:     (C_half, C_in, 1, 1)  conv_2 weight
    gamma:  (2*C_half,)  InstanceNorm affine weight
    beta:   (2*C_half,)  InstanceNorm affine bias
    returns (N, 2*C_half, H//2, W//2) float32 NCHW
    """
    n, c_in, h, w = x.shape
    assert h % 2 == 0 and w % 2 == 0, "FactorizedReduce needs even H, W"
    c_half = w1.shape[0]
    ho, wo = h // 2, w // 2

    x = x.astype(jnp.float32)
    # Free row-major reshape: x4[n, c, i, k] == x[n, c, 2i + k//W, k % W].
    x4 = x.reshape(n, c_in, ho, 2 * w)

    # 0/1 parity-selection matrices (tiny, exact in bf16).
    k = jnp.arange(2 * w)[:, None]
    j = jnp.arange(wo)[None, :]
    s0 = (k == 2 * j).astype(jnp.bfloat16)                # row 2i,   col 2j
    s1 = (k == (w + 2 * j + 1)).astype(jnp.bfloat16)      # row 2i+1, col 2j+1
    sel = jnp.stack([s0, s1], axis=0)                     # (2, 2W, Wo)

    w_stack = jnp.stack([w1.reshape(c_half, c_in),
                         w2.reshape(c_half, c_in)], axis=0).astype(jnp.bfloat16)
    gamma2 = gamma.reshape(2, c_half, 1).astype(jnp.float32)
    beta2 = beta.reshape(2, c_half, 1).astype(jnp.float32)

    # VMEM budget from actual block bytes (double-buffered x block, output
    # block, resident weights/selectors, scratches) + headroom.
    x_blk = _padded_block_bytes((c_in, ho, 2 * w), 4)
    o_blk = _padded_block_bytes((2, c_half, ho, wo), 4)
    small = (_padded_block_bytes((2, 2 * w, wo), 2)
             + _padded_block_bytes((2, c_half, c_in), 2)
             + 4 * _padded_block_bytes((2, c_half, wo), 4))
    est = 2 * x_blk + 2 * o_blk + small + (4 << 20)
    vmem_limit = max(32 * 1024 * 1024, min(100 * 1024 * 1024, int(est * 1.25)))
    # TODO(synk): for very large C_in*H*W on v7x (64 MiB VMEM), add a row-tile
    # grid axis (output block resident across it, two-pass IN stats) instead of
    # whole-image blocks.

    kernel = functools.partial(_factorized_reduce_kernel, ho=ho, wo=wo)
    out = pl.pallas_call(
        kernel,
        out_shape=jax.ShapeDtypeStruct((n, 2, c_half, ho, wo), jnp.float32),
        grid_spec=pltpu.PrefetchScalarGridSpec(
            num_scalar_prefetch=0,
            grid=(n,),
            in_specs=[
                pl.BlockSpec((1, c_in, ho, 2 * w), lambda b: (b, 0, 0, 0)),
                pl.BlockSpec((2, c_half, c_in), lambda b: (0, 0, 0)),
                pl.BlockSpec((2, 2 * w, wo), lambda b: (0, 0, 0)),
                pl.BlockSpec((2, c_half, 1), lambda b: (0, 0, 0)),
                pl.BlockSpec((2, c_half, 1), lambda b: (0, 0, 0)),
            ],
            out_specs=pl.BlockSpec((1, 2, c_half, ho, wo),
                                   lambda b: (b, 0, 0, 0, 0)),
            scratch_shapes=[pltpu.VMEM((2, c_half, wo), jnp.float32),
                            pltpu.VMEM((2, c_half, wo), jnp.float32)],
        ),
        compiler_params=pltpu.CompilerParams(
            dimension_semantics=("parallel",),
            vmem_limit_bytes=vmem_limit),
    )(x4, w_stack, sel, gamma2, beta2)

    # (N, 2, C_half, Ho, Wo): branch-major == torch.cat([conv_1, conv_2], 1);
    # plain (free) reshape to NCHW, no transpose pass.
    return out.reshape(n, 2 * c_half, ho, wo)


# ----------------------------------------------------------------------------
# Pure-JAX reference (sanity check only).
# ----------------------------------------------------------------------------
def reference(x, w1, w2, gamma, beta):
    x_act = jnp.where(x >= 0.0, x, 0.01 * x)
    dn = ("NCHW", "OIHW", "NCHW")
    o1 = jax.lax.conv_general_dilated(x_act, w1, (2, 2), "VALID",
                                      dimension_numbers=dn)
    o2 = jax.lax.conv_general_dilated(x_act[:, :, 1:, 1:], w2, (2, 2), "VALID",
                                      dimension_numbers=dn)
    y = jnp.concatenate([o1, o2], axis=1)
    mean = jnp.mean(y, axis=(2, 3), keepdims=True)
    var = jnp.mean((y - mean) ** 2, axis=(2, 3), keepdims=True)
    y_hat = (y - mean) / jnp.sqrt(var + 1e-5)
    return y_hat * gamma[None, :, None, None] + beta[None, :, None, None]


if __name__ == "__main__":
    # Small shapes consistent with the module (C_out must be even).
    N, C_in, H, W = 2, 4, 16, 16
    C_out = 8
    C_half = C_out // 2

    key = jax.random.PRNGKey(0)
    kx, k1, k2, kg, kb = jax.random.split(key, 5)
    x = jax.random.normal(kx, (N, C_in, H, W), dtype=jnp.float32)
    w1 = 0.1 * jax.random.normal(k1, (C_half, C_in, 1, 1), dtype=jnp.float32)
    w2 = 0.1 * jax.random.normal(k2, (C_half, C_in, 1, 1), dtype=jnp.float32)
    gamma = 1.0 + 0.1 * jax.random.normal(kg, (C_out,), dtype=jnp.float32)
    beta = 0.1 * jax.random.normal(kb, (C_out,), dtype=jnp.float32)

    out = jax.jit(factorized_reduce)(x, w1, w2, gamma, beta)
    out = jax.block_until_ready(out)

    ref = reference(x, w1, w2, gamma, beta)
    assert out.shape == ref.shape == (N, C_out, H // 2, W // 2), out.shape
    err = float(jnp.max(jnp.abs(out - ref)))
    assert err < 3e-2, err

    print("KERNEL_OK")
</pallas_src>

<mosaic_0001>
module attributes {stable_mosaic.version = 11 : i64} {
  func.func @_factorized_reduce_kernel(%arg0: i32, %arg1: memref<1x4x8x32xf32, #tpu.memory_space<vmem>>, %arg2: memref<2x4x4xbf16, #tpu.memory_space<vmem>>, %arg3: memref<2x32x8xbf16, #tpu.memory_space<vmem>>, %arg4: memref<2x4x1xf32, #tpu.memory_space<vmem>>, %arg5: memref<2x4x1xf32, #tpu.memory_space<vmem>>, %arg6: memref<1x2x4x8x8xf32, #tpu.memory_space<vmem>>, %arg7: memref<2x4x8xf32, #tpu.memory_space<vmem>>, %arg8: memref<2x4x8xf32, #tpu.memory_space<vmem>>) attributes {dimension_semantics = [#tpu.dimension_semantics<parallel>], iteration_bounds = array<i64: 2>, scalar_prefetch = 0 : i64, scratch_operands = 2 : i64, tpu.core_type = #tpu.core_type<tc>, window_params = [{transform_indices = @transform_0, window_bounds = array<i64: 1, 4, 8, 32>}, {pipeline_mode = #tpu.pipeline_mode<synchronous>, transform_indices = @transform_1, window_bounds = array<i64: 2, 4, 4>}, {pipeline_mode = #tpu.pipeline_mode<synchronous>, transform_indices = @transform_2, window_bounds = array<i64: 2, 32, 8>}, {pipeline_mode = #tpu.pipeline_mode<synchronous>, transform_indices = @transform_3, window_bounds = array<i64: 2, 4, 1>}, {pipeline_mode = #tpu.pipeline_mode<synchronous>, transform_indices = @transform_4, window_bounds = array<i64: 2, 4, 1>}, {transform_indices = @transform_5, window_bounds = array<i64: 1, 2, 4, 8, 8>}]} {
    %c0 = arith.constant 0 : index
    %c0_0 = arith.constant 0 : index
    %c0_1 = arith.constant 0 : index
    %0 = vector.load %arg2[%c0, %c0_0, %c0_1] : memref<2x4x4xbf16, #tpu.memory_space<vmem>>, vector<1x4x4xbf16>
    %1 = vector.shape_cast %0 : vector<1x4x4xbf16> to vector<4x4xbf16>
    %c1 = arith.constant 1 : index
    %c0_2 = arith.constant 0 : index
    %c0_3 = arith.constant 0 : index
    %2 = vector.load %arg2[%c1, %c0_2, %c0_3] : memref<2x4x4xbf16, #tpu.memory_space<vmem>>, vector<1x4x4xbf16>
    %3 = vector.shape_cast %2 : vector<1x4x4xbf16> to vector<4x4xbf16>
    %c0_4 = arith.constant 0 : index
    %c0_5 = arith.constant 0 : index
    %c0_6 = arith.constant 0 : index
    %4 = vector.load %arg3[%c0_4, %c0_5, %c0_6] : memref<2x32x8xbf16, #tpu.memory_space<vmem>>, vector<1x32x8xbf16>
    %5 = vector.shape_cast %4 : vector<1x32x8xbf16> to vector<32x8xbf16>
    %c1_7 = arith.constant 1 : index
    %c0_8 = arith.constant 0 : index
    %c0_9 = arith.constant 0 : index
    %6 = vector.load %arg3[%c1_7, %c0_8, %c0_9] : memref<2x32x8xbf16, #tpu.memory_space<vmem>>, vector<1x32x8xbf16>
    %7 = vector.shape_cast %6 : vector<1x32x8xbf16> to vector<32x8xbf16>
    %cst = arith.constant 0.000000e+00 : f32
    %8 = vector.broadcast %cst : f32 to vector<2x4x8xf32>
    %c0_10 = arith.constant 0 : index
    %c0_11 = arith.constant 0 : index
    %c0_12 = arith.constant 0 : index
    %9 = vector.load %arg7[%c0_10, %c0_11, %c0_12] : memref<2x4x8xf32, #tpu.memory_space<vmem>>, vector<2x4x8xf32>
    tpu.vector_store %arg7[%c0_10, %c0_11, %c0_12], %8 {strides = array<i32>} : memref<2x4x8xf32, #tpu.memory_space<vmem>>, vector<2x4x8xf32>,
    %cst_13 = arith.constant 0.000000e+00 : f32
    %10 = vector.broadcast %cst_13 : f32 to vector<2x4x8xf32>
    %c0_14 = arith.constant 0 : index
    %c0_15 = arith.constant 0 : index
    %c0_16 = arith.constant 0 : index
    %11 = vector.load %arg8[%c0_14, %c0_15, %c0_16] : memref<2x4x8xf32, #tpu.memory_space<vmem>>, vector<2x4x8xf32>
    tpu.vector_store %arg8[%c0_14, %c0_15, %c0_16], %10 {strides = array<i32>} : memref<2x4x8xf32, #tpu.memory_space<vmem>>, vector<2x4x8xf32>,
    %c0_17 = arith.constant 0 : index
    %c0_18 = arith.constant 0 : index
    %c0_19 = arith.constant 0 : index
    %c0_20 = arith.constant 0 : index
    %12 = vector.load %arg1[%c0_17, %c0_18, %c0_19, %c0_20] : memref<1x4x8x32xf32, #tpu.memory_space<vmem>>, vector<1x4x1x32xf32>
    %13 = vector.shape_cast %12 : vector<1x4x1x32xf32> to vector<4x32xf32>
    %cst_21 = arith.constant 0.000000e+00 : f32
    %14 = vector.broadcast %cst_21 : f32 to vector<4x32xf32>
    %15 = arith.cmpf oge, %13, %14 : vector<4x32xf32>
    %cst_22 = arith.constant 0.00999999977 : f32
    %16 = vector.broadcast %cst_22 : f32 to vector<4x32xf32>
    %17 = arith.mulf %16, %13 : vector<4x32xf32>
    %18 = arith.select %15, %13, %17 : vector<4x32xi1>, vector<4x32xf32>
    %19 = arith.truncf %18 : vector<4x32xf32> to vector<4x32xbf16>
    %cst_23 = arith.constant dense<0.000000e+00> : vector<4x8xf32>
    %20 = tpu.matmul %19, %5, %cst_23 {dimension_numbers = #tpu.dot_dimension_numbers<[1], [0], [0], [1], [0, 0, 1, 1], [], []>} : vector<4x32xbf16>, vector<32x8xbf16>, vector<4x8xf32> -> vector<4x8xf32>
    %21 = arith.truncf %20 : vector<4x8xf32> to vector<4x8xbf16>
    %cst_24 = arith.constant dense<0.000000e+00> : vector<4x8xf32>
    %22 = tpu.matmul %19, %7, %cst_24 {dimension_numbers = #tpu.dot_dimension_numbers<[1], [0], [0], [1], [0, 0, 1, 1], [], []>} : vector<4x32xbf16>, vector<32x8xbf16>, vector<4x8xf32> -> vector<4x8xf32>
    %23 = arith.truncf %22 : vector<4x8xf32> to vector<4x8xbf16>
    %cst_25 = arith.constant dense<0.000000e+00> : vector<4x8xf32>
    %24 = tpu.matmul %1, %21, %cst_25 {dimension_numbers = #tpu.dot_dimension_numbers<[1], [0], [0], [1], [0, 0, 1, 1], [], []>} : vector<4x4xbf16>, vector<4x8xbf16>, vector<4x8xf32> -> vector<4x8xf32>
    %cst_26 = arith.constant dense<0.000000e+00> : vector<4x8xf32>
    %25 = tpu.matmul %3, %23, %cst_26 {dimension_numbers = #tpu.dot_dimension_numbers<[1], [0], [0], [1], [0, 0, 1, 1], [], []>} : vector<4x4xbf16>, vector<4x8xbf16>, vector<4x8xf32> -> vector<4x8xf32>
    %c0_27 = arith.constant 0 : index
    %c0_28 = arith.constant 0 : index
    %c0_29 = arith.constant 0 : index
    %c0_30 = arith.constant 0 : index
    %c0_31 = arith.constant 0 : index
    %26 = vector.load %arg6[%c0_27, %c0_28, %c0_29, %c0_30, %c0_31] : memref<1x2x4x8x8xf32, #tpu.memory_space<vmem>>, vector<1x1x4x1x8xf32>
    %27 = vector.shape_cast %26 : vector<1x1x4x1x8xf32> to vector<4x8xf32>
    %28 = vector.shape_cast %24 : vector<4x8xf32> to vector<1x1x4x1x8xf32>
    tpu.vector_store %arg6[%c0_27, %c0_28, %c0_29, %c0_30, %c0_31], %28 {strides = array<i32>} : memref<1x2x4x8x8xf32, #tpu.memory_space<vmem>>, vector<1x1x4x1x8xf32>,
    %c0_32 = arith.constant 0 : index
    %c1_33 = arith.constant 1 : index
    %c0_34 = arith.constant 0 : index
    %c0_35 = arith.constant 0 : index
    %c0_36 = arith.constant 0 : index
    %29 = vector.load %arg6[%c0_32, %c1_33, %c0_34, %c0_35, %c0_36] : memref<1x2x4x8x8xf32, #tpu.memory_space<vmem>>, vector<1x1x4x1x8xf32>
    %30 = vector.shape_cast %29 : vector<1x1x4x1x8xf32> to vector<4x8xf32>
    %31 = vector.shape_cast %25 : vector<4x8xf32> to vector<1x1x4x1x8xf32>
    tpu.vector_store %arg6[%c0_32, %c1_33, %c0_34, %c0_35, %c0_36], %31 {strides = array<i32>} : memref<1x2x4x8x8xf32, #tpu.memory_space<vmem>>, vector<1x1x4x1x8xf32>,
    %c0_37 = arith.constant 0 : index
    %c0_38 = arith.constant 0 : index
    %c0_39 = arith.constant 0 : index
    %32 = vector.load %arg7[%c0_37, %c0_38, %c0_39] : memref<2x4x8xf32, #tpu.memory_space<vmem>>, vector<1x4x8xf32>
    %33 = vector.shape_cast %32 : vector<1x4x8xf32> to vector<4x8xf32>
    %34 = arith.addf %33, %24 : vector<4x8xf32>
    %c0_40 = arith.constant 0 : index
    %c0_41 = arith.constant 0 : index
    %c0_42 = arith.constant 0 : index
    %35 = vector.load %arg7[%c0_40, %c0_41, %c0_42] : memref<2x4x8xf32, #tpu.memory_space<vmem>>, vector<1x4x8xf32>
    %36 = vector.shape_cast %35 : vector<1x4x8xf32> to vector<4x8xf32>
    %37 = vector.shape_cast %34 : vector<4x8xf32> to vector<1x4x8xf32>
    tpu.vector_store %arg7[%c0_40, %c0_41, %c0_42], %37 {strides = array<i32>} : memref<2x4x8xf32, #tpu.memory_space<vmem>>, vector<1x4x8xf32>,
    %c1_43 = arith.constant 1 : index
    %c0_44 = arith.constant 0 : index
    %c0_45 = arith.constant 0 : index
    %38 = vector.load %arg7[%c1_43, %c0_44, %c0_45] : memref<2x4x8xf32, #tpu.memory_space<vmem>>, vector<1x4x8xf32>
    %39 = vector.shape_cast %38 : vector<1x4x8xf32> to vector<4x8xf32>
    %40 = arith.addf %39, %25 : vector<4x8xf32>
    %c1_46 = arith.constant 1 : index
    %c0_47 = arith.constant 0 : index
    %c0_48 = arith.constant 0 : index
    %41 = vector.load %arg7[%c1_46, %c0_47, %c0_48] : memref<2x4x8xf32, #tpu.memory_space<vmem>>, vector<1x4x8xf32>
    %42 = vector.shape_cast %41 : vector<1x4x8xf32> to vector<4x8xf32>
    %43 = vector.shape_cast %40 : vector<4x8xf32> to vector<1x4x8xf32>
    tpu.vector_store %arg7[%c1_46, %c0_47, %c0_48], %43 {strides = array<i32>} : memref<2x4x8xf32, #tpu.memory_space<vmem>>, vector<1x4x8xf32>,
    %c0_49 = arith.constant 0 : index
    %c0_50 = arith.constant 0 : index
    %c0_51 = arith.constant 0 : index
    %44 = vector.load %arg8[%c0_49, %c0_50, %c0_51] : memref<2x4x8xf32, #tpu.memory_space<vmem>>, vector<1x4x8xf32>
    %45 = vector.shape_cast %44 : vector<1x4x8xf32> to vector<4x8xf32>
    %46 = arith.mulf %24, %24 : vector<4x8xf32>
    %47 = arith.addf %45, %46 : vector<4x8xf32>
    %c0_52 = arith.constant 0 : index
    %c0_53 = arith.constant 0 : index
    %c0_54 = arith.constant 0 : index
    %48 = vector.load %arg8[%c0_52, %c0_53, %c0_54] : memref<2x4x8xf32, #tpu.memory_space<vmem>>, vector<1x4x8xf32>
    %49 = vector.shape_cast %48 : vector<1x4x8xf32> to vector<4x8xf32>
    %50 = vector.shape_cast %47 : vector<4x8xf32> to vector<1x4x8xf32>
    tpu.vector_store %arg8[%c0_52, %c0_53, %c0_54], %50 {strides = array<i32>} : memref<2x4x8xf32, #tpu.memory_space<vmem>>, vector<1x4x8xf32>,
    %c1_55 = arith.constant 1 : index
    %c0_56 = arith.constant 0 : index
    %c0_57 = arith.constant 0 : index
    %51 = vector.load %arg8[%c1_55, %c0_56, %c0_57] : memref<2x4x8xf32, #tpu.memory_space<vmem>>, vector<1x4x8xf32>
    %52 = vector.shape_cast %51 : vector<1x4x8xf32> to vector<4x8xf32>
    %53 = arith.mulf %25, %25 : vector<4x8xf32>
    %54 = arith.addf %52, %53 : vector<4x8xf32>
    %c1_58 = arith.constant 1 : index
    %c0_59 = arith.constant 0 : index
    %c0_60 = arith.constant 0 : index
    %55 = vector.load %arg8[%c1_58, %c0_59, %c0_60] : memref<2x4x8xf32, #tpu.memory_space<vmem>>, vector<1x4x8xf32>
    %56 = vector.shape_cast %55 : vector<1x4x8xf32> to vector<4x8xf32>
    %57 = vector.shape_cast %54 : vector<4x8xf32> to vector<1x4x8xf32>
    tpu.vector_store %arg8[%c1_58, %c0_59, %c0_60], %57 {strides = array<i32>} : memref<2x4x8xf32, #tpu.memory_space<vmem>>, vector<1x4x8xf32>,
    %c0_61 = arith.constant 0 : index
    %c0_62 = arith.constant 0 : index
    %c1_63 = arith.constant 1 : index
    %c0_64 = arith.constant 0 : index
    %58 = vector.load %arg1[%c0_61, %c0_62, %c1_63, %c0_64] : memref<1x4x8x32xf32, #tpu.memory_space<vmem>>, vector<1x4x1x32xf32>
    %59 = vector.shape_cast %58 : vector<1x4x1x32xf32> to vector<4x32xf32>
    %cst_65 = arith.constant 0.000000e+00 : f32
    %60 = vector.broadcast %cst_65 : f32 to vector<4x32xf32>
    %61 = arith.cmpf oge, %59, %60 : vector<4x32xf32>
    %cst_66 = arith.constant 0.00999999977 : f32
    %62 = vector.broadcast %cst_66 : f32 to vector<4x32xf32>
    %63 = arith.mulf %62, %59 : vector<4x32xf32>
    %64 = arith.select %61, %59, %63 : vector<4x32xi1>, vector<4x32xf32>
    %65 = arith.truncf %64 : vector<4x32xf32> to vector<4x32xbf16>
    %cst_67 = arith.constant dense<0.000000e+00> : vector<4x8xf32>
    %66 = tpu.matmul %65, %5, %cst_67 {dimension_numbers = #tpu.dot_dimension_numbers<[1], [0], [0], [1], [0, 0, 1, 1], [], []>} : vector<4x32xbf16>, vector<32x8xbf16>, vector<4x8xf32> -> vector<4x8xf32>
    %67 = arith.truncf %66 : vector<4x8xf32> to vector<4x8xbf16>
    %cst_68 = arith.constant dense<0.000000e+00> : vector<4x8xf32>
    %68 = tpu.matmul %65, %7, %cst_68 {dimension_numbers = #tpu.dot_dimension_numbers<[1], [0], [0], [1], [0, 0, 1, 1], [], []>} : vector<4x32xbf16>, vector<32x8xbf16>, vector<4x8xf32> -> vector<4x8xf32>
    %69 = arith.truncf %68 : vector<4x8xf32> to vector<4x8xbf16>
    %cst_69 = arith.constant dense<0.000000e+00> : vector<4x8xf32>
    %70 = tpu.matmul %1, %67, %cst_69 {dimension_numbers = #tpu.dot_dimension_numbers<[1], [0], [0], [1], [0, 0, 1, 1], [], []>} : vector<4x4xbf16>, vector<4x8xbf16>, vector<4x8xf32> -> vector<4x8xf32>
    %cst_70 = arith.constant dense<0.000000e+00> : vector<4x8xf32>
    %71 = tpu.matmul %3, %69, %cst_70 {dimension_numbers = #tpu.dot_dimension_numbers<[1], [0], [0], [1], [0, 0, 1, 1], [], []>} : vector<4x4xbf16>, vector<4x8xbf16>, vector<4x8xf32> -> vector<4x8xf32>
    %c0_71 = arith.constant 0 : index
    %c0_72 = arith.constant 0 : index
    %c0_73 = arith.constant 0 : index
    %c1_74 = arith.constant 1 : index
    %c0_75 = arith.constant 0 : index
    %72 = vector.load %arg6[%c0_71, %c0_72, %c0_73, %c1_74, %c0_75] : memref<1x2x4x8x8xf32, #tpu.memory_space<vmem>>, vector<1x1x4x1x8xf32>
    %73 = vector.shape_cast %72 : vector<1x1x4x1x8xf32> to vector<4x8xf32>
    %74 = vector.shape_cast %70 : vector<4x8xf32> to vector<1x1x4x1x8xf32>
    tpu.vector_store %arg6[%c0_71, %c0_72, %c0_73, %c1_74, %c0_75], %74 {strides = array<i32>} : memref<1x2x4x8x8xf32, #tpu.memory_space<vmem>>, vector<1x1x4x1x8xf32>,
    %c0_76 = arith.constant 0 : index
    %c1_77 = arith.constant 1 : index
    %c0_78 = arith.constant 0 : index
    %c1_79 = arith.constant 1 : index
    %c0_80 = arith.constant 0 : index
    %75 = vector.load %arg6[%c0_76, %c1_77, %c0_78, %c1_79, %c0_80] : memref<1x2x4x8x8xf32, #tpu.memory_space<vmem>>, vector<1x1x4x1x8xf32>
    %76 = vector.shape_cast %75 : vector<1x1x4x1x8xf32> to vector<4x8xf32>
    %77 = vector.shape_cast %71 : vector<4x8xf32> to vector<1x1x4x1x8xf32>
    tpu.vector_store %arg6[%c0_76, %c1_77, %c0_78, %c1_79, %c0_80], %77 {strides = array<i32>} : memref<1x2x4x8x8xf32, #tpu.memory_space<vmem>>, vector<1x1x4x1x8xf32>,
    %c0_81 = arith.constant 0 : index
    %c0_82 = arith.constant 0 : index
    %c0_83 = arith.constant 0 : index
    %78 = vector.load %arg7[%c0_81, %c0_82, %c0_83] : memref<2x4x8xf32, #tpu.memory_space<vmem>>, vector<1x4x8xf32>
    %79 = vector.shape_cast %78 : vector<1x4x8xf32> to vector<4x8xf32>
    %80 = arith.addf %79, %70 : vector<4x8xf32>
    %c0_84 = arith.constant 0 : index
    %c0_85 = arith.constant 0 : index
    %c0_86 = arith.constant 0 : index
    %81 = vector.load %arg7[%c0_84, %c0_85, %c0_86] : memref<2x4x8xf32, #tpu.memory_space<vmem>>, vector<1x4x8xf32>
    %82 = vector.shape_cast %81 : vector<1x4x8xf32> to vector<4x8xf32>
    %83 = vector.shape_cast %80 : vector<4x8xf32> to vector<1x4x8xf32>
    tpu.vector_store %arg7[%c0_84, %c0_85, %c0_86], %83 {strides = array<i32>} : memref<2x4x8xf32, #tpu.memory_space<vmem>>, vector<1x4x8xf32>,
    %c1_87 = arith.constant 1 : index
    %c0_88 = arith.constant 0 : index
    %c0_89 = arith.constant 0 : index
    %84 = vector.load %arg7[%c1_87, %c0_88, %c0_89] : memref<2x4x8xf32, #tpu.memory_space<vmem>>, vector<1x4x8xf32>
    %85 = vector.shape_cast %84 : vector<1x4x8xf32> to vector<4x8xf32>
    %86 = arith.addf %85, %71 : vector<4x8xf32>
    %c1_90 = arith.constant 1 : index
    %c0_91 = arith.constant 0 : index
    %c0_92 = arith.constant 0 : index
    %87 = vector.load %arg7[%c1_90, %c0_91, %c0_92] : memref<2x4x8xf32, #tpu.memory_space<vmem>>, vector<1x4x8xf32>
    %88 = vector.shape_cast %87 : vector<1x4x8xf32> to vector<4x8xf32>
    %89 = vector.shape_cast %86 : vector<4x8xf32> to vector<1x4x8xf32>
    tpu.vector_store %arg7[%c1_90, %c0_91, %c0_92], %89 {strides = array<i32>} : memref<2x4x8xf32, #tpu.memory_space<vmem>>, vector<1x4x8xf32>,
    %c0_93 = arith.constant 0 : index
    %c0_94 = arith.constant 0 : index
    %c0_95 = arith.constant 0 : index
    %90 = vector.load %arg8[%c0_93, %c0_94, %c0_95] : memref<2x4x8xf32, #tpu.memory_space<vmem>>, vector<1x4x8xf32>
    %91 = vector.shape_cast %90 : vector<1x4x8xf32> to vector<4x8xf32>
    %92 = arith.mulf %70, %70 : vector<4x8xf32>
    %93 = arith.addf %91, %92 : vector<4x8xf32>
    %c0_96 = arith.constant 0 : index
    %c0_97 = arith.constant 0 : index
    %c0_98 = arith.constant 0 : index
    %94 = vector.load %arg8[%c0_96, %c0_97, %c0_98] : memref<2x4x8xf32, #tpu.memory_space<vmem>>, vector<1x4x8xf32>
    %95 = vector.shape_cast %94 : vector<1x4x8xf32> to vector<4x8xf32>
    %96 = vector.shape_cast %93 : vector<4x8xf32> to vector<1x4x8xf32>
    tpu.vector_store %arg8[%c0_96, %c0_97, %c0_98], %96 {strides = array<i32>} : memref<2x4x8xf32, #tpu.memory_space<vmem>>, vector<1x4x8xf32>,
    %c1_99 = arith.constant 1 : index
    %c0_100 = arith.constant 0 : index
    %c0_101 = arith.constant 0 : index
    %97 = vector.load %arg8[%c1_99, %c0_100, %c0_101] : memref<2x4x8xf32, #tpu.memory_space<vmem>>, vector<1x4x8xf32>
    %98 = vector.shape_cast %97 : vector<1x4x8xf32> to vector<4x8xf32>
    %99 = arith.mulf %71, %71 : vector<4x8xf32>
    %100 = arith.addf %98, %99 : vector<4x8xf32>
    %c1_102 = arith.constant 1 : index
    %c0_103 = arith.constant 0 : index
    %c0_104 = arith.constant 0 : index
    %101 = vector.load %arg8[%c1_102, %c0_103, %c0_104] : memref<2x4x8xf32, #tpu.memory_space<vmem>>, vector<1x4x8xf32>
    %102 = vector.shape_cast %101 : vector<1x4x8xf32> to vector<4x8xf32>
    %103 = vector.shape_cast %100 : vector<4x8xf32> to vector<1x4x8xf32>
    tpu.vector_store %arg8[%c1_102, %c0_103, %c0_104], %103 {strides = array<i32>} : memref<2x4x8xf32, #tpu.memory_space<vmem>>, vector<1x4x8xf32>,
    %c0_105 = arith.constant 0 : index
    %c0_106 = arith.constant 0 : index
    %c2 = arith.constant 2 : index
    %c0_107 = arith.constant 0 : index
    %104 = vector.load %arg1[%c0_105, %c0_106, %c2, %c0_107] : memref<1x4x8x32xf32, #tpu.memory_space<vmem>>, vector<1x4x1x32xf32>
    %105 = vector.shape_cast %104 : vector<1x4x1x32xf32> to vector<4x32xf32>
    %cst_108 = arith.constant 0.000000e+00 : f32
    %106 = vector.broadcast %cst_108 : f32 to vector<4x32xf32>
    %107 = arith.cmpf oge, %105, %106 : vector<4x32xf32>
    %cst_109 = arith.constant 0.00999999977 : f32
    %108 = vector.broadcast %cst_109 : f32 to vector<4x32xf32>
    %109 = arith.mulf %108, %105 : vector<4x32xf32>
    %110 = arith.select %107, %105, %109 : vector<4x32xi1>, vector<4x32xf32>
    %111 = arith.truncf %110 : vector<4x32xf32> to vector<4x32xbf16>
    %cst_110 = arith.constant dense<0.000000e+00> : vector<4x8xf32>
    %112 = tpu.matmul %111, %5, %cst_110 {dimension_numbers = #tpu.dot_dimension_numbers<[1], [0], [0], [1], [0, 0, 1, 1], [], []>} : vector<4x32xbf16>, vector<32x8xbf16>, vector<4x8xf32> -> vector<4x8xf32>
    %113 = arith.truncf %112 : vector<4x8xf32> to vector<4x8xbf16>
    %cst_111 = arith.constant dense<0.000000e+00> : vector<4x8xf32>
    %114 = tpu.matmul %111, %7, %cst_111 {dimension_numbers = #tpu.dot_dimension_numbers<[1], [0], [0], [1], [0, 0, 1, 1], [], []>} : vector<4x32xbf16>, vector<32x8xbf16>, vector<4x8xf32> -> vector<4x8xf32>
    %115 = arith.truncf %114 : vector<4x8xf32> to vector<4x8xbf16>
    %cst_112 = arith.constant dense<0.000000e+00> : vector<4x8xf32>
    %116 = tpu.matmul %1, %113, %cst_112 {dimension_numbers = #tpu.dot_dimension_numbers<[1], [0], [0], [1], [0, 0, 1, 1], [], []>} : vector<4x4xbf16>, vector<4x8xbf16>, vector<4x8xf32> -> vector<4x8xf32>
    %cst_113 = arith.constant dense<0.000000e+00> : vector<4x8xf32>
    %117 = tpu.matmul %3, %115, %cst_113 {dimension_numbers = #tpu.dot_dimension_numbers<[1], [0], [0], [1], [0, 0, 1, 1], [], []>} : vector<4x4xbf16>, vector<4x8xbf16>, vector<4x8xf32> -> vector<4x8xf32>
    %c0_114 = arith.constant 0 : index
    %c0_115 = arith.constant 0 : index
    %c0_116 = arith.constant 0 : index
    %c2_117 = arith.constant 2 : index
    %c0_118 = arith.constant 0 : index
    %118 = vector.load %arg6[%c0_114, %c0_115, %c0_116, %c2_117, %c0_118] : memref<1x2x4x8x8xf32, #tpu.memory_space<vmem>>, vector<1x1x4x1x8xf32>
    %119 = vector.shape_cast %118 : vector<1x1x4x1x8xf32> to vector<4x8xf32>
    %120 = vector.shape_cast %116 : vector<4x8xf32> to vector<1x1x4x1x8xf32>
    tpu.vector_store %arg6[%c0_114, %c0_115, %c0_116, %c2_117, %c0_118], %120 {strides = array<i32>} : memref<1x2x4x8x8xf32, #tpu.memory_space<vmem>>, vector<1x1x4x1x8xf32>,
    %c0_119 = arith.constant 0 : index
    %c1_120 = arith.constant 1 : index
    %c0_121 = arith.constant 0 : index
    %c2_122 = arith.constant 2 : index
    %c0_123 = arith.constant 0 : index
    %121 = vector.load %arg6[%c0_119, %c1_120, %c0_121, %c2_122, %c0_123] : memref<1x2x4x8x8xf32, #tpu.memory_space<vmem>>, vector<1x1x4x1x8xf32>
    %122 = vector.shape_cast %121 : vector<1x1x4x1x8xf32> to vector<4x8xf32>
    %123 = vector.shape_cast %117 : vector<4x8xf32> to vector<1x1x4x1x8xf32>
    tpu.vector_store %arg6[%c0_119, %c1_120, %c0_121, %c2_122, %c0_123], %123 {strides = array<i32>} : memref<1x2x4x8x8xf32, #tpu.memory_space<vmem>>, vector<1x1x4x1x8xf32>,
    %c0_124 = arith.constant 0 : index
    %c0_125 = arith.constant 0 : index
    %c0_126 = arith.constant 0 : index
    %124 = vector.load %arg7[%c0_124, %c0_125, %c0_126] : memref<2x4x8xf32, #tpu.memory_space<vmem>>, vector<1x4x8xf32>
    %125 = vector.shape_cast %124 : vector<1x4x8xf32> to vector<4x8xf32>
    %126 = arith.addf %125, %116 : vector<4x8xf32>
    %c0_127 = arith.constant 0 : index
    %c0_128 = arith.constant 0 : index
    %c0_129 = arith.constant 0 : index
    %127 = vector.load %arg7[%c0_127, %c0_128, %c0_129] : memref<2x4x8xf32, #tpu.memory_space<vmem>>, vector<1x4x8xf32>
    %128 = vector.shape_cast %127 : vector<1x4x8xf32> to vector<4x8xf32>
    %129 = vector.shape_cast %126 : vector<4x8xf32> to vector<1x4x8xf32>
    tpu.vector_store %arg7[%c0_127, %c0_128, %c0_129], %129 {strides = array<i32>} : memref<2x4x8xf32, #tpu.memory_space<vmem>>, vector<1x4x8xf32>,
    %c1_130 = arith.constant 1 : index
    %c0_131 = arith.constant 0 : index
    %c0_132 = arith.constant 0 : index
    %130 = vector.load %arg7[%c1_130, %c0_131, %c0_132] : memref<2x4x8xf32, #tpu.memory_space<vmem>>, vector<1x4x8xf32>
    %131 = vector.shape_cast %130 : vector<1x4x8xf32> to vector<4x8xf32>
    %132 = arith.addf %131, %117 : vector<4x8xf32>
    %c1_133 = arith.constant 1 : index
    %c0_134 = arith.constant 0 : index
    %c0_135 = arith.constant 0 : index
    %133 = vector.load %arg7[%c1_133, %c0_134, %c0_135] : memref<2x4x8xf32, #tpu.memory_space<vmem>>, vector<1x4x8xf32>
    %134 = vector.shape_cast %133 : vector<1x4x8xf32> to vector<4x8xf32>
    %135 = vector.shape_cast %132 : vector<4x8xf32> to vector<1x4x8xf32>
    tpu.vector_store %arg7[%c1_133, %c0_134, %c0_135], %135 {strides = array<i32>} : memref<2x4x8xf32, #tpu.memory_space<vmem>>, vector<1x4x8xf32>,
    %c0_136 = arith.constant 0 : index
    %c0_137 = arith.constant 0 : index
    %c0_138 = arith.constant 0 : index
    %136 = vector.load %arg8[%c0_136, %c0_137, %c0_138] : memref<2x4x8xf32, #tpu.memory_space<vmem>>, vector<1x4x8xf32>
    %137 = vector.shape_cast %136 : vector<1x4x8xf32> to vector<4x8xf32>
    %138 = arith.mulf %116, %116 : vector<4x8xf32>
    %139 = arith.addf %137, %138 : vector<4x8xf32>
    %c0_139 = arith.constant 0 : index
    %c0_140 = arith.constant 0 : index
    %c0_141 = arith.constant 0 : index
    %140 = vector.load %arg8[%c0_139, %c0_140, %c0_141] : memref<2x4x8xf32, #tpu.memory_space<vmem>>, vector<1x4x8xf32>
    %141 = vector.shape_cast %140 : vector<1x4x8xf32> to vector<4x8xf32>
    %142 = vector.shape_cast %139 : vector<4x8xf32> to vector<1x4x8xf32>
    tpu.vector_store %arg8[%c0_139, %c0_140, %c0_141], %142 {strides = array<i32>} : memref<2x4x8xf32, #tpu.memory_space<vmem>>, vector<1x4x8xf32>,
    %c1_142 = arith.constant 1 : index
    %c0_143 = arith.constant 0 : index
    %c0_144 = arith.constant 0 : index
    %143 = vector.load %arg8[%c1_142, %c0_143, %c0_144] : memref<2x4x8xf32, #tpu.memory_space<vmem>>, vector<1x4x8xf32>
    %144 = vector.shape_cast %143 : vector<1x4x8xf32> to vector<4x8xf32>
    %145 = arith.mulf %117, %117 : vector<4x8xf32>
    %146 = arith.addf %144, %145 : vector<4x8xf32>
    %c1_145 = arith.constant 1 : index
    %c0_146 = arith.constant 0 : index
    %c0_147 = arith.constant 0 : index
    %147 = vector.load %arg8[%c1_145, %c0_146, %c0_147] : memref<2x4x8xf32, #tpu.memory_space<vmem>>, vector<1x4x8xf32>
    %148 = vector.shape_cast %147 : vector<1x4x8xf32> to vector<4x8xf32>
    %149 = vector.shape_cast %146 : vector<4x8xf32> to vector<1x4x8xf32>
    tpu.vector_store %arg8[%c1_145, %c0_146, %c0_147], %149 {strides = array<i32>} : memref<2x4x8xf32, #tpu.memory_space<vmem>>, vector<1x4x8xf32>,
    %c0_148 = arith.constant 0 : index
    %c0_149 = arith.constant 0 : index
    %c3 = arith.constant 3 : index
    %c0_150 = arith.constant 0 : index
    %150 = vector.load %arg1[%c0_148, %c0_149, %c3, %c0_150] : memref<1x4x8x32xf32, #tpu.memory_space<vmem>>, vector<1x4x1x32xf32>
    %151 = vector.shape_cast %150 : vector<1x4x1x32xf32> to vector<4x32xf32>
    %cst_151 = arith.constant 0.000000e+00 : f32
    %152 = vector.broadcast %cst_151 : f32 to vector<4x32xf32>
    %153 = arith.cmpf oge, %151, %152 : vector<4x32xf32>
    %cst_152 = arith.constant 0.00999999977 : f32
    %154 = vector.broadcast %cst_152 : f32 to vector<4x32xf32>
    %155 = arith.mulf %154, %151 : vector<4x32xf32>
    %156 = arith.select %153, %151, %155 : vector<4x32xi1>, vector<4x32xf32>
    %157 = arith.truncf %156 : vector<4x32xf32> to vector<4x32xbf16>
    %cst_153 = arith.constant dense<0.000000e+00> : vector<4x8xf32>
    %158 = tpu.matmul %157, %5, %cst_153 {dimension_numbers = #tpu.dot_dimension_numbers<[1], [0], [0], [1], [0, 0, 1, 1], [], []>} : vector<4x32xbf16>, vector<32x8xbf16>, vector<4x8xf32> -> vector<4x8xf32>
    %159 = arith.truncf %158 : vector<4x8xf32> to vector<4x8xbf16>
    %cst_154 = arith.constant dense<0.000000e+00> : vector<4x8xf32>
    %160 = tpu.matmul %157, %7, %cst_154 {dimension_numbers = #tpu.dot_dimension_numbers<[1], [0], [0], [1], [0, 0, 1, 1], [], []>} : vector<4x32xbf16>, vector<32x8xbf16>, vector<4x8xf32> -> vector<4x8xf32>
    %161 = arith.truncf %160 : vector<4x8xf32> to vector<4x8xbf16>
    %cst_155 = arith.constant dense<0.000000e+00> : vector<4x8xf32>
    %162 = tpu.matmul %1, %159, %cst_155 {dimension_numbers = #tpu.dot_dimension_numbers<[1], [0], [0], [1], [0, 0, 1, 1], [], []>} : vector<4x4xbf16>, vector<4x8xbf16>, vector<4x8xf32> -> vector<4x8xf32>
    %cst_156 = arith.constant dense<0.000000e+00> : vector<4x8xf32>
    %163 = tpu.matmul %3, %161, %cst_156 {dimension_numbers = #tpu.dot_dimension_numbers<[1], [0], [0], [1], [0, 0, 1, 1], [], []>} : vector<4x4xbf16>, vector<4x8xbf16>, vector<4x8xf32> -> vector<4x8xf32>
    %c0_157 = arith.constant 0 : index
    %c0_158 = arith.constant 0 : index
    %c0_159 = arith.constant 0 : index
    %c3_160 = arith.constant 3 : index
    %c0_161 = arith.constant 0 : index
    %164 = vector.load %arg6[%c0_157, %c0_158, %c0_159, %c3_160, %c0_161] : memref<1x2x4x8x8xf32, #tpu.memory_space<vmem>>, vector<1x1x4x1x8xf32>
    %165 = vector.shape_cast %164 : vector<1x1x4x1x8xf32> to vector<4x8xf32>
    %166 = vector.shape_cast %162 : vector<4x8xf32> to vector<1x1x4x1x8xf32>
    tpu.vector_store %arg6[%c0_157, %c0_158, %c0_159, %c3_160, %c0_161], %166 {strides = array<i32>} : memref<1x2x4x8x8xf32, #tpu.memory_space<vmem>>, vector<1x1x4x1x8xf32>,
    %c0_162 = arith.constant 0 : index
    %c1_163 = arith.constant 1 : index
    %c0_164 = arith.constant 0 : index
    %c3_165 = arith.constant 3 : index
    %c0_166 = arith.constant 0 : index
    %167 = vector.load %arg6[%c0_162, %c1_163, %c0_164, %c3_165, %c0_166] : memref<1x2x4x8x8xf32, #tpu.memory_space<vmem>>, vector<1x1x4x1x8xf32>
    %168 = vector.shape_cast %167 : vector<1x1x4x1x8xf32> to vector<4x8xf32>
    %169 = vector.shape_cast %163 : vector<4x8xf32> to vector<1x1x4x1x8xf32>
    tpu.vector_store %arg6[%c0_162, %c1_163, %c0_164, %c3_165, %c0_166], %169 {strides = array<i32>} : memref<1x2x4x8x8xf32, #tpu.memory_space<vmem>>, vector<1x1x4x1x8xf32>,
    %c0_167 = arith.constant 0 : index
    %c0_168 = arith.constant 0 : index
    %c0_169 = arith.constant 0 : index
    %170 = vector.load %arg7[%c0_167, %c0_168, %c0_169] : memref<2x4x8xf32, #tpu.memory_space<vmem>>, vector<1x4x8xf32>
    %171 = vector.shape_cast %170 : vector<1x4x8xf32> to vector<4x8xf32>
    %172 = arith.addf %171, %162 : vector<4x8xf32>
    %c0_170 = arith.constant 0 : index
    %c0_171 = arith.constant 0 : index
    %c0_172 = arith.constant 0 : index
    %173 = vector.load %arg7[%c0_170, %c0_171, %c0_172] : memref<2x4x8xf32, #tpu.memory_space<vmem>>, vector<1x4x8xf32>
    %174 = vector.shape_cast %173 : vector<1x4x8xf32> to vector<4x8xf32>
    %175 = vector.shape_cast %172 : vector<4x8xf32> to vector<1x4x8xf32>
    tpu.vector_store %arg7[%c0_170, %c0_171, %c0_172], %175 {strides = array<i32>} : memref<2x4x8xf32, #tpu.memory_space<vmem>>, vector<1x4x8xf32>,
    %c1_173 = arith.constant 1 : index
    %c0_174 = arith.constant 0 : index
    %c0_175 = arith.constant 0 : index
    %176 = vector.load %arg7[%c1_173, %c0_174, %c0_175] : memref<2x4x8xf32, #tpu.memory_space<vmem>>, vector<1x4x8xf32>
    %177 = vector.shape_cast %176 : vector<1x4x8xf32> to vector<4x8xf32>
    %178 = arith.addf %177, %163 : vector<4x8xf32>
    %c1_176 = arith.constant 1 : index
    %c0_177 = arith.constant 0 : index
    %c0_178 = arith.constant 0 : index
    %179 = vector.load %arg7[%c1_176, %c0_177, %c0_178] : memref<2x4x8xf32, #tpu.memory_space<vmem>>, vector<1x4x8xf32>
    %180 = vector.shape_cast %179 : vector<1x4x8xf32> to vector<4x8xf32>
    %181 = vector.shape_cast %178 : vector<4x8xf32> to vector<1x4x8xf32>
    tpu.vector_store %arg7[%c1_176, %c0_177, %c0_178], %181 {strides = array<i32>} : memref<2x4x8xf32, #tpu.memory_space<vmem>>, vector<1x4x8xf32>,
    %c0_179 = arith.constant 0 : index
    %c0_180 = arith.constant 0 : index
    %c0_181 = arith.constant 0 : index
    %182 = vector.load %arg8[%c0_179, %c0_180, %c0_181] : memref<2x4x8xf32, #tpu.memory_space<vmem>>, vector<1x4x8xf32>
    %183 = vector.shape_cast %182 : vector<1x4x8xf32> to vector<4x8xf32>
    %184 = arith.mulf %162, %162 : vector<4x8xf32>
    %185 = arith.addf %183, %184 : vector<4x8xf32>
    %c0_182 = arith.constant 0 : index
    %c0_183 = arith.constant 0 : index
    %c0_184 = arith.constant 0 : index
    %186 = vector.load %arg8[%c0_182, %c0_183, %c0_184] : memref<2x4x8xf32, #tpu.memory_space<vmem>>, vector<1x4x8xf32>
    %187 = vector.shape_cast %186 : vector<1x4x8xf32> to vector<4x8xf32>
    %188 = vector.shape_cast %185 : vector<4x8xf32> to vector<1x4x8xf32>
    tpu.vector_store %arg8[%c0_182, %c0_183, %c0_184], %188 {strides = array<i32>} : memref<2x4x8xf32, #tpu.memory_space<vmem>>, vector<1x4x8xf32>,
    %c1_185 = arith.constant 1 : index
    %c0_186 = arith.constant 0 : index
    %c0_187 = arith.constant 0 : index
    %189 = vector.load %arg8[%c1_185, %c0_186, %c0_187] : memref<2x4x8xf32, #tpu.memory_space<vmem>>, vector<1x4x8xf32>
    %190 = vector.shape_cast %189 : vector<1x4x8xf32> to vector<4x8xf32>
    %191 = arith.mulf %163, %163 : vector<4x8xf32>
    %192 = arith.addf %190, %191 : vector<4x8xf32>
    %c1_188 = arith.constant 1 : index
    %c0_189 = arith.constant 0 : index
    %c0_190 = arith.constant 0 : index
    %193 = vector.load %arg8[%c1_188, %c0_189, %c0_190] : memref<2x4x8xf32, #tpu.memory_space<vmem>>, vector<1x4x8xf32>
    %194 = vector.shape_cast %193 : vector<1x4x8xf32> to vector<4x8xf32>
    %195 = vector.shape_cast %192 : vector<4x8xf32> to vector<1x4x8xf32>
    tpu.vector_store %arg8[%c1_188, %c0_189, %c0_190], %195 {strides = array<i32>} : memref<2x4x8xf32, #tpu.memory_space<vmem>>, vector<1x4x8xf32>,
    %c0_191 = arith.constant 0 : index
    %c0_192 = arith.constant 0 : index
    %c4 = arith.constant 4 : index
    %c0_193 = arith.constant 0 : index
    %196 = vector.load %arg1[%c0_191, %c0_192, %c4, %c0_193] : memref<1x4x8x32xf32, #tpu.memory_space<vmem>>, vector<1x4x1x32xf32>
    %197 = vector.shape_cast %196 : vector<1x4x1x32xf32> to vector<4x32xf32>
    %cst_194 = arith.constant 0.000000e+00 : f32
    %198 = vector.broadcast %cst_194 : f32 to vector<4x32xf32>
    %199 = arith.cmpf oge, %197, %198 : vector<4x32xf32>
    %cst_195 = arith.constant 0.00999999977 : f32
    %200 = vector.broadcast %cst_195 : f32 to vector<4x32xf32>
    %201 = arith.mulf %200, %197 : vector<4x32xf32>
    %202 = arith.select %199, %197, %201 : vector<4x32xi1>, vector<4x32xf32>
    %203 = arith.truncf %202 : vector<4x32xf32> to vector<4x32xbf16>
    %cst_196 = arith.constant dense<0.000000e+00> : vector<4x8xf32>
    %204 = tpu.matmul %203, %5, %cst_196 {dimension_numbers = #tpu.dot_dimension_numbers<[1], [0], [0], [1], [0, 0, 1, 1], [], []>} : vector<4x32xbf16>, vector<32x8xbf16>, vector<4x8xf32> -> vector<4x8xf32>
    %205 = arith.truncf %204 : vector<4x8xf32> to vector<4x8xbf16>
    %cst_197 = arith.constant dense<0.000000e+00> : vector<4x8xf32>
    %206 = tpu.matmul %203, %7, %cst_197 {dimension_numbers = #tpu.dot_dimension_numbers<[1], [0], [0], [1], [0, 0, 1, 1], [], []>} : vector<4x32xbf16>, vector<32x8xbf16>, vector<4x8xf32> -> vector<4x8xf32>
    %207 = arith.truncf %206 : vector<4x8xf32> to vector<4x8xbf16>
    %cst_198 = arith.constant dense<0.000000e+00> : vector<4x8xf32>
    %208 = tpu.matmul %1, %205, %cst_198 {dimension_numbers = #tpu.dot_dimension_numbers<[1], [0], [0], [1], [0, 0, 1, 1], [], []>} : vector<4x4xbf16>, vector<4x8xbf16>, vector<4x8xf32> -> vector<4x8xf32>
    %cst_199 = arith.constant dense<0.000000e+00> : vector<4x8xf32>
    %209 = tpu.matmul %3, %207, %cst_199 {dimension_numbers = #tpu.dot_dimension_numbers<[1], [0], [0], [1], [0, 0, 1, 1], [], []>} : vector<4x4xbf16>, vector<4x8xbf16>, vector<4x8xf32> -> vector<4x8xf32>
    %c0_200 = arith.constant 0 : index
    %c0_201 = arith.constant 0 : index
    %c0_202 = arith.constant 0 : index
    %c4_203 = arith.constant 4 : index
    %c0_204 = arith.constant 0 : index
    %210 = vector.load %arg6[%c0_200, %c0_201, %c0_202, %c4_203, %c0_204] : memref<1x2x4x8x8xf32, #tpu.memory_space<vmem>>, vector<1x1x4x1x8xf32>
    %211 = vector.shape_cast %210 : vector<1x1x4x1x8xf32> to vector<4x8xf32>
    %212 = vector.shape_cast %208 : vector<4x8xf32> to vector<1x1x4x1x8xf32>
    tpu.vector_store %arg6[%c0_200, %c0_201, %c0_202, %c4_203, %c0_204], %212 {strides = array<i32>} : memref<1x2x4x8x8xf32, #tpu.memory_space<vmem>>, vector<1x1x4x1x8xf32>,
    %c0_205 = arith.constant 0 : index
    %c1_206 = arith.constant 1 : index
    %c0_207 = arith.constant 0 : index
    %c4_208 = arith.constant 4 : index
    %c0_209 = arith.constant 0 : index
    %213 = vector.load %arg6[%c0_205, %c1_206, %c0_207, %c4_208, %c0_209] : memref<1x2x4x8x8xf32, #tpu.memory_space<vmem>>, vector<1x1x4x1x8xf32>
    %214 = vector.shape_cast %213 : vector<1x1x4x1x8xf32> to vector<4x8xf32>
    %215 = vector.shape_cast %209 : vector<4x8xf32> to vector<1x1x4x1x8xf32>
    tpu.vector_store %arg6[%c0_205, %c1_206, %c0_207, %c4_208, %c0_209], %215 {strides = array<i32>} : memref<1x2x4x8x8xf32, #tpu.memory_space<vmem>>, vector<1x1x4x1x8xf32>,
    %c0_210 = arith.constant 0 : index
    %c0_211 = arith.constant 0 : index
    %c0_212 = arith.constant 0 : index
    %216 = vector.load %arg7[%c0_210, %c0_211, %c0_212] : memref<2x4x8xf32, #tpu.memory_space<vmem>>, vector<1x4x8xf32>
    %217 = vector.shape_cast %216 : vector<1x4x8xf32> to vector<4x8xf32>
    %218 = arith.addf %217, %208 : vector<4x8xf32>
    %c0_213 = arith.constant 0 : index
    %c0_214 = arith.constant 0 : index
    %c0_215 = arith.constant 0 : index
    %219 = vector.load %arg7[%c0_213, %c0_214, %c0_215] : memref<2x4x8xf32, #tpu.memory_space<vmem>>, vector<1x4x8xf32>
    %220 = vector.shape_cast %219 : vector<1x4x8xf32> to vector<4x8xf32>
    %221 = vector.shape_cast %218 : vector<4x8xf32> to vector<1x4x8xf32>
    tpu.vector_store %arg7[%c0_213, %c0_214, %c0_215], %221 {strides = array<i32>} : memref<2x4x8xf32, #tpu.memory_space<vmem>>, vector<1x4x8xf32>,
    %c1_216 = arith.constant 1 : index
    %c0_217 = arith.constant 0 : index
    %c0_218 = arith.constant 0 : index
    %222 = vector.load %arg7[%c1_216, %c0_217, %c0_218] : memref<2x4x8xf32, #tpu.memory_space<vmem>>, vector<1x4x8xf32>
    %223 = vector.shape_cast %222 : vector<1x4x8xf32> to vector<4x8xf32>
    %224 = arith.addf %223, %209 : vector<4x8xf32>
    %c1_219 = arith.constant 1 : index
    %c0_220 = arith.constant 0 : index
    %c0_221 = arith.constant 0 : index
    %225 = vector.load %arg7[%c1_219, %c0_220, %c0_221] : memref<2x4x8xf32, #tpu.memory_space<vmem>>, vector<1x4x8xf32>
    %226 = vector.shape_cast %225 : vector<1x4x8xf32> to vector<4x8xf32>
    %227 = vector.shape_cast %224 : vector<4x8xf32> to vector<1x4x8xf32>
    tpu.vector_store %arg7[%c1_219, %c0_220, %c0_221], %227 {strides = array<i32>} : memref<2x4x8xf32, #tpu.memory_space<vmem>>, vector<1x4x8xf32>,
    %c0_222 = arith.constant 0 : index
    %c0_223 = arith.constant 0 : index
    %c0_224 = arith.constant 0 : index
    %228 = vector.load %arg8[%c0_222, %c0_223, %c0_224] : memref<2x4x8xf32, #tpu.memory_space<vmem>>, vector<1x4x8xf32>
    %229 = vector.shape_cast %228 : vector<1x4x8xf32> to vector<4x8xf32>
    %230 = arith.mulf %208, %208 : vector<4x8xf32>
    %231 = arith.addf %229, %230 : vector<4x8xf32>
    %c0_225 = arith.constant 0 : index
    %c0_226 = arith.constant 0 : index
    %c0_227 = arith.constant 0 : index
    %232 = vector.load %arg8[%c0_225, %c0_226, %c0_227] : memref<2x4x8xf32, #tpu.memory_space<vmem>>, vector<1x4x8xf32>
    %233 = vector.shape_cast %232 : vector<1x4x8xf32> to vector<4x8xf32>
    %234 = vector.shape_cast %231 : vector<4x8xf32> to vector<1x4x8xf32>
    tpu.vector_store %arg8[%c0_225, %c0_226, %c0_227], %234 {strides = array<i32>} : memref<2x4x8xf32, #tpu.memory_space<vmem>>, vector<1x4x8xf32>,
    %c1_228 = arith.constant 1 : index
    %c0_229 = arith.constant 0 : index
    %c0_230 = arith.constant 0 : index
    %235 = vector.load %arg8[%c1_228, %c0_229, %c0_230] : memref<2x4x8xf32, #tpu.memory_space<vmem>>, vector<1x4x8xf32>
    %236 = vector.shape_cast %235 : vector<1x4x8xf32> to vector<4x8xf32>
    %237 = arith.mulf %209, %209 : vector<4x8xf32>
    %238 = arith.addf %236, %237 : vector<4x8xf32>
    %c1_231 = arith.constant 1 : index
    %c0_232 = arith.constant 0 : index
    %c0_233 = arith.constant 0 : index
    %239 = vector.load %arg8[%c1_231, %c0_232, %c0_233] : memref<2x4x8xf32, #tpu.memory_space<vmem>>, vector<1x4x8xf32>
    %240 = vector.shape_cast %239 : vector<1x4x8xf32> to vector<4x8xf32>
    %241 = vector.shape_cast %238 : vector<4x8xf32> to vector<1x4x8xf32>
    tpu.vector_store %arg8[%c1_231, %c0_232, %c0_233], %241 {strides = array<i32>} : memref<2x4x8xf32, #tpu.memory_space<vmem>>, vector<1x4x8xf32>,
    %c0_234 = arith.constant 0 : index
    %c0_235 = arith.constant 0 : index
    %c5 = arith.constant 5 : index
    %c0_236 = arith.constant 0 : index
    %242 = vector.load %arg1[%c0_234, %c0_235, %c5, %c0_236] : memref<1x4x8x32xf32, #tpu.memory_space<vmem>>, vector<1x4x1x32xf32>
    %243 = vector.shape_cast %242 : vector<1x4x1x32xf32> to vector<4x32xf32>
    %cst_237 = arith.constant 0.000000e+00 : f32
    %244 = vector.broadcast %cst_237 : f32 to vector<4x32xf32>
    %245 = arith.cmpf oge, %243, %244 : vector<4x32xf32>
    %cst_238 = arith.constant 0.00999999977 : f32
    %246 = vector.broadcast %cst_238 : f32 to vector<4x32xf32>
    %247 = arith.mulf %246, %243 : vector<4x32xf32>
    %248 = arith.select %245, %243, %247 : vector<4x32xi1>, vector<4x32xf32>
    %249 = arith.truncf %248 : vector<4x32xf32> to vector<4x32xbf16>
    %cst_239 = arith.constant dense<0.000000e+00> : vector<4x8xf32>
    %250 = tpu.matmul %249, %5, %cst_239 {dimension_numbers = #tpu.dot_dimension_numbers<[1], [0], [0], [1], [0, 0, 1, 1], [], []>} : vector<4x32xbf16>, vector<32x8xbf16>, vector<4x8xf32> -> vector<4x8xf32>
    %251 = arith.truncf %250 : vector<4x8xf32> to vector<4x8xbf16>
    %cst_240 = arith.constant dense<0.000000e+00> : vector<4x8xf32>
    %252 = tpu.matmul %249, %7, %cst_240 {dimension_numbers = #tpu.dot_dimension_numbers<[1], [0], [0], [1], [0, 0, 1, 1], [], []>} : vector<4x32xbf16>, vector<32x8xbf16>, vector<4x8xf32> -> vector<4x8xf32>
    %253 = arith.truncf %252 : vector<4x8xf32> to vector<4x8xbf16>
    %cst_241 = arith.constant dense<0.000000e+00> : vector<4x8xf32>
    %254 = tpu.matmul %1, %251, %cst_241 {dimension_numbers = #tpu.dot_dimension_numbers<[1], [0], [0], [1], [0, 0, 1, 1], [], []>} : vector<4x4xbf16>, vector<4x8xbf16>, vector<4x8xf32> -> vector<4x8xf32>
    %cst_242 = arith.constant dense<0.000000e+00> : vector<4x8xf32>
    %255 = tpu.matmul %3, %253, %cst_242 {dimension_numbers = #tpu.dot_dimension_numbers<[1], [0], [0], [1], [0, 0, 1, 1], [], []>} : vector<4x4xbf16>, vector<4x8xbf16>, vector<4x8xf32> -> vector<4x8xf32>
    %c0_243 = arith.constant 0 : index
    %c0_244 = arith.constant 0 : index
    %c0_245 = arith.constant 0 : index
    %c5_246 = arith.constant 5 : index
    %c0_247 = arith.constant 0 : index
    %256 = vector.load %arg6[%c0_243, %c0_244, %c0_245, %c5_246, %c0_247] : memref<1x2x4x8x8xf32, #tpu.memory_space<vmem>>, vector<1x1x4x1x8xf32>
    %257 = vector.shape_cast %256 : vector<1x1x4x1x8xf32> to vector<4x8xf32>
    %258 = vector.shape_cast %254 : vector<4x8xf32> to vector<1x1x4x1x8xf32>
    tpu.vector_store %arg6[%c0_243, %c0_244, %c0_245, %c5_246, %c0_247], %258 {strides = array<i32>} : memref<1x2x4x8x8xf32, #tpu.memory_space<vmem>>, vector<1x1x4x1x8xf32>,
    %c0_248 = arith.constant 0 : index
    %c1_249 = arith.constant 1 : index
    %c0_250 = arith.constant 0 : index
    %c5_251 = arith.constant 5 : index
    %c0_252 = arith.constant 0 : index
    %259 = vector.load %arg6[%c0_248, %c1_249, %c0_250, %c5_251, %c0_252] : memref<1x2x4x8x8xf32, #tpu.memory_space<vmem>>, vector<1x1x4x1x8xf32>
    %260 = vector.shape_cast %259 : vector<1x1x4x1x8xf32> to vector<4x8xf32>
    %261 = vector.shape_cast %255 : vector<4x8xf32> to vector<1x1x4x1x8xf32>
    tpu.vector_store %arg6[%c0_248, %c1_249, %c0_250, %c5_251, %c0_252], %261 {strides = array<i32>} : memref<1x2x4x8x8xf32, #tpu.memory_space<vmem>>, vector<1x1x4x1x8xf32>,
    %c0_253 = arith.constant 0 : index
    %c0_254 = arith.constant 0 : index
    %c0_255 = arith.constant 0 : index
    %262 = vector.load %arg7[%c0_253, %c0_254, %c0_255] : memref<2x4x8xf32, #tpu.memory_space<vmem>>, vector<1x4x8xf32>
    %263 = vector.shape_cast %262 : vector<1x4x8xf32> to vector<4x8xf32>
    %264 = arith.addf %263, %254 : vector<4x8xf32>
    %c0_256 = arith.constant 0 : index
    %c0_257 = arith.constant 0 : index
    %c0_258 = arith.constant 0 : index
    %265 = vector.load %arg7[%c0_256, %c0_257, %c0_258] : memref<2x4x8xf32, #tpu.memory_space<vmem>>, vector<1x4x8xf32>
    %266 = vector.shape_cast %265 : vector<1x4x8xf32> to vector<4x8xf32>
    %267 = vector.shape_cast %264 : vector<4x8xf32> to vector<1x4x8xf32>
    tpu.vector_store %arg7[%c0_256, %c0_257, %c0_258], %267 {strides = array<i32>} : memref<2x4x8xf32, #tpu.memory_space<vmem>>, vector<1x4x8xf32>,
    %c1_259 = arith.constant 1 : index
    %c0_260 = arith.constant 0 : index
    %c0_261 = arith.constant 0 : index
    %268 = vector.load %arg7[%c1_259, %c0_260, %c0_261] : memref<2x4x8xf32, #tpu.memory_space<vmem>>, vector<1x4x8xf32>
    %269 = vector.shape_cast %268 : vector<1x4x8xf32> to vector<4x8xf32>
    %270 = arith.addf %269, %255 : vector<4x8xf32>
    %c1_262 = arith.constant 1 : index
    %c0_263 = arith.constant 0 : index
    %c0_264 = arith.constant 0 : index
    %271 = vector.load %arg7[%c1_262, %c0_263, %c0_264] : memref<2x4x8xf32, #tpu.memory_space<vmem>>, vector<1x4x8xf32>
    %272 = vector.shape_cast %271 : vector<1x4x8xf32> to vector<4x8xf32>
    %273 = vector.shape_cast %270 : vector<4x8xf32> to vector<1x4x8xf32>
    tpu.vector_store %arg7[%c1_262, %c0_263, %c0_264], %273 {strides = array<i32>} : memref<2x4x8xf32, #tpu.memory_space<vmem>>, vector<1x4x8xf32>,
    %c0_265 = arith.constant 0 : index
    %c0_266 = arith.constant 0 : index
    %c0_267 = arith.constant 0 : index
    %274 = vector.load %arg8[%c0_265, %c0_266, %c0_267] : memref<2x4x8xf32, #tpu.memory_space<vmem>>, vector<1x4x8xf32>
    %275 = vector.shape_cast %274 : vector<1x4x8xf32> to vector<4x8xf32>
    %276 = arith.mulf %254, %254 : vector<4x8xf32>
    %277 = arith.addf %275, %276 : vector<4x8xf32>
    %c0_268 = arith.constant 0 : index
    %c0_269 = arith.constant 0 : index
    %c0_270 = arith.constant 0 : index
    %278 = vector.load %arg8[%c0_268, %c0_269, %c0_270] : memref<2x4x8xf32, #tpu.memory_space<vmem>>, vector<1x4x8xf32>
    %279 = vector.shape_cast %278 : vector<1x4x8xf32> to vector<4x8xf32>
    %280 = vector.shape_cast %277 : vector<4x8xf32> to vector<1x4x8xf32>
    tpu.vector_store %arg8[%c0_268, %c0_269, %c0_270], %280 {strides = array<i32>} : memref<2x4x8xf32, #tpu.memory_space<vmem>>, vector<1x4x8xf32>,
    %c1_271 = arith.constant 1 : index
    %c0_272 = arith.constant 0 : index
    %c0_273 = arith.constant 0 : index
    %281 = vector.load %arg8[%c1_271, %c0_272, %c0_273] : memref<2x4x8xf32, #tpu.memory_space<vmem>>, vector<1x4x8xf32>
    %282 = vector.shape_cast %281 : vector<1x4x8xf32> to vector<4x8xf32>
    %283 = arith.mulf %255, %255 : vector<4x8xf32>
    %284 = arith.addf %282, %283 : vector<4x8xf32>
    %c1_274 = arith.constant 1 : index
    %c0_275 = arith.constant 0 : index
    %c0_276 = arith.constant 0 : index
    %285 = vector.load %arg8[%c1_274, %c0_275, %c0_276] : memref<2x4x8xf32, #tpu.memory_space<vmem>>, vector<1x4x8xf32>
    %286 = vector.shape_cast %285 : vector<1x4x8xf32> to vector<4x8xf32>
    %287 = vector.shape_cast %284 : vector<4x8xf32> to vector<1x4x8xf32>
    tpu.vector_store %arg8[%c1_274, %c0_275, %c0_276], %287 {strides = array<i32>} : memref<2x4x8xf32, #tpu.memory_space<vmem>>, vector<1x4x8xf32>,
    %c0_277 = arith.constant 0 : index
    %c0_278 = arith.constant 0 : index
    %c6 = arith.constant 6 : index
    %c0_279 = arith.constant 0 : index
    %288 = vector.load %arg1[%c0_277, %c0_278, %c6, %c0_279] : memref<1x4x8x32xf32, #tpu.memory_space<vmem>>, vector<1x4x1x32xf32>
    %289 = vector.shape_cast %288 : vector<1x4x1x32xf32> to vector<4x32xf32>
    %cst_280 = arith.constant 0.000000e+00 : f32
    %290 = vector.broadcast %cst_280 : f32 to vector<4x32xf32>
    %291 = arith.cmpf oge, %289, %290 : vector<4x32xf32>
    %cst_281 = arith.constant 0.00999999977 : f32
    %292 = vector.broadcast %cst_281 : f32 to vector<4x32xf32>
    %293 = arith.mulf %292, %289 : vector<4x32xf32>
    %294 = arith.select %291, %289, %293 : vector<4x32xi1>, vector<4x32xf32>
    %295 = arith.truncf %294 : vector<4x32xf32> to vector<4x32xbf16>
    %cst_282 = arith.constant dense<0.000000e+00> : vector<4x8xf32>
    %296 = tpu.matmul %295, %5, %cst_282 {dimension_numbers = #tpu.dot_dimension_numbers<[1], [0], [0], [1], [0, 0, 1, 1], [], []>} : vector<4x32xbf16>, vector<32x8xbf16>, vector<4x8xf32> -> vector<4x8xf32>
    %297 = arith.truncf %296 : vector<4x8xf32> to vector<4x8xbf16>
    %cst_283 = arith.constant dense<0.000000e+00> : vector<4x8xf32>
    %298 = tpu.matmul %295, %7, %cst_283 {dimension_numbers = #tpu.dot_dimension_numbers<[1], [0], [0], [1], [0, 0, 1, 1], [], []>} : vector<4x32xbf16>, vector<32x8xbf16>, vector<4x8xf32> -> vector<4x8xf32>
    %299 = arith.truncf %298 : vector<4x8xf32> to vector<4x8xbf16>
    %cst_284 = arith.constant dense<0.000000e+00> : vector<4x8xf32>
    %300 = tpu.matmul %1, %297, %cst_284 {dimension_numbers = #tpu.dot_dimension_numbers<[1], [0], [0], [1], [0, 0, 1, 1], [], []>} : vector<4x4xbf16>, vector<4x8xbf16>, vector<4x8xf32> -> vector<4x8xf32>
    %cst_285 = arith.constant dense<0.000000e+00> : vector<4x8xf32>
    %301 = tpu.matmul %3, %299, %cst_285 {dimension_numbers = #tpu.dot_dimension_numbers<[1], [0], [0], [1], [0, 0, 1, 1], [], []>} : vector<4x4xbf16>, vector<4x8xbf16>, vector<4x8xf32> -> vector<4x8xf32>
    %c0_286 = arith.constant 0 : index
    %c0_287 = arith.constant 0 : index
    %c0_288 = arith.constant 0 : index
    %c6_289 = arith.constant 6 : index
    %c0_290 = arith.constant 0 : index
    %302 = vector.load %arg6[%c0_286, %c0_287, %c0_288, %c6_289, %c0_290] : memref<1x2x4x8x8xf32, #tpu.memory_space<vmem>>, vector<1x1x4x1x8xf32>
    %303 = vector.shape_cast %302 : vector<1x1x4x1x8xf32> to vector<4x8xf32>
    %304 = vector.shape_cast %300 : vector<4x8xf32> to vector<1x1x4x1x8xf32>
    tpu.vector_store %arg6[%c0_286, %c0_287, %c0_288, %c6_289, %c0_290], %304 {strides = array<i32>} : memref<1x2x4x8x8xf32, #tpu.memory_space<vmem>>, vector<1x1x4x1x8xf32>,
    %c0_291 = arith.constant 0 : index
    %c1_292 = arith.constant 1 : index
    %c0_293 = arith.constant 0 : index
    %c6_294 = arith.constant 6 : index
    %c0_295 = arith.constant 0 : index
    %305 = vector.load %arg6[%c0_291, %c1_292, %c0_293, %c6_294, %c0_295] : memref<1x2x4x8x8xf32, #tpu.memory_space<vmem>>, vector<1x1x4x1x8xf32>
    %306 = vector.shape_cast %305 : vector<1x1x4x1x8xf32> to vector<4x8xf32>
    %307 = vector.shape_cast %301 : vector<4x8xf32> to vector<1x1x4x1x8xf32>
    tpu.vector_store %arg6[%c0_291, %c1_292, %c0_293, %c6_294, %c0_295], %307 {strides = array<i32>} : memref<1x2x4x8x8xf32, #tpu.memory_space<vmem>>, vector<1x1x4x1x8xf32>,
    %c0_296 = arith.constant 0 : index
    %c0_297 = arith.constant 0 : index
    %c0_298 = arith.constant 0 : index
    %308 = vector.load %arg7[%c0_296, %c0_297, %c0_298] : memref<2x4x8xf32, #tpu.memory_space<vmem>>, vector<1x4x8xf32>
    %309 = vector.shape_cast %308 : vector<1x4x8xf32> to vector<4x8xf32>
    %310 = arith.addf %309, %300 : vector<4x8xf32>
    %c0_299 = arith.constant 0 : index
    %c0_300 = arith.constant 0 : index
    %c0_301 = arith.constant 0 : index
    %311 = vector.load %arg7[%c0_299, %c0_300, %c0_301] : memref<2x4x8xf32, #tpu.memory_space<vmem>>, vector<1x4x8xf32>
    %312 = vector.shape_cast %311 : vector<1x4x8xf32> to vector<4x8xf32>
    %313 = vector.shape_cast %310 : vector<4x8xf32> to vector<1x4x8xf32>
    tpu.vector_store %arg7[%c0_299, %c0_300, %c0_301], %313 {strides = array<i32>} : memref<2x4x8xf32, #tpu.memory_space<vmem>>, vector<1x4x8xf32>,
    %c1_302 = arith.constant 1 : index
    %c0_303 = arith.constant 0 : index
    %c0_304 = arith.constant 0 : index
    %314 = vector.load %arg7[%c1_302, %c0_303, %c0_304] : memref<2x4x8xf32, #tpu.memory_space<vmem>>, vector<1x4x8xf32>
    %315 = vector.shape_cast %314 : vector<1x4x8xf32> to vector<4x8xf32>
    %316 = arith.addf %315, %301 : vector<4x8xf32>
    %c1_305 = arith.constant 1 : index
    %c0_306 = arith.constant 0 : index
    %c0_307 = arith.constant 0 : index
    %317 = vector.load %arg7[%c1_305, %c0_306, %c0_307] : memref<2x4x8xf32, #tpu.memory_space<vmem>>, vector<1x4x8xf32>
    %318 = vector.shape_cast %317 : vector<1x4x8xf32> to vector<4x8xf32>
    %319 = vector.shape_cast %316 : vector<4x8xf32> to vector<1x4x8xf32>
    tpu.vector_store %arg7[%c1_305, %c0_306, %c0_307], %319 {strides = array<i32>} : memref<2x4x8xf32, #tpu.memory_space<vmem>>, vector<1x4x8xf32>,
    %c0_308 = arith.constant 0 : index
    %c0_309 = arith.constant 0 : index
    %c0_310 = arith.constant 0 : index
    %320 = vector.load %arg8[%c0_308, %c0_309, %c0_310] : memref<2x4x8xf32, #tpu.memory_space<vmem>>, vector<1x4x8xf32>
    %321 = vector.shape_cast %320 : vector<1x4x8xf32> to vector<4x8xf32>
    %322 = arith.mulf %300, %300 : vector<4x8xf32>
    %323 = arith.addf %321, %322 : vector<4x8xf32>
    %c0_311 = arith.constant 0 : index
    %c0_312 = arith.constant 0 : index
    %c0_313 = arith.constant 0 : index
    %324 = vector.load %arg8[%c0_311, %c0_312, %c0_313] : memref<2x4x8xf32, #tpu.memory_space<vmem>>, vector<1x4x8xf32>
    %325 = vector.shape_cast %324 : vector<1x4x8xf32> to vector<4x8xf32>
    %326 = vector.shape_cast %323 : vector<4x8xf32> to vector<1x4x8xf32>
    tpu.vector_store %arg8[%c0_311, %c0_312, %c0_313], %326 {strides = array<i32>} : memref<2x4x8xf32, #tpu.memory_space<vmem>>, vector<1x4x8xf32>,
    %c1_314 = arith.constant 1 : index
    %c0_315 = arith.constant 0 : index
    %c0_316 = arith.constant 0 : index
    %327 = vector.load %arg8[%c1_314, %c0_315, %c0_316] : memref<2x4x8xf32, #tpu.memory_space<vmem>>, vector<1x4x8xf32>
    %328 = vector.shape_cast %327 : vector<1x4x8xf32> to vector<4x8xf32>
    %329 = arith.mulf %301, %301 : vector<4x8xf32>
    %330 = arith.addf %328, %329 : vector<4x8xf32>
    %c1_317 = arith.constant 1 : index
    %c0_318 = arith.constant 0 : index
    %c0_319 = arith.constant 0 : index
    %331 = vector.load %arg8[%c1_317, %c0_318, %c0_319] : memref<2x4x8xf32, #tpu.memory_space<vmem>>, vector<1x4x8xf32>
    %332 = vector.shape_cast %331 : vector<1x4x8xf32> to vector<4x8xf32>
    %333 = vector.shape_cast %330 : vector<4x8xf32> to vector<1x4x8xf32>
    tpu.vector_store %arg8[%c1_317, %c0_318, %c0_319], %333 {strides = array<i32>} : memref<2x4x8xf32, #tpu.memory_space<vmem>>, vector<1x4x8xf32>,
    %c0_320 = arith.constant 0 : index
    %c0_321 = arith.constant 0 : index
    %c7 = arith.constant 7 : index
    %c0_322 = arith.constant 0 : index
    %334 = vector.load %arg1[%c0_320, %c0_321, %c7, %c0_322] : memref<1x4x8x32xf32, #tpu.memory_space<vmem>>, vector<1x4x1x32xf32>
    %335 = vector.shape_cast %334 : vector<1x4x1x32xf32> to vector<4x32xf32>
    %cst_323 = arith.constant 0.000000e+00 : f32
    %336 = vector.broadcast %cst_323 : f32 to vector<4x32xf32>
    %337 = arith.cmpf oge, %335, %336 : vector<4x32xf32>
    %cst_324 = arith.constant 0.00999999977 : f32
    %338 = vector.broadcast %cst_324 : f32 to vector<4x32xf32>
    %339 = arith.mulf %338, %335 : vector<4x32xf32>
    %340 = arith.select %337, %335, %339 : vector<4x32xi1>, vector<4x32xf32>
    %341 = arith.truncf %340 : vector<4x32xf32> to vector<4x32xbf16>
    %cst_325 = arith.constant dense<0.000000e+00> : vector<4x8xf32>
    %342 = tpu.matmul %341, %5, %cst_325 {dimension_numbers = #tpu.dot_dimension_numbers<[1], [0], [0], [1], [0, 0, 1, 1], [], []>} : vector<4x32xbf16>, vector<32x8xbf16>, vector<4x8xf32> -> vector<4x8xf32>
    %343 = arith.truncf %342 : vector<4x8xf32> to vector<4x8xbf16>
    %cst_326 = arith.constant dense<0.000000e+00> : vector<4x8xf32>
    %344 = tpu.matmul %341, %7, %cst_326 {dimension_numbers = #tpu.dot_dimension_numbers<[1], [0], [0], [1], [0, 0, 1, 1], [], []>} : vector<4x32xbf16>, vector<32x8xbf16>, vector<4x8xf32> -> vector<4x8xf32>
    %345 = arith.truncf %344 : vector<4x8xf32> to vector<4x8xbf16>
    %cst_327 = arith.constant dense<0.000000e+00> : vector<4x8xf32>
    %346 = tpu.matmul %1, %343, %cst_327 {dimension_numbers = #tpu.dot_dimension_numbers<[1], [0], [0], [1], [0, 0, 1, 1], [], []>} : vector<4x4xbf16>, vector<4x8xbf16>, vector<4x8xf32> -> vector<4x8xf32>
    %cst_328 = arith.constant dense<0.000000e+00> : vector<4x8xf32>
    %347 = tpu.matmul %3, %345, %cst_328 {dimension_numbers = #tpu.dot_dimension_numbers<[1], [0], [0], [1], [0, 0, 1, 1], [], []>} : vector<4x4xbf16>, vector<4x8xbf16>, vector<4x8xf32> -> vector<4x8xf32>
    %c0_329 = arith.constant 0 : index
    %c0_330 = arith.constant 0 : index
    %c0_331 = arith.constant 0 : index
    %c7_332 = arith.constant 7 : index
    %c0_333 = arith.constant 0 : index
    %348 = vector.load %arg6[%c0_329, %c0_330, %c0_331, %c7_332, %c0_333] : memref<1x2x4x8x8xf32, #tpu.memory_space<vmem>>, vector<1x1x4x1x8xf32>
    %349 = vector.shape_cast %348 : vector<1x1x4x1x8xf32> to vector<4x8xf32>
    %350 = vector.shape_cast %346 : vector<4x8xf32> to vector<1x1x4x1x8xf32>
    tpu.vector_store %arg6[%c0_329, %c0_330, %c0_331, %c7_332, %c0_333], %350 {strides = array<i32>} : memref<1x2x4x8x8xf32, #tpu.memory_space<vmem>>, vector<1x1x4x1x8xf32>,
    %c0_334 = arith.constant 0 : index
    %c1_335 = arith.constant 1 : index
    %c0_336 = arith.constant 0 : index
    %c7_337 = arith.constant 7 : index
    %c0_338 = arith.constant 0 : index
    %351 = vector.load %arg6[%c0_334, %c1_335, %c0_336, %c7_337, %c0_338] : memref<1x2x4x8x8xf32, #tpu.memory_space<vmem>>, vector<1x1x4x1x8xf32>
    %352 = vector.shape_cast %351 : vector<1x1x4x1x8xf32> to vector<4x8xf32>
    %353 = vector.shape_cast %347 : vector<4x8xf32> to vector<1x1x4x1x8xf32>
    tpu.vector_store %arg6[%c0_334, %c1_335, %c0_336, %c7_337, %c0_338], %353 {strides = array<i32>} : memref<1x2x4x8x8xf32, #tpu.memory_space<vmem>>, vector<1x1x4x1x8xf32>,
    %c0_339 = arith.constant 0 : index
    %c0_340 = arith.constant 0 : index
    %c0_341 = arith.constant 0 : index
    %354 = vector.load %arg7[%c0_339, %c0_340, %c0_341] : memref<2x4x8xf32, #tpu.memory_space<vmem>>, vector<1x4x8xf32>
    %355 = vector.shape_cast %354 : vector<1x4x8xf32> to vector<4x8xf32>
    %356 = arith.addf %355, %346 : vector<4x8xf32>
    %c0_342 = arith.constant 0 : index
    %c0_343 = arith.constant 0 : index
    %c0_344 = arith.constant 0 : index
    %357 = vector.load %arg7[%c0_342, %c0_343, %c0_344] : memref<2x4x8xf32, #tpu.memory_space<vmem>>, vector<1x4x8xf32>
    %358 = vector.shape_cast %357 : vector<1x4x8xf32> to vector<4x8xf32>
    %359 = vector.shape_cast %356 : vector<4x8xf32> to vector<1x4x8xf32>
    tpu.vector_store %arg7[%c0_342, %c0_343, %c0_344], %359 {strides = array<i32>} : memref<2x4x8xf32, #tpu.memory_space<vmem>>, vector<1x4x8xf32>,
    %c1_345 = arith.constant 1 : index
    %c0_346 = arith.constant 0 : index
    %c0_347 = arith.constant 0 : index
    %360 = vector.load %arg7[%c1_345, %c0_346, %c0_347] : memref<2x4x8xf32, #tpu.memory_space<vmem>>, vector<1x4x8xf32>
    %361 = vector.shape_cast %360 : vector<1x4x8xf32> to vector<4x8xf32>
    %362 = arith.addf %361, %347 : vector<4x8xf32>
    %c1_348 = arith.constant 1 : index
    %c0_349 = arith.constant 0 : index
    %c0_350 = arith.constant 0 : index
    %363 = vector.load %arg7[%c1_348, %c0_349, %c0_350] : memref<2x4x8xf32, #tpu.memory_space<vmem>>, vector<1x4x8xf32>
    %364 = vector.shape_cast %363 : vector<1x4x8xf32> to vector<4x8xf32>
    %365 = vector.shape_cast %362 : vector<4x8xf32> to vector<1x4x8xf32>
    tpu.vector_store %arg7[%c1_348, %c0_349, %c0_350], %365 {strides = array<i32>} : memref<2x4x8xf32, #tpu.memory_space<vmem>>, vector<1x4x8xf32>,
    %c0_351 = arith.constant 0 : index
    %c0_352 = arith.constant 0 : index
    %c0_353 = arith.constant 0 : index
    %366 = vector.load %arg8[%c0_351, %c0_352, %c0_353] : memref<2x4x8xf32, #tpu.memory_space<vmem>>, vector<1x4x8xf32>
    %367 = vector.shape_cast %366 : vector<1x4x8xf32> to vector<4x8xf32>
    %368 = arith.mulf %346, %346 : vector<4x8xf32>
    %369 = arith.addf %367, %368 : vector<4x8xf32>
    %c0_354 = arith.constant 0 : index
    %c0_355 = arith.constant 0 : index
    %c0_356 = arith.constant 0 : index
    %370 = vector.load %arg8[%c0_354, %c0_355, %c0_356] : memref<2x4x8xf32, #tpu.memory_space<vmem>>, vector<1x4x8xf32>
    %371 = vector.shape_cast %370 : vector<1x4x8xf32> to vector<4x8xf32>
    %372 = vector.shape_cast %369 : vector<4x8xf32> to vector<1x4x8xf32>
    tpu.vector_store %arg8[%c0_354, %c0_355, %c0_356], %372 {strides = array<i32>} : memref<2x4x8xf32, #tpu.memory_space<vmem>>, vector<1x4x8xf32>,
    %c1_357 = arith.constant 1 : index
    %c0_358 = arith.constant 0 : index
    %c0_359 = arith.constant 0 : index
    %373 = vector.load %arg8[%c1_357, %c0_358, %c0_359] : memref<2x4x8xf32, #tpu.memory_space<vmem>>, vector<1x4x8xf32>
    %374 = vector.shape_cast %373 : vector<1x4x8xf32> to vector<4x8xf32>
    %375 = arith.mulf %347, %347 : vector<4x8xf32>
    %376 = arith.addf %374, %375 : vector<4x8xf32>
    %c1_360 = arith.constant 1 : index
    %c0_361 = arith.constant 0 : index
    %c0_362 = arith.constant 0 : index
    %377 = vector.load %arg8[%c1_360, %c0_361, %c0_362] : memref<2x4x8xf32, #tpu.memory_space<vmem>>, vector<1x4x8xf32>
    %378 = vector.shape_cast %377 : vector<1x4x8xf32> to vector<4x8xf32>
    %379 = vector.shape_cast %376 : vector<4x8xf32> to vector<1x4x8xf32>
    tpu.vector_store %arg8[%c1_360, %c0_361, %c0_362], %379 {strides = array<i32>} : memref<2x4x8xf32, #tpu.memory_space<vmem>>, vector<1x4x8xf32>,
    %c0_363 = arith.constant 0 : index
    %c0_364 = arith.constant 0 : index
    %c0_365 = arith.constant 0 : index
    %380 = vector.load %arg7[%c0_363, %c0_364, %c0_365] : memref<2x4x8xf32, #tpu.memory_space<vmem>>, vector<2x4x8xf32>
    %cst_366 = arith.constant dense<0.000000e+00> : vector<2x4xf32>
    %381 = vector.multi_reduction <add>, %380, %cst_366 [2] : vector<2x4x8xf32> to vector<2x4xf32>
    %382 = vector.shape_cast %381 : vector<2x4xf32> to vector<2x4x1xf32>
    %c0_367 = arith.constant 0 : index
    %c0_368 = arith.constant 0 : index
    %c0_369 = arith.constant 0 : index
    %383 = vector.load %arg8[%c0_367, %c0_368, %c0_369] : memref<2x4x8xf32, #tpu.memory_space<vmem>>, vector<2x4x8xf32>
    %cst_370 = arith.constant dense<0.000000e+00> : vector<2x4xf32>
    %384 = vector.multi_reduction <add>, %383, %cst_370 [2] : vector<2x4x8xf32> to vector<2x4xf32>
    %385 = vector.shape_cast %384 : vector<2x4xf32> to vector<2x4x1xf32>
    %cst_371 = arith.constant 1.562500e-02 : f32
    %386 = vector.broadcast %cst_371 : f32 to vector<2x4x1xf32>
    %387 = arith.mulf %382, %386 : vector<2x4x1xf32>
    %cst_372 = arith.constant 1.562500e-02 : f32
    %388 = vector.broadcast %cst_372 : f32 to vector<2x4x1xf32>
    %389 = arith.mulf %385, %388 : vector<2x4x1xf32>
    %390 = arith.mulf %387, %387 : vector<2x4x1xf32>
    %391 = arith.subf %389, %390 : vector<2x4x1xf32>
    %cst_373 = arith.constant 0.000000e+00 : f32
    %392 = vector.broadcast %cst_373 : f32 to vector<2x4x1xf32>
    %393 = arith.maximumf %391, %392 : vector<2x4x1xf32>
    %cst_374 = arith.constant 9.99999974E-6 : f32
    %394 = vector.broadcast %cst_374 : f32 to vector<2x4x1xf32>
    %395 = arith.addf %393, %394 : vector<2x4x1xf32>
    %396 = math.rsqrt %395 : vector<2x4x1xf32>
    %c0_375 = arith.constant 0 : index
    %c0_376 = arith.constant 0 : index
    %c0_377 = arith.constant 0 : index
    %397 = vector.load %arg4[%c0_375, %c0_376, %c0_377] : memref<2x4x1xf32, #tpu.memory_space<vmem>>, vector<2x4x1xf32>
    %398 = arith.mulf %396, %397 : vector<2x4x1xf32>
    %c0_378 = arith.constant 0 : index
    %c0_379 = arith.constant 0 : index
    %c0_380 = arith.constant 0 : index
    %399 = vector.load %arg5[%c0_378, %c0_379, %c0_380] : memref<2x4x1xf32, #tpu.memory_space<vmem>>, vector<2x4x1xf32>
    %400 = arith.mulf %387, %398 : vector<2x4x1xf32>
    %401 = arith.subf %399, %400 : vector<2x4x1xf32>
    %402 = vector.shape_cast %398 : vector<2x4x1xf32> to vector<2x4x1xf32>
    %403 = vector.broadcast %402 : vector<2x4x1xf32> to vector<2x4x8xf32>
    %404 = vector.shape_cast %401 : vector<2x4x1xf32> to vector<2x4x1xf32>
    %405 = vector.broadcast %404 : vector<2x4x1xf32> to vector<2x4x8xf32>
    %c0_381 = arith.constant 0 : index
    %c0_382 = arith.constant 0 : index
    %c0_383 = arith.constant 0 : index
    %c0_384 = arith.constant 0 : index
    %c0_385 = arith.constant 0 : index
    %406 = vector.load %arg6[%c0_381, %c0_382, %c0_383, %c0_384, %c0_385] : memref<1x2x4x8x8xf32, #tpu.memory_space<vmem>>, vector<1x2x4x1x8xf32>
    %407 = vector.shape_cast %406 : vector<1x2x4x1x8xf32> to vector<2x4x8xf32>
    %408 = arith.mulf %407, %403 : vector<2x4x8xf32>
    %409 = arith.addf %408, %405 : vector<2x4x8xf32>
    %c0_386 = arith.constant 0 : index
    %c0_387 = arith.constant 0 : index
    %c0_388 = arith.constant 0 : index
    %c0_389 = arith.constant 0 : index
    %c0_390 = arith.constant 0 : index
    %410 = vector.load %arg6[%c0_386, %c0_387, %c0_388, %c0_389, %c0_390] : memref<1x2x4x8x8xf32, #tpu.memory_space<vmem>>, vector<1x2x4x1x8xf32>
    %411 = vector.shape_cast %410 : vector<1x2x4x1x8xf32> to vector<2x4x8xf32>
    %412 = vector.shape_cast %409 : vector<2x4x8xf32> to vector<1x2x4x1x8xf32>
    tpu.vector_store %arg6[%c0_386, %c0_387, %c0_388, %c0_389, %c0_390], %412 {strides = array<i32>} : memref<1x2x4x8x8xf32, #tpu.memory_space<vmem>>, vector<1x2x4x1x8xf32>,
    %c0_391 = arith.constant 0 : index
    %c0_392 = arith.constant 0 : index
    %c0_393 = arith.constant 0 : index
    %c1_394 = arith.constant 1 : index
    %c0_395 = arith.constant 0 : index
    %413 = vector.load %arg6[%c0_391, %c0_392, %c0_393, %c1_394, %c0_395] : memref<1x2x4x8x8xf32, #tpu.memory_space<vmem>>, vector<1x2x4x1x8xf32>
    %414 = vector.shape_cast %413 : vector<1x2x4x1x8xf32> to vector<2x4x8xf32>
    %415 = arith.mulf %414, %403 : vector<2x4x8xf32>
    %416 = arith.addf %415, %405 : vector<2x4x8xf32>
    %c0_396 = arith.constant 0 : index
    %c0_397 = arith.constant 0 : index
    %c0_398 = arith.constant 0 : index
    %c1_399 = arith.constant 1 : index
    %c0_400 = arith.constant 0 : index
    %417 = vector.load %arg6[%c0_396, %c0_397, %c0_398, %c1_399, %c0_400] : memref<1x2x4x8x8xf32, #tpu.memory_space<vmem>>, vector<1x2x4x1x8xf32>
    %418 = vector.shape_cast %417 : vector<1x2x4x1x8xf32> to vector<2x4x8xf32>
    %419 = vector.shape_cast %416 : vector<2x4x8xf32> to vector<1x2x4x1x8xf32>
    tpu.vector_store %arg6[%c0_396, %c0_397, %c0_398, %c1_399, %c0_400], %419 {strides = array<i32>} : memref<1x2x4x8x8xf32, #tpu.memory_space<vmem>>, vector<1x2x4x1x8xf32>,
    %c0_401 = arith.constant 0 : index
    %c0_402 = arith.constant 0 : index
    %c0_403 = arith.constant 0 : index
    %c2_404 = arith.constant 2 : index
    %c0_405 = arith.constant 0 : index
    %420 = vector.load %arg6[%c0_401, %c0_402, %c0_403, %c2_404, %c0_405] : memref<1x2x4x8x8xf32, #tpu.memory_space<vmem>>, vector<1x2x4x1x8xf32>
    %421 = vector.shape_cast %420 : vector<1x2x4x1x8xf32> to vector<2x4x8xf32>
    %422 = arith.mulf %421, %403 : vector<2x4x8xf32>
    %423 = arith.addf %422, %405 : vector<2x4x8xf32>
    %c0_406 = arith.constant 0 : index
    %c0_407 = arith.constant 0 : index
    %c0_408 = arith.constant 0 : index
    %c2_409 = arith.constant 2 : index
    %c0_410 = arith.constant 0 : index
    %424 = vector.load %arg6[%c0_406, %c0_407, %c0_408, %c2_409, %c0_410] : memref<1x2x4x8x8xf32, #tpu.memory_space<vmem>>, vector<1x2x4x1x8xf32>
    %425 = vector.shape_cast %424 : vector<1x2x4x1x8xf32> to vector<2x4x8xf32>
    %426 = vector.shape_cast %423 : vector<2x4x8xf32> to vector<1x2x4x1x8xf32>
    tpu.vector_store %arg6[%c0_406, %c0_407, %c0_408, %c2_409, %c0_410], %426 {strides = array<i32>} : memref<1x2x4x8x8xf32, #tpu.memory_space<vmem>>, vector<1x2x4x1x8xf32>,
    %c0_411 = arith.constant 0 : index
    %c0_412 = arith.constant 0 : index
    %c0_413 = arith.constant 0 : index
    %c3_414 = arith.constant 3 : index
    %c0_415 = arith.constant 0 : index
    %427 = vector.load %arg6[%c0_411, %c0_412, %c0_413, %c3_414, %c0_415] : memref<1x2x4x8x8xf32, #tpu.memory_space<vmem>>, vector<1x2x4x1x8xf32>
    %428 = vector.shape_cast %427 : vector<1x2x4x1x8xf32> to vector<2x4x8xf32>
    %429 = arith.mulf %428, %403 : vector<2x4x8xf32>
    %430 = arith.addf %429, %405 : vector<2x4x8xf32>
    %c0_416 = arith.constant 0 : index
    %c0_417 = arith.constant 0 : index
    %c0_418 = arith.constant 0 : index
    %c3_419 = arith.constant 3 : index
    %c0_420 = arith.constant 0 : index
    %431 = vector.load %arg6[%c0_416, %c0_417, %c0_418, %c3_419, %c0_420] : memref<1x2x4x8x8xf32, #tpu.memory_space<vmem>>, vector<1x2x4x1x8xf32>
    %432 = vector.shape_cast %431 : vector<1x2x4x1x8xf32> to vector<2x4x8xf32>
    %433 = vector.shape_cast %430 : vector<2x4x8xf32> to vector<1x2x4x1x8xf32>
    tpu.vector_store %arg6[%c0_416, %c0_417, %c0_418, %c3_419, %c0_420], %433 {strides = array<i32>} : memref<1x2x4x8x8xf32, #tpu.memory_space<vmem>>, vector<1x2x4x1x8xf32>,
    %c0_421 = arith.constant 0 : index
    %c0_422 = arith.constant 0 : index
    %c0_423 = arith.constant 0 : index
    %c4_424 = arith.constant 4 : index
    %c0_425 = arith.constant 0 : index
    %434 = vector.load %arg6[%c0_421, %c0_422, %c0_423, %c4_424, %c0_425] : memref<1x2x4x8x8xf32, #tpu.memory_space<vmem>>, vector<1x2x4x1x8xf32>
    %435 = vector.shape_cast %434 : vector<1x2x4x1x8xf32> to vector<2x4x8xf32>
    %436 = arith.mulf %435, %403 : vector<2x4x8xf32>
    %437 = arith.addf %436, %405 : vector<2x4x8xf32>
    %c0_426 = arith.constant 0 : index
    %c0_427 = arith.constant 0 : index
    %c0_428 = arith.constant 0 : index
    %c4_429 = arith.constant 4 : index
    %c0_430 = arith.constant 0 : index
    %438 = vector.load %arg6[%c0_426, %c0_427, %c0_428, %c4_429, %c0_430] : memref<1x2x4x8x8xf32, #tpu.memory_space<vmem>>, vector<1x2x4x1x8xf32>
    %439 = vector.shape_cast %438 : vector<1x2x4x1x8xf32> to vector<2x4x8xf32>
    %440 = vector.shape_cast %437 : vector<2x4x8xf32> to vector<1x2x4x1x8xf32>
    tpu.vector_store %arg6[%c0_426, %c0_427, %c0_428, %c4_429, %c0_430], %440 {strides = array<i32>} : memref<1x2x4x8x8xf32, #tpu.memory_space<vmem>>, vector<1x2x4x1x8xf32>,
    %c0_431 = arith.constant 0 : index
    %c0_432 = arith.constant 0 : index
    %c0_433 = arith.constant 0 : index
    %c5_434 = arith.constant 5 : index
    %c0_435 = arith.constant 0 : index
    %441 = vector.load %arg6[%c0_431, %c0_432, %c0_433, %c5_434, %c0_435] : memref<1x2x4x8x8xf32, #tpu.memory_space<vmem>>, vector<1x2x4x1x8xf32>
    %442 = vector.shape_cast %441 : vector<1x2x4x1x8xf32> to vector<2x4x8xf32>
    %443 = arith.mulf %442, %403 : vector<2x4x8xf32>
    %444 = arith.addf %443, %405 : vector<2x4x8xf32>
    %c0_436 = arith.constant 0 : index
    %c0_437 = arith.constant 0 : index
    %c0_438 = arith.constant 0 : index
    %c5_439 = arith.constant 5 : index
    %c0_440 = arith.constant 0 : index
    %445 = vector.load %arg6[%c0_436, %c0_437, %c0_438, %c5_439, %c0_440] : memref<1x2x4x8x8xf32, #tpu.memory_space<vmem>>, vector<1x2x4x1x8xf32>
    %446 = vector.shape_cast %445 : vector<1x2x4x1x8xf32> to vector<2x4x8xf32>
    %447 = vector.shape_cast %444 : vector<2x4x8xf32> to vector<1x2x4x1x8xf32>
    tpu.vector_store %arg6[%c0_436, %c0_437, %c0_438, %c5_439, %c0_440], %447 {strides = array<i32>} : memref<1x2x4x8x8xf32, #tpu.memory_space<vmem>>, vector<1x2x4x1x8xf32>,
    %c0_441 = arith.constant 0 : index
    %c0_442 = arith.constant 0 : index
    %c0_443 = arith.constant 0 : index
    %c6_444 = arith.constant 6 : index
    %c0_445 = arith.constant 0 : index
    %448 = vector.load %arg6[%c0_441, %c0_442, %c0_443, %c6_444, %c0_445] : memref<1x2x4x8x8xf32, #tpu.memory_space<vmem>>, vector<1x2x4x1x8xf32>
    %449 = vector.shape_cast %448 : vector<1x2x4x1x8xf32> to vector<2x4x8xf32>
    %450 = arith.mulf %449, %403 : vector<2x4x8xf32>
    %451 = arith.addf %450, %405 : vector<2x4x8xf32>
    %c0_446 = arith.constant 0 : index
    %c0_447 = arith.constant 0 : index
    %c0_448 = arith.constant 0 : index
    %c6_449 = arith.constant 6 : index
    %c0_450 = arith.constant 0 : index
    %452 = vector.load %arg6[%c0_446, %c0_447, %c0_448, %c6_449, %c0_450] : memref<1x2x4x8x8xf32, #tpu.memory_space<vmem>>, vector<1x2x4x1x8xf32>
    %453 = vector.shape_cast %452 : vector<1x2x4x1x8xf32> to vector<2x4x8xf32>
    %454 = vector.shape_cast %451 : vector<2x4x8xf32> to vector<1x2x4x1x8xf32>
    tpu.vector_store %arg6[%c0_446, %c0_447, %c0_448, %c6_449, %c0_450], %454 {strides = array<i32>} : memref<1x2x4x8x8xf32, #tpu.memory_space<vmem>>, vector<1x2x4x1x8xf32>,
    %c0_451 = arith.constant 0 : index
    %c0_452 = arith.constant 0 : index
    %c0_453 = arith.constant 0 : index
    %c7_454 = arith.constant 7 : index
    %c0_455 = arith.constant 0 : index
    %455 = vector.load %arg6[%c0_451, %c0_452, %c0_453, %c7_454, %c0_455] : memref<1x2x4x8x8xf32, #tpu.memory_space<vmem>>, vector<1x2x4x1x8xf32>
    %456 = vector.shape_cast %455 : vector<1x2x4x1x8xf32> to vector<2x4x8xf32>
    %457 = arith.mulf %456, %403 : vector<2x4x8xf32>
    %458 = arith.addf %457, %405 : vector<2x4x8xf32>
    %c0_456 = arith.constant 0 : index
    %c0_457 = arith.constant 0 : index
    %c0_458 = arith.constant 0 : index
    %c7_459 = arith.constant 7 : index
    %c0_460 = arith.constant 0 : index
    %459 = vector.load %arg6[%c0_456, %c0_457, %c0_458, %c7_459, %c0_460] : memref<1x2x4x8x8xf32, #tpu.memory_space<vmem>>, vector<1x2x4x1x8xf32>
    %460 = vector.shape_cast %459 : vector<1x2x4x1x8xf32> to vector<2x4x8xf32>
    %461 = vector.shape_cast %458 : vector<2x4x8xf32> to vector<1x2x4x1x8xf32>
    tpu.vector_store %arg6[%c0_456, %c0_457, %c0_458, %c7_459, %c0_460], %461 {strides = array<i32>} : memref<1x2x4x8x8xf32, #tpu.memory_space<vmem>>, vector<1x2x4x1x8xf32>,
    return
  }
  func.func @transform_0(%arg0: i32) -> (i32, i32, i32, i32) {
    %c0_i32 = arith.constant 0 : i32
    %c0_i32_0 = arith.constant 0 : i32
    %c0_i32_1 = arith.constant 0 : i32
    %c0_i32_2 = arith.constant 0 : i32
    return %arg0, %c0_i32, %c0_i32_0, %c0_i32_1 : i32, i32, i32, i32
  }
  func.func @transform_1(%arg0: i32) -> (i32, i32, i32) {
    %c0_i32 = arith.constant 0 : i32
    %c0_i32_0 = arith.constant 0 : i32
    %c0_i32_1 = arith.constant 0 : i32
    %c0_i32_2 = arith.constant 0 : i32
    return %c0_i32, %c0_i32_0, %c0_i32_1 : i32, i32, i32
  }
  func.func @transform_2(%arg0: i32) -> (i32, i32, i32) {
    %c0_i32 = arith.constant 0 : i32
    %c0_i32_0 = arith.constant 0 : i32
    %c0_i32_1 = arith.constant 0 : i32
    %c0_i32_2 = arith.constant 0 : i32
    return %c0_i32, %c0_i32_0, %c0_i32_1 : i32, i32, i32
  }
  func.func @transform_3(%arg0: i32) -> (i32, i32, i32) {
    %c0_i32 = arith.constant 0 : i32
    %c0_i32_0 = arith.constant 0 : i32
    %c0_i32_1 = arith.constant 0 : i32
    %c0_i32_2 = arith.constant 0 : i32
    return %c0_i32, %c0_i32_0, %c0_i32_1 : i32, i32, i32
  }
  func.func @transform_4(%arg0: i32) -> (i32, i32, i32) {
    %c0_i32 = arith.constant 0 : i32
    %c0_i32_0 = arith.constant 0 : i32
    %c0_i32_1 = arith.constant 0 : i32
    %c0_i32_2 = arith.constant 0 : i32
    return %c0_i32, %c0_i32_0, %c0_i32_1 : i32, i32, i32
  }
  func.func @transform_5(%arg0: i32) -> (i32, i32, i32, i32, i32) {
    %c0_i32 = arith.constant 0 : i32
    %c0_i32_0 = arith.constant 0 : i32
    %c0_i32_1 = arith.constant 0 : i32
    %c0_i32_2 = arith.constant 0 : i32
    %c0_i32_3 = arith.constant 0 : i32
    return %arg0, %c0_i32, %c0_i32_0, %c0_i32_1, %c0_i32_2 : i32, i32, i32, i32, i32
  }
}

</mosaic_0001>

<llo_original>
// kernel: factorized_reduce.1
$region0: #{factorized_reduce.1}
  #allocation0 [shape = 'u32[]', space=smem, size = 0x4, offset = 0x4, fixed_abs, tag = 'smem constant byte address 0x4 - core index']
  #allocation1 [shape = 'u32[144,128]{1,0:T(1,128)}', space=vmem, size = 0x12000, scoped, tag = 'internal scratch']
  #allocation2 [shape = 'f32[2,4,8]{2,1,0:T(4,128)}', space=vmem, size = 0x1000, scoped, tag = 'scratch operand']
  #allocation3 [shape = 'f32[2,4,8]{2,1,0:T(4,128)}', space=vmem, size = 0x1000, scoped, tag = 'scratch operand']
  %s0 = inlined_call_operand.vmem [shape: f32[2,4,8,32], index: 0, kind: input, shape index: {}]
  %s1 = inlined_call_operand.vmem [shape: bf16[2,4,4], index: 1, kind: input, shape index: {}]
  %s2 = inlined_call_operand.vmem [shape: bf16[2,32,8], index: 2, kind: input, shape index: {}]
  %s3 = inlined_call_operand.vmem [shape: f32[2,4,1], index: 3, kind: input, shape index: {}]
  %s4 = inlined_call_operand.vmem [shape: f32[2,4,1], index: 4, kind: input, shape index: {}]
  %s5 = inlined_call_operand.hbm [shape: f32[2,2,4,8,8], index: 5, kind: output, shape index: {}]
  %s6 = sld [smem:[#allocation0]]
  $region53: #{factorized_reduce.1} parent=0
    _
  %s8 = ssub.s32 1, %s6
  %s9 = scalar_select 0, %s8, %s6
  $region1: #{factorized_reduce.1} parent=0
    #allocation4 [shape = 'u8[65536]{0}', space=vmem, size = 0x10000, scoped, tag = 'output window, operand 0']
    #allocation5 [shape = 's32[2]{0}', space=sflag, size = 0x8, scoped, tag = 'scoped memory for factorized_reduce.1']
    %10 = vsyncpa [#allocation5], 0
    %s11 = scalar_lea.sflag [#allocation5], 1
    %12 = vsyncpa %s11, 0
    loop: start=0, step=1, limit=4
    $region2: #{factorized_reduce.1} parent=1 // loop_pre_header
      _
    $region3: #{factorized_reduce.1} parent=1 // loop_header
      %s14 = sphi 0, %s18
      %p15 = scmp.ge.s32.totalorder %s14, 4
      %s24 = sphi 0, %s26
      %s27 = sphi 0, %s24
      %s28 = sphi 0, %s27
      %s44 = sphi 0, %s28
      %s48 = sphi 0, %s48
      %s50 = sphi 0, %s48
      %s51 = sphi 0, %s50
      %s65 = sphi 0, %s51
      %s69 = sphi 0, %s69
      %s71 = sphi 0, %s69
      %s72 = sphi 0, %s71
      %s86 = sphi 0, %s72
      %s90 = sphi 0, %s90
      %s92 = sphi 0, %s90
      %s93 = sphi 0, %s92
      %s107 = sphi 0, %s93
      %s111 = sphi 0, %s111
      %s113 = sphi 0, %s111
      %s114 = sphi 0, %s113
      %s128 = sphi 0, %s114
      %s134 = sphi 0, %s136
      %s137 = sphi 0, %s134
      %s138 = sphi 0, %s137
      %s154 = sphi 0, %s138
    $region4: #{factorized_reduce.1} parent=1 // loop_header_branch
      %17 = sbr.rel (%p15) target = $region8
    $region5: #{factorized_reduce.1} parent=1 // loop_body
      %s19 = ssub.s32 %s14, 1
      %s20 = ssub.s32 %s14, 2
      %s21 = sadd.s32 %s14, 1
      %s22 = ssub.s32 %s14, %s21
      %p23 = scmp.eq.s32.totalorder %s22, 0
      %s25 = sadd.s32 %s24, 1
      %s26 = scalar_select %p23, %s24, %s25
      %p29 = pneg %p23
      %p30 = scmp.eq.s32.totalorder %s14, 1
      %p31 = por %p29, %p30
      %p32 = scmp.ne.s32.totalorder %s24, %s27
      %p33 = scmp.eq.s32.totalorder %s14, 0
      %p34 = por %p32, %p33
      %p35 = scmp.ne.s32.totalorder %s24, %s27
      %p36 = scmp.eq.s32.totalorder %s19, 1
      %p37 = por %p35, %p36
      %p38 = scmp.ne.s32.totalorder %s27, %s28
      %p39 = scmp.eq.s32.totalorder %s19, 0
      %p40 = por %p38, %p39
      %p41 = scmp.ne.s32.totalorder %s27, %s28
      %p42 = scmp.eq.s32.totalorder %s20, 1
      %p43 = por %p41, %p42
      %p45 = scmp.ne.s32.totalorder %s28, %s44
      %p46 = scmp.eq.s32.totalorder %s20, 0
      %p47 = por %p45, %p46
      %s49 = sadd.s32 %s48, 1
      %p52 = scmp.eq.s32.totalorder %s14, 1
      %p53 = scmp.ne.s32.totalorder %s48, %s50
      %p54 = scmp.eq.s32.totalorder %s14, 0
      %p55 = por %p53, %p54
      %p56 = scmp.ne.s32.totalorder %s48, %s50
      %p57 = scmp.eq.s32.totalorder %s19, 1
      %p58 = por %p56, %p57
      %p59 = scmp.ne.s32.totalorder %s50, %s51
      %p60 = scmp.eq.s32.totalorder %s19, 0
      %p61 = por %p59, %p60
      %p62 = scmp.ne.s32.totalorder %s50, %s51
      %p63 = scmp.eq.s32.totalorder %s20, 1
      %p64 = por %p62, %p63
      %p66 = scmp.ne.s32.totalorder %s51, %s65
      %p67 = scmp.eq.s32.totalorder %s20, 0
      %p68 = por %p66, %p67
      %s70 = sadd.s32 %s69, 1
      %p73 = scmp.eq.s32.totalorder %s14, 1
      %p74 = scmp.ne.s32.totalorder %s69, %s71
      %p75 = scmp.eq.s32.totalorder %s14, 0
      %p76 = por %p74, %p75
      %p77 = scmp.ne.s32.totalorder %s69, %s71
      %p78 = scmp.eq.s32.totalorder %s19, 1
      %p79 = por %p77, %p78
      %p80 = scmp.ne.s32.totalorder %s71, %s72
      %p81 = scmp.eq.s32.totalorder %s19, 0
      %p82 = por %p80, %p81
      %p83 = scmp.ne.s32.totalorder %s71, %s72
      %p84 = scmp.eq.s32.totalorder %s20, 1
      %p85 = por %p83, %p84
      %p87 = scmp.ne.s32.totalorder %s72, %s86
      %p88 = scmp.eq.s32.totalorder %s20, 0
      %p89 = por %p87, %p88
      %s91 = sadd.s32 %s90, 1
      %p94 = scmp.eq.s32.totalorder %s14, 1
      %p95 = scmp.ne.s32.totalorder %s90, %s92
      %p96 = scmp.eq.s32.totalorder %s14, 0
      %p97 = por %p95, %p96
      %p98 = scmp.ne.s32.totalorder %s90, %s92
      %p99 = scmp.eq.s32.totalorder %s19, 1
      %p100 = por %p98, %p99
      %p101 = scmp.ne.s32.totalorder %s92, %s93
      %p102 = scmp.eq.s32.totalorder %s19, 0
      %p103 = por %p101, %p102
      %p104 = scmp.ne.s32.totalorder %s92, %s93
      %p105 = scmp.eq.s32.totalorder %s20, 1
      %p106 = por %p104, %p105
      %p108 = scmp.ne.s32.totalorder %s93, %s107
      %p109 = scmp.eq.s32.totalorder %s20, 0
      %p110 = por %p108, %p109
      %s112 = sadd.s32 %s111, 1
      %p115 = scmp.eq.s32.totalorder %s14, 1
      %p116 = scmp.ne.s32.totalorder %s111, %s113
      %p117 = scmp.eq.s32.totalorder %s14, 0
      %p118 = por %p116, %p117
      %p119 = scmp.ne.s32.totalorder %s111, %s113
      %p120 = scmp.eq.s32.totalorder %s19, 1
      %p121 = por %p119, %p120
      %p122 = scmp.ne.s32.totalorder %s113, %s114
      %p123 = scmp.eq.s32.totalorder %s19, 0
      %p124 = por %p122, %p123
      %p125 = scmp.ne.s32.totalorder %s113, %s114
      %p126 = scmp.eq.s32.totalorder %s20, 1
      %p127 = por %p125, %p126
      %p129 = scmp.ne.s32.totalorder %s114, %s128
      %p130 = scmp.eq.s32.totalorder %s20, 0
      %p131 = por %p129, %p130
      %s132 = ssub.s32 %s14, %s21
      %p133 = scmp.eq.s32.totalorder %s132, 0
      %s135 = sadd.s32 %s134, 1
      %s136 = scalar_select %p133, %s134, %s135
      %p139 = pneg %p133
      %p140 = scmp.eq.s32.totalorder %s14, 1
      %p141 = por %p139, %p140
      %p142 = scmp.ne.s32.totalorder %s134, %s137
      %p143 = scmp.eq.s32.totalorder %s14, 0
      %p144 = por %p142, %p143
      %p145 = scmp.ne.s32.totalorder %s134, %s137
      %p146 = scmp.eq.s32.totalorder %s19, 1
      %p147 = por %p145, %p146
      %p148 = scmp.ne.s32.totalorder %s137, %s138
      %p149 = scmp.eq.s32.totalorder %s19, 0
      %p150 = por %p148, %p149
      %p151 = scmp.ne.s32.totalorder %s137, %s138
      %p152 = scmp.eq.s32.totalorder %s20, 1
      %p153 = por %p151, %p152
      %p155 = scmp.ne.s32.totalorder %s138, %s154
      %p156 = scmp.eq.s32.totalorder %s20, 0
      %p157 = por %p155, %p156
      %p158 = scmp.le.s32.totalorder 1, %s14
      %p159 = scmp.lt.s32.totalorder %s14, 3
      %p160 = pnand %p158, %p159
      %p161 = pneg %p160
      // Predicated region
      $region9: #{factorized_reduce.1} parent=5 // pred_check
        _
      $region10: #{factorized_reduce.1} parent=5 // pred_check_branch
        %163 = sbr.rel (%p160) target = $region12
      $region11: #{factorized_reduce.1} parent=5 // pred_region
        %s164 = ssub.s32 %s14, 1
        // Predicated region
        $region13: #{factorized_reduce.1} parent=11 // pred_check
          %p165 = pneg %p61
        $region14: #{factorized_reduce.1} parent=11 // pred_check_branch
          %167 = sbr.rel (%p165) target = $region16
        $region15: #{factorized_reduce.1} parent=11 // pred_region
          _
        $region16: #{factorized_reduce.1} parent=11 // pred_fallthru
          _
        // Predicated region
        $region17: #{factorized_reduce.1} parent=11 // pred_check
          %p168 = pneg %p82
        $region18: #{factorized_reduce.1} parent=11 // pred_check_branch
          %170 = sbr.rel (%p168) target = $region20
        $region19: #{factorized_reduce.1} parent=11 // pred_region
          _
        $region20: #{factorized_reduce.1} parent=11 // pred_fallthru
          _
        // Predicated region
        $region21: #{factorized_reduce.1} parent=11 // pred_check
          %p171 = pneg %p103
        $region22: #{factorized_reduce.1} parent=11 // pred_check_branch
          %173 = sbr.rel (%p171) target = $region24
        $region23: #{factorized_reduce.1} parent=11 // pred_region
          _
        $region24: #{factorized_reduce.1} parent=11 // pred_fallthru
          _
        // Predicated region
        $region25: #{factorized_reduce.1} parent=11 // pred_check
          %p174 = pneg %p124
        $region26: #{factorized_reduce.1} parent=11 // pred_check_branch
          %176 = sbr.rel (%p174) target = $region28
        $region27: #{factorized_reduce.1} parent=11 // pred_region
          _
        $region28: #{factorized_reduce.1} parent=11 // pred_fallthru
          _
      $region12: #{factorized_reduce.1} parent=5 // pred_fallthru
        _
      %p177 = scmp.lt.s32.totalorder %s14, 2
      // Predicated region
      $region29: #{factorized_reduce.1} parent=5 // pred_check
        %p178 = pneg %p177
      $region30: #{factorized_reduce.1} parent=5 // pred_check_branch
        %180 = sbr.rel (%p178) target = $region32
      $region31: #{factorized_reduce.1} parent=5 // pred_region
        // Predicated region
        $region33: #{factorized_reduce.1} parent=31 // pred_check
          %p181 = pneg %p34
        $region34: #{factorized_reduce.1} parent=31 // pred_check_branch
          %183 = sbr.rel (%p181) target = $region36
        $region35: #{factorized_reduce.1} parent=31 // pred_region
          %p184 = scmp.lt.s32.totalorder %s14, 1
          %s185 = scalar_select %p184, %s14, 1
          %s186 = smul.addr %s185, 4
          %s187 = smul.addr %s186, 8
          %s188 = scalar_lea.vmem %s0, %s187
        $region36: #{factorized_reduce.1} parent=31 // pred_fallthru
          _
      $region32: #{factorized_reduce.1} parent=5 // pred_fallthru
        _
      %p189 = scmp.le.s32.totalorder 1, %s14
      %p190 = scmp.lt.s32.totalorder %s14, 3
      %p191 = pnand %p189, %p190
      %p192 = pneg %p191
      // Predicated region
      $region37: #{factorized_reduce.1} parent=5 // pred_check
        _
      $region38: #{factorized_reduce.1} parent=5 // pred_check_branch
        %194 = sbr.rel (%p191) target = $region40
      $region39: #{factorized_reduce.1} parent=5 // pred_region
        %s195 = ssub.s32 %s14, 1
        %p196 = scmp.lt.s32.totalorder %s19, 1
        %s197 = scalar_select %p196, %s19, 1
        %s198 = smul.addr %s197, 4
        %s199 = smul.addr %s198, 8
        %s200 = scalar_lea.vmem %s0, %s199
        %p201 = pneg %p40
        %p202 = pneg %p37
        %p203 = pneg %p61
        %p204 = pneg %p58
        %p205 = pneg %p82
        %p206 = pneg %p79
        %p207 = pneg %p103
        %p208 = pneg %p100
        %p209 = pneg %p124
        %p210 = pneg %p121
        %p211 = pneg %p150
        %p212 = pneg %p147
        %s213 = sand.u32 %s137, 1
        %s214 = scalar_lea.sflag [#allocation5], %s213
        %s215 = sand.u32 %s137, 1
        %s216 = smul.addr %s215, 64
        %s217 = scalar_lea.vmem [#allocation4], %s216
        %p218 = scmp.lt.s32.totalorder %s19, 1
        %s219 = scalar_select %p218, %s19, 1
        %s220 = smul.addr %s219, 4
        %s221 = smul.addr %s220, 8
        %s222 = scalar_lea.vmem %s0, %s221
        %v224 = vld [vmem:[%s1] sm:$0x3]
        %s225 = scalar_lea.vmem %s1, 2
        %v226 = vld [vmem:[%s225] sm:$0x3]
        %v227 = vld [vmem:[%s2] sm:$0xf]
        %v228 = vld [vmem:[%s2 + $0x4] sm:$0xf]
        %v229 = vld [vmem:[%s2 + $0x8] sm:$0xf]
        %v230 = vld [vmem:[%s2 + $0xc] sm:$0xf]
        %s231 = scalar_lea.vmem %s2, 16
        %v232 = vld [vmem:[%s231] sm:$0xf]
        %v233 = vld [vmem:[%s231 + $0x4] sm:$0xf]
        %v234 = vld [vmem:[%s231 + $0x8] sm:$0xf]
        %v235 = vld [vmem:[%s231 + $0xc] sm:$0xf]
        %vm236 = vcmask 60416
        %237 = vst.msk [vmem:[#allocation2] sm:$0xf] %vm236, 0.0
        %238 = vst.msk [vmem:[#allocation2 + $0x4] sm:$0xf] %vm236, 0.0
        %239 = vst.msk [vmem:[#allocation3] sm:$0xf] %vm236, 0.0
        %240 = vst.msk [vmem:[#allocation3 + $0x4] sm:$0xf] %vm236, 0.0
        %v241 = vld [vmem:[%s222] sm:$0x1]
        %v242 = vld [vmem:[%s222 + $0x8] sm:$0x1]
        %v243 = vld [vmem:[%s222 + $0x10] sm:$0x1]
        %v244 = vld [vmem:[%s222 + $0x18] sm:$0x1]
        %vm245 = vcmp.ge.f32.partialorder %v241, 0.0
        %vm246 = vcmp.ge.f32.partialorder %v242, 0.0
        %vm247 = vcmp.ge.f32.partialorder %v243, 0.0
        %vm248 = vcmp.ge.f32.partialorder %v244, 0.0
        %v249 = vmul.f32 %v241, 0.01
        %v250 = vmul.f32 %v242, 0.01
        %v251 = vmul.f32 %v243, 0.01
        %v252 = vmul.f32 %v244, 0.01
        %v253 = vsel %vm245, %v241, %v249
        %v254 = vsel %vm246, %v242, %v250
        %v255 = vsel %vm247, %v243, %v251
        %v256 = vsel %vm248, %v244, %v252
        %v257 = vpack.c.bf16 %v253, %v253
        %v258 = vpack.c.bf16 %v254, %v254
        %v259 = vpack.c.bf16 %v255, %v255
        %v260 = vpack.c.bf16 %v256, %v256
        %v265 = vunpack.c.l.b16 %v257
        %v266 = vunpack.c.l.b16 %v258
        %v267 = vunpack.c.l.b16 %v259
        %v268 = vunpack.c.l.b16 %v260
        %v269 = vrot.slane %v266, 7
        %vm270 = vcmask 1041409
        %v271 = vsel %vm270, %v269, %v265
        %v272 = vrot.slane %v267, 6
        %vm273 = vcmask 1042434
        %v274 = vsel %vm273, %v272, %v271
        %v275 = vrot.slane %v268, 5
        %vm276 = vcmask 1043459
        %v277 = vsel %vm276, %v275, %v274
        %v278 = vpack.c.b16 %v277, %v277
        %v283 = vunpack.c.l.b16 %v227
        %v284 = vunpack.c.l.b16 %v228
        %v285 = vunpack.c.l.b16 %v229
        %v286 = vunpack.c.l.b16 %v230
        %v287 = vpack.c.b16 %v284, %v283
        %v288 = vpack.c.b16 %v286, %v285
        %vm291 = vcmask 261120
        %v293 = vsel %vm291, %v278, 0
        %295 = vmatprep.subr.bf16.mxu0 0
        %296 = vmatpush1.bf16.msra.mxu0 %v287
        %297 = vmatprep.subr.bf16.mxu0 0
        %298 = vmatpush1.bf16.msra.mxu0 %v288
        %299 = vmatprep.subr.bf16.mxu0 0
        %300 = vmatpush1.bf16.msra.mxu0 0
        %301 = vmatprep.subr.bf16.mxu0 0
        %302 = vmatpush1.bf16.msra.mxu0 0
        %303 = vmatprep.subr.bf16.mxu0 0
        %304 = vmatpush1.bf16.msra.mxu0 0
        %305 = vmatprep.subr.bf16.mxu0 0
        %306 = vmatpush1.bf16.msra.mxu0 0
        %307 = vmatprep.subr.bf16.mxu0 0
        %308 = vmatpush1.bf16.msra.mxu0 0
        %309 = vmatprep.subr.bf16.mxu0 0
        %310 = vmatpush1.bf16.msra.mxu0 0
        %311 = vmatprep.subr.bf16.mxu0 0
        %312 = vmatpush1.bf16.msra.mxu0 0
        %313 = vmatprep.subr.bf16.mxu0 0
        %314 = vmatpush1.bf16.msra.mxu0 0
        %315 = vmatprep.subr.bf16.mxu0 0
        %316 = vmatpush1.bf16.msra.mxu0 0
        %317 = vmatprep.subr.bf16.mxu0 0
        %318 = vmatpush1.bf16.msra.mxu0 0
        %319 = vmatprep.subr.bf16.mxu0 0
        %320 = vmatpush1.bf16.msra.mxu0 0
        %321 = vmatprep.subr.bf16.mxu0 0
        %322 = vmatpush1.bf16.msra.mxu0 0
        %323 = vmatprep.subr.bf16.mxu0 0
        %324 = vmatpush1.bf16.msra.mxu0 0
        %325 = vmatprep.subr.bf16.mxu0 0
        %326 = vmatpush1.bf16.msra.mxu0 0
        %327 = vmatprep.mubr.bf16.mxu0 0
        %328 = vmatmul.mubr.bf16.gmra.mrb[0].mxu0 %v293
        %v329 = vpop.f32.mrb[0].mxu0
        %v330 = vadd.f32 0.0, %v329
        %v331 = vpop.f32.mrb[0].mxu0
        %v332 = vpop.f32.mrb[0].mxu0
        %v333 = vpop.f32.mrb[0].mxu0
        %334 = vdwg.mxu0
        %v335 = vpack.c.bf16 %v330, %v330
        %v340 = vunpack.c.l.b16 %v232
        %v341 = vunpack.c.l.b16 %v233
        %v342 = vunpack.c.l.b16 %v234
        %v343 = vunpack.c.l.b16 %v235
        %v344 = vpack.c.b16 %v341, %v340
        %v345 = vpack.c.b16 %v343, %v342
        %348 = vmatprep.subr.bf16.mxu0 0
        %349 = vmatpush1.bf16.msra.mxu0 %v344
        %350 = vmatprep.subr.bf16.mxu0 0
        %351 = vmatpush1.bf16.msra.mxu0 %v345
        %352 = vmatprep.subr.bf16.mxu0 0
        %353 = vmatpush1.bf16.msra.mxu0 0
        %354 = vmatprep.subr.bf16.mxu0 0
        %355 = vmatpush1.bf16.msra.mxu0 0
        %356 = vmatprep.subr.bf16.mxu0 0
        %357 = vmatpush1.bf16.msra.mxu0 0
        %358 = vmatprep.subr.bf16.mxu0 0
        %359 = vmatpush1.bf16.msra.mxu0 0
        %360 = vmatprep.subr.bf16.mxu0 0
        %361 = vmatpush1.bf16.msra.mxu0 0
        %362 = vmatprep.subr.bf16.mxu0 0
        %363 = vmatpush1.bf16.msra.mxu0 0
        %364 = vmatprep.subr.bf16.mxu0 0
        %365 = vmatpush1.bf16.msra.mxu0 0
        %366 = vmatprep.subr.bf16.mxu0 0
        %367 = vmatpush1.bf16.msra.mxu0 0
        %368 = vmatprep.subr.bf16.mxu0 0
        %369 = vmatpush1.bf16.msra.mxu0 0
        %370 = vmatprep.subr.bf16.mxu0 0
        %371 = vmatpush1.bf16.msra.mxu0 0
        %372 = vmatprep.subr.bf16.mxu0 0
        %373 = vmatpush1.bf16.msra.mxu0 0
        %374 = vmatprep.subr.bf16.mxu0 0
        %375 = vmatpush1.bf16.msra.mxu0 0
        %376 = vmatprep.subr.bf16.mxu0 0
        %377 = vmatpush1.bf16.msra.mxu0 0
        %378 = vmatprep.subr.bf16.mxu0 0
        %379 = vmatpush1.bf16.msra.mxu0 0
        %380 = vmatprep.mubr.bf16.mxu0 0
        %381 = vmatmul.mubr.bf16.gmra.mrb[0].mxu0 %v293
        %v382 = vpop.f32.mrb[0].mxu0
        %v383 = vadd.f32 0.0, %v382
        %v384 = vpop.f32.mrb[0].mxu0
        %v385 = vpop.f32.mrb[0].mxu0
        %v386 = vpop.f32.mrb[0].mxu0
        %387 = vdwg.mxu0
        %v388 = vpack.c.bf16 %v383, %v383
        %vm389 = vcmask 31744
        %v391 = vsel %vm389, %v224, 0
        %vm393 = vcmask 1041408
        %v395 = vsel %vm393, %v335, 0
        %397 = vmatprep.subr.bf16.mxu0 0
        %398 = vmatpush1.bf16.msra.mxu0 %v395
        %399 = vmatprep.subr.bf16.mxu0 0
        %400 = vmatpush1.bf16.msra.mxu0 0
        %401 = vmatprep.subr.bf16.mxu0 0
        %402 = vmatpush1.bf16.msra.mxu0 0
        %403 = vmatprep.subr.bf16.mxu0 0
        %404 = vmatpush1.bf16.msra.mxu0 0
        %405 = vmatprep.subr.bf16.mxu0 0
        %406 = vmatpush1.bf16.msra.mxu0 0
        %407 = vmatprep.subr.bf16.mxu0 0
        %408 = vmatpush1.bf16.msra.mxu0 0
        %409 = vmatprep.subr.bf16.mxu0 0
        %410 = vmatpush1.bf16.msra.mxu0 0
        %411 = vmatprep.subr.bf16.mxu0 0
        %412 = vmatpush1.bf16.msra.mxu0 0
        %413 = vmatprep.subr.bf16.mxu0 0
        %414 = vmatpush1.bf16.msra.mxu0 0
        %415 = vmatprep.subr.bf16.mxu0 0
        %416 = vmatpush1.bf16.msra.mxu0 0
        %417 = vmatprep.subr.bf16.mxu0 0
        %418 = vmatpush1.bf16.msra.mxu0 0
        %419 = vmatprep.subr.bf16.mxu0 0
        %420 = vmatpush1.bf16.msra.mxu0 0
        %421 = vmatprep.subr.bf16.mxu0 0
        %422 = vmatpush1.bf16.msra.mxu0 0
        %423 = vmatprep.subr.bf16.mxu0 0
        %424 = vmatpush1.bf16.msra.mxu0 0
        %425 = vmatprep.subr.bf16.mxu0 0
        %426 = vmatpush1.bf16.msra.mxu0 0
        %427 = vmatprep.subr.bf16.mxu0 0
        %428 = vmatpush1.bf16.msra.mxu0 0
        %429 = vmatprep.mubr.bf16.mxu0 0
        %430 = vmatmul.mubr.bf16.gmra.mrb[0].mxu0 %v391
        %v431 = vpop.f32.mrb[0].mxu0
        %v432 = vadd.f32 0.0, %v431
        %v433 = vpop.f32.mrb[0].mxu0
        %v434 = vpop.f32.mrb[0].mxu0
        %v435 = vpop.f32.mrb[0].mxu0
        %436 = vdwg.mxu0
        %v438 = vsel %vm389, %v226, 0
        %v441 = vsel %vm393, %v388, 0
        %443 = vmatprep.subr.bf16.mxu0 0
        %444 = vmatpush1.bf16.msra.mxu0 %v441
        %445 = vmatprep.subr.bf16.mxu0 0
        %446 = vmatpush1.bf16.msra.mxu0 0
        %447 = vmatprep.subr.bf16.mxu0 0
        %448 = vmatpush1.bf16.msra.mxu0 0
        %449 = vmatprep.subr.bf16.mxu0 0
        %450 = vmatpush1.bf16.msra.mxu0 0
        %451 = vmatprep.subr.bf16.mxu0 0
        %452 = vmatpush1.bf16.msra.mxu0 0
        %453 = vmatprep.subr.bf16.mxu0 0
        %454 = vmatpush1.bf16.msra.mxu0 0
        %455 = vmatprep.subr.bf16.mxu0 0
        %456 = vmatpush1.bf16.msra.mxu0 0
        %457 = vmatprep.subr.bf16.mxu0 0
        %458 = vmatpush1.bf16.msra.mxu0 0
        %459 = vmatprep.subr.bf16.mxu0 0
        %460 = vmatpush1.bf16.msra.mxu0 0
        %461 = vmatprep.subr.bf16.mxu0 0
        %462 = vmatpush1.bf16.msra.mxu0 0
        %463 = vmatprep.subr.bf16.mxu0 0
        %464 = vmatpush1.bf16.msra.mxu0 0
        %465 = vmatprep.subr.bf16.mxu0 0
        %466 = vmatpush1.bf16.msra.mxu0 0
        %467 = vmatprep.subr.bf16.mxu0 0
        %468 = vmatpush1.bf16.msra.mxu0 0
        %469 = vmatprep.subr.bf16.mxu0 0
        %470 = vmatpush1.bf16.msra.mxu0 0
        %471 = vmatprep.subr.bf16.mxu0 0
        %472 = vmatpush1.bf16.msra.mxu0 0
        %473 = vmatprep.subr.bf16.mxu0 0
        %474 = vmatpush1.bf16.msra.mxu0 0
        %475 = vmatprep.mubr.bf16.mxu0 0
        %476 = vmatmul.mubr.bf16.gmra.mrb[0].mxu0 %v438
        %v477 = vpop.f32.mrb[0].mxu0
        %v478 = vadd.f32 0.0, %v477
        %v479 = vpop.f32.mrb[0].mxu0
        %v480 = vpop.f32.mrb[0].mxu0
        %v481 = vpop.f32.mrb[0].mxu0
        %482 = vdwg.mxu0
        %v485 = vunpack.c.l.s4 1966171168
        %v486 = vunpack.c.0.s8 %v485
        %v487 = vlaneseq
        %v488 = vshrl.u32 %v487, 7
        %v489 = vsub.s32 %v486, %v488
        %v490 = vrot.slane %v432, %v489
        %v491 = vcombine.high %v490, %v490
        %v493 = vunpack.c.l.s4 1966171168
        %v494 = vunpack.c.0.s8 %v493
        %v495 = vlaneseq
        %v496 = vshrl.u32 %v495, 7
        %v497 = vsub.s32 %v494, %v496
        %v498 = vrot.slane %v490, %v497
        %v500 = vunpack.c.l.s4 1966171168
        %v501 = vunpack.c.0.s8 %v500
        %v502 = vlaneseq
        %v503 = vshrl.u32 %v502, 7
        %v504 = vsub.s32 %v501, %v503
        %v505 = vrot.slane %v491, %v504
        %v506 = vcombine.high %v498, %v498
        %v507 = vcombine.high %v505, %v505
        %vm512 = vcmask 57344
        %513 = vst.msk [vmem:[%s217] sm:$0x1] %vm512, %v498
        %514 = vst.msk [vmem:[%s217 + $0x8] sm:$0x1] %vm512, %v505
        %515 = vst.msk [vmem:[%s217 + $0x10] sm:$0x1] %vm512, %v506
        %516 = vst.msk [vmem:[%s217 + $0x18] sm:$0x1] %vm512, %v507
        %v519 = vunpack.c.l.s4 1966171168
        %v520 = vunpack.c.0.s8 %v519
        %v521 = vlaneseq
        %v522 = vshrl.u32 %v521, 7
        %v523 = vsub.s32 %v520, %v522
        %v524 = vrot.slane %v478, %v523
        %v525 = vcombine.high %v524, %v524
        %v527 = vunpack.c.l.s4 1966171168
        %v528 = vunpack.c.0.s8 %v527
        %v529 = vlaneseq
        %v530 = vshrl.u32 %v529, 7
        %v531 = vsub.s32 %v528, %v530
        %v532 = vrot.slane %v524, %v531
        %v534 = vunpack.c.l.s4 1966171168
        %v535 = vunpack.c.0.s8 %v534
        %v536 = vlaneseq
        %v537 = vshrl.u32 %v536, 7
        %v538 = vsub.s32 %v535, %v537
        %v539 = vrot.slane %v525, %v538
        %v540 = vcombine.high %v532, %v532
        %v541 = vcombine.high %v539, %v539
        %s546 = scalar_lea.vmem %s217, 32 [#allocation4]
        %547 = vst.msk [vmem:[%s546] sm:$0x1] %vm512, %v532
        %548 = vst.msk [vmem:[%s546 + $0x8] sm:$0x1] %vm512, %v539
        %549 = vst.msk [vmem:[%s546 + $0x10] sm:$0x1] %vm512, %v540
        %550 = vst.msk [vmem:[%s546 + $0x18] sm:$0x1] %vm512, %v541
        %v551 = vld [vmem:[#allocation2] sm:$0xf]
        %v552 = vadd.f32 %v551, %v432
        %553 = vst.msk [vmem:[#allocation2] sm:$0xf] %vm236, %v552
        %s554 = scalar_lea.vmem [#allocation2], 4
        %v555 = vld [vmem:[%s554] sm:$0xf]
        %v556 = vadd.f32 %v555, %v478
        %557 = vst.msk [vmem:[%s554] sm:$0xf] %vm236, %v556
        %v558 = vld [vmem:[#allocation3] sm:$0xf]
        %v559 = vmul.f32 %v432, %v432
        %v560 = vadd.f32 %v558, %v559
        %561 = vst.msk [vmem:[#allocation3] sm:$0xf] %vm236, %v560
        %s562 = scalar_lea.vmem [#allocation3], 4
        %v563 = vld [vmem:[%s562] sm:$0xf]
        %v564 = vmul.f32 %v478, %v478
        %v565 = vadd.f32 %v563, %v564
        %566 = vst.msk [vmem:[%s562] sm:$0xf] %vm236, %v565
        %v567 = vld [vmem:[%s222 + $0x1] sm:$0x1]
        %v568 = vld [vmem:[%s222 + $0x9] sm:$0x1]
        %v569 = vld [vmem:[%s222 + $0x11] sm:$0x1]
        %v570 = vld [vmem:[%s222 + $0x19] sm:$0x1]
        %vm571 = vcmp.ge.f32.partialorder %v567, 0.0
        %vm572 = vcmp.ge.f32.partialorder %v568, 0.0
        %vm573 = vcmp.ge.f32.partialorder %v569, 0.0
        %vm574 = vcmp.ge.f32.partialorder %v570, 0.0
        %v575 = vmul.f32 %v567, 0.01
        %v576 = vmul.f32 %v568, 0.01
        %v577 = vmul.f32 %v569, 0.01
        %v578 = vmul.f32 %v570, 0.01
        %v579 = vsel %vm571, %v567, %v575
        %v580 = vsel %vm572, %v568, %v576
        %v581 = vsel %vm573, %v569, %v577
        %v582 = vsel %vm574, %v570, %v578
        %v583 = vpack.c.bf16 %v579, %v579
        %v584 = vpack.c.bf16 %v580, %v580
        %v585 = vpack.c.bf16 %v581, %v581
        %v586 = vpack.c.bf16 %v582, %v582
        %v591 = vunpack.c.l.b16 %v583
        %v592 = vunpack.c.l.b16 %v584
        %v593 = vunpack.c.l.b16 %v585
        %v594 = vunpack.c.l.b16 %v586
        %v595 = vrot.slane %v592, 7
        %v596 = vsel %vm270, %v595, %v591
        %v597 = vrot.slane %v593, 6
        %v598 = vsel %vm273, %v597, %v596
        %v599 = vrot.slane %v594, 5
        %v600 = vsel %vm276, %v599, %v598
        %v601 = vpack.c.b16 %v600, %v600
        %v603 = vsel %vm291, %v601, 0
        %605 = vmatprep.subr.bf16.mxu0 0
        %606 = vmatpush1.bf16.msra.mxu0 %v287
        %607 = vmatprep.subr.bf16.mxu0 0
        %608 = vmatpush1.bf16.msra.mxu0 %v288
        %609 = vmatprep.subr.bf16.mxu0 0
        %610 = vmatpush1.bf16.msra.mxu0 0
        %611 = vmatprep.subr.bf16.mxu0 0
        %612 = vmatpush1.bf16.msra.mxu0 0
        %613 = vmatprep.subr.bf16.mxu0 0
        %614 = vmatpush1.bf16.msra.mxu0 0
        %615 = vmatprep.subr.bf16.mxu0 0
        %616 = vmatpush1.bf16.msra.mxu0 0
        %617 = vmatprep.subr.bf16.mxu0 0
        %618 = vmatpush1.bf16.msra.mxu0 0
        %619 = vmatprep.subr.bf16.mxu0 0
        %620 = vmatpush1.bf16.msra.mxu0 0
        %621 = vmatprep.subr.bf16.mxu0 0
        %622 = vmatpush1.bf16.msra.mxu0 0
        %623 = vmatprep.subr.bf16.mxu0 0
        %624 = vmatpush1.bf16.msra.mxu0 0
        %625 = vmatprep.subr.bf16.mxu0 0
        %626 = vmatpush1.bf16.msra.mxu0 0
        %627 = vmatprep.subr.bf16.mxu0 0
        %628 = vmatpush1.bf16.msra.mxu0 0
        %629 = vmatprep.subr.bf16.mxu0 0
        %630 = vmatpush1.bf16.msra.mxu0 0
        %631 = vmatprep.subr.bf16.mxu0 0
        %632 = vmatpush1.bf16.msra.mxu0 0
        %633 = vmatprep.subr.bf16.mxu0 0
        %634 = vmatpush1.bf16.msra.mxu0 0
        %635 = vmatprep.subr.bf16.mxu0 0
        %636 = vmatpush1.bf16.msra.mxu0 0
        %637 = vmatprep.mubr.bf16.mxu0 0
        %638 = vmatmul.mubr.bf16.gmra.mrb[0].mxu0 %v603
        %v639 = vpop.f32.mrb[0].mxu0
        %v640 = vadd.f32 0.0, %v639
        %v641 = vpop.f32.mrb[0].mxu0
        %v642 = vpop.f32.mrb[0].mxu0
        %v643 = vpop.f32.mrb[0].mxu0
        %644 = vdwg.mxu0
        %v645 = vpack.c.bf16 %v640, %v640
        %646 = vmatprep.subr.bf16.mxu0 0
        %647 = vmatpush1.bf16.msra.mxu0 %v344
        %648 = vmatprep.subr.bf16.mxu0 0
        %649 = vmatpush1.bf16.msra.mxu0 %v345
        %650 = vmatprep.subr.bf16.mxu0 0
        %651 = vmatpush1.bf16.msra.mxu0 0
        %652 = vmatprep.subr.bf16.mxu0 0
        %653 = vmatpush1.bf16.msra.mxu0 0
        %654 = vmatprep.subr.bf16.mxu0 0
        %655 = vmatpush1.bf16.msra.mxu0 0
        %656 = vmatprep.subr.bf16.mxu0 0
        %657 = vmatpush1.bf16.msra.mxu0 0
        %658 = vmatprep.subr.bf16.mxu0 0
        %659 = vmatpush1.bf16.msra.mxu0 0
        %660 = vmatprep.subr.bf16.mxu0 0
        %661 = vmatpush1.bf16.msra.mxu0 0
        %662 = vmatprep.subr.bf16.mxu0 0
        %663 = vmatpush1.bf16.msra.mxu0 0
        %664 = vmatprep.subr.bf16.mxu0 0
        %665 = vmatpush1.bf16.msra.mxu0 0
        %666 = vmatprep.subr.bf16.mxu0 0
        %667 = vmatpush1.bf16.msra.mxu0 0
        %668 = vmatprep.subr.bf16.mxu0 0
        %669 = vmatpush1.bf16.msra.mxu0 0
        %670 = vmatprep.subr.bf16.mxu0 0
        %671 = vmatpush1.bf16.msra.mxu0 0
        %672 = vmatprep.subr.bf16.mxu0 0
        %673 = vmatpush1.bf16.msra.mxu0 0
        %674 = vmatprep.subr.bf16.mxu0 0
        %675 = vmatpush1.bf16.msra.mxu0 0
        %676 = vmatprep.subr.bf16.mxu0 0
        %677 = vmatpush1.bf16.msra.mxu0 0
        %678 = vmatprep.mubr.bf16.mxu0 0
        %679 = vmatmul.mubr.bf16.gmra.mrb[0].mxu0 %v603
        %v680 = vpop.f32.mrb[0].mxu0
        %v681 = vadd.f32 0.0, %v680
        %v682 = vpop.f32.mrb[0].mxu0
        %v683 = vpop.f32.mrb[0].mxu0
        %v684 = vpop.f32.mrb[0].mxu0
        %685 = vdwg.mxu0
        %v686 = vpack.c.bf16 %v681, %v681
        %v688 = vsel %vm393, %v645, 0
        %690 = vmatprep.subr.bf16.mxu0 0
        %691 = vmatpush1.bf16.msra.mxu0 %v688
        %692 = vmatprep.subr.bf16.mxu0 0
        %693 = vmatpush1.bf16.msra.mxu0 0
        %694 = vmatprep.subr.bf16.mxu0 0
        %695 = vmatpush1.bf16.msra.mxu0 0
        %696 = vmatprep.subr.bf16.mxu0 0
        %697 = vmatpush1.bf16.msra.mxu0 0
        %698 = vmatprep.subr.bf16.mxu0 0
        %699 = vmatpush1.bf16.msra.mxu0 0
        %700 = vmatprep.subr.bf16.mxu0 0
        %701 = vmatpush1.bf16.msra.mxu0 0
        %702 = vmatprep.subr.bf16.mxu0 0
        %703 = vmatpush1.bf16.msra.mxu0 0
        %704 = vmatprep.subr.bf16.mxu0 0
        %705 = vmatpush1.bf16.msra.mxu0 0
        %706 = vmatprep.subr.bf16.mxu0 0
        %707 = vmatpush1.bf16.msra.mxu0 0
        %708 = vmatprep.subr.bf16.mxu0 0
        %709 = vmatpush1.bf16.msra.mxu0 0
        %710 = vmatprep.subr.bf16.mxu0 0
        %711 = vmatpush1.bf16.msra.mxu0 0
        %712 = vmatprep.subr.bf16.mxu0 0
        %713 = vmatpush1.bf16.msra.mxu0 0
        %714 = vmatprep.subr.bf16.mxu0 0
        %715 = vmatpush1.bf16.msra.mxu0 0
        %716 = vmatprep.subr.bf16.mxu0 0
        %717 = vmatpush1.bf16.msra.mxu0 0
        %718 = vmatprep.subr.bf16.mxu0 0
        %719 = vmatpush1.bf16.msra.mxu0 0
        %720 = vmatprep.subr.bf16.mxu0 0
        %721 = vmatpush1.bf16.msra.mxu0 0
        %722 = vmatprep.mubr.bf16.mxu0 0
        %723 = vmatmul.mubr.bf16.gmra.mrb[0].mxu0 %v391
        %v724 = vpop.f32.mrb[0].mxu0
        %v725 = vadd.f32 0.0, %v724
        %v726 = vpop.f32.mrb[0].mxu0
        %v727 = vpop.f32.mrb[0].mxu0
        %v728 = vpop.f32.mrb[0].mxu0
        %729 = vdwg.mxu0
        %v731 = vsel %vm393, %v686, 0
        %733 = vmatprep.subr.bf16.mxu0 0
        %734 = vmatpush1.bf16.msra.mxu0 %v731
        %735 = vmatprep.subr.bf16.mxu0 0
        %736 = vmatpush1.bf16.msra.mxu0 0
        %737 = vmatprep.subr.bf16.mxu0 0
        %738 = vmatpush1.bf16.msra.mxu0 0
        %739 = vmatprep.subr.bf16.mxu0 0
        %740 = vmatpush1.bf16.msra.mxu0 0
        %741 = vmatprep.subr.bf16.mxu0 0
        %742 = vmatpush1.bf16.msra.mxu0 0
        %743 = vmatprep.subr.bf16.mxu0 0
        %744 = vmatpush1.bf16.msra.mxu0 0
        %745 = vmatprep.subr.bf16.mxu0 0
        %746 = vmatpush1.bf16.msra.mxu0 0
        %747 = vmatprep.subr.bf16.mxu0 0
        %748 = vmatpush1.bf16.msra.mxu0 0
        %749 = vmatprep.subr.bf16.mxu0 0
        %750 = vmatpush1.bf16.msra.mxu0 0
        %751 = vmatprep.subr.bf16.mxu0 0
        %752 = vmatpush1.bf16.msra.mxu0 0
        %753 = vmatprep.subr.bf16.mxu0 0
        %754 = vmatpush1.bf16.msra.mxu0 0
        %755 = vmatprep.subr.bf16.mxu0 0
        %756 = vmatpush1.bf16.msra.mxu0 0
        %757 = vmatprep.subr.bf16.mxu0 0
        %758 = vmatpush1.bf16.msra.mxu0 0
        %759 = vmatprep.subr.bf16.mxu0 0
        %760 = vmatpush1.bf16.msra.mxu0 0
        %761 = vmatprep.subr.bf16.mxu0 0
        %762 = vmatpush1.bf16.msra.mxu0 0
        %763 = vmatprep.subr.bf16.mxu0 0
        %764 = vmatpush1.bf16.msra.mxu0 0
        %765 = vmatprep.mubr.bf16.mxu0 0
        %766 = vmatmul.mubr.bf16.gmra.mrb[0].mxu0 %v438
        %v767 = vpop.f32.mrb[0].mxu0
        %v768 = vadd.f32 0.0, %v767
        %v769 = vpop.f32.mrb[0].mxu0
        %v770 = vpop.f32.mrb[0].mxu0
        %v771 = vpop.f32.mrb[0].mxu0
        %772 = vdwg.mxu0
        %v775 = vunpack.c.l.s4 1966171168
        %v776 = vunpack.c.0.s8 %v775
        %v777 = vlaneseq
        %v778 = vshrl.u32 %v777, 7
        %v779 = vsub.s32 %v776, %v778
        %v780 = vrot.slane %v725, %v779
        %v781 = vcombine.high %v780, %v780
        %v783 = vunpack.c.l.s4 1966171168
        %v784 = vunpack.c.0.s8 %v783
        %v785 = vlaneseq
        %v786 = vshrl.u32 %v785, 7
        %v787 = vsub.s32 %v784, %v786
        %v788 = vrot.slane %v780, %v787
        %v790 = vunpack.c.l.s4 1966171168
        %v791 = vunpack.c.0.s8 %v790
        %v792 = vlaneseq
        %v793 = vshrl.u32 %v792, 7
        %v794 = vsub.s32 %v791, %v793
        %v795 = vrot.slane %v781, %v794
        %v796 = vcombine.high %v788, %v788
        %v797 = vcombine.high %v795, %v795
        %802 = vst.msk [vmem:[%s217 + $0x1] sm:$0x1] %vm512, %v788
        %803 = vst.msk [vmem:[%s217 + $0x9] sm:$0x1] %vm512, %v795
        %804 = vst.msk [vmem:[%s217 + $0x11] sm:$0x1] %vm512, %v796
        %805 = vst.msk [vmem:[%s217 + $0x19] sm:$0x1] %vm512, %v797
        %v808 = vunpack.c.l.s4 1966171168
        %v809 = vunpack.c.0.s8 %v808
        %v810 = vlaneseq
        %v811 = vshrl.u32 %v810, 7
        %v812 = vsub.s32 %v809, %v811
        %v813 = vrot.slane %v768, %v812
        %v814 = vcombine.high %v813, %v813
        %v816 = vunpack.c.l.s4 1966171168
        %v817 = vunpack.c.0.s8 %v816
        %v818 = vlaneseq
        %v819 = vshrl.u32 %v818, 7
        %v820 = vsub.s32 %v817, %v819
        %v821 = vrot.slane %v813, %v820
        %v823 = vunpack.c.l.s4 1966171168
        %v824 = vunpack.c.0.s8 %v823
        %v825 = vlaneseq
        %v826 = vshrl.u32 %v825, 7
        %v827 = vsub.s32 %v824, %v826
        %v828 = vrot.slane %v814, %v827
        %v829 = vcombine.high %v821, %v821
        %v830 = vcombine.high %v828, %v828
        %835 = vst.msk [vmem:[%s546 + $0x1] sm:$0x1] %vm512, %v821
        %836 = vst.msk [vmem:[%s546 + $0x9] sm:$0x1] %vm512, %v828
        %837 = vst.msk [vmem:[%s546 + $0x11] sm:$0x1] %vm512, %v829
        %838 = vst.msk [vmem:[%s546 + $0x19] sm:$0x1] %vm512, %v830
        %v839 = vld [vmem:[#allocation2] sm:$0xf]
        %v840 = vadd.f32 %v839, %v725
        %841 = vst.msk [vmem:[#allocation2] sm:$0xf] %vm236, %v840
        %v842 = vld [vmem:[%s554] sm:$0xf]
        %v843 = vadd.f32 %v842, %v768
        %844 = vst.msk [vmem:[%s554] sm:$0xf] %vm236, %v843
        %v845 = vld [vmem:[#allocation3] sm:$0xf]
        %v846 = vmul.f32 %v725, %v725
        %v847 = vadd.f32 %v845, %v846
        %848 = vst.msk [vmem:[#allocation3] sm:$0xf] %vm236, %v847
        %v849 = vld [vmem:[%s562] sm:$0xf]
        %v850 = vmul.f32 %v768, %v768
        %v851 = vadd.f32 %v849, %v850
        %852 = vst.msk [vmem:[%s562] sm:$0xf] %vm236, %v851
        %v853 = vld [vmem:[%s222 + $0x2] sm:$0x1]
        %v854 = vld [vmem:[%s222 + $0xa] sm:$0x1]
        %v855 = vld [vmem:[%s222 + $0x12] sm:$0x1]
        %v856 = vld [vmem:[%s222 + $0x1a] sm:$0x1]
        %vm857 = vcmp.ge.f32.partialorder %v853, 0.0
        %vm858 = vcmp.ge.f32.partialorder %v854, 0.0
        %vm859 = vcmp.ge.f32.partialorder %v855, 0.0
        %vm860 = vcmp.ge.f32.partialorder %v856, 0.0
        %v861 = vmul.f32 %v853, 0.01
        %v862 = vmul.f32 %v854, 0.01
        %v863 = vmul.f32 %v855, 0.01
        %v864 = vmul.f32 %v856, 0.01
        %v865 = vsel %vm857, %v853, %v861
        %v866 = vsel %vm858, %v854, %v862
        %v867 = vsel %vm859, %v855, %v863
        %v868 = vsel %vm860, %v856, %v864
        %v869 = vpack.c.bf16 %v865, %v865
        %v870 = vpack.c.bf16 %v866, %v866
        %v871 = vpack.c.bf16 %v867, %v867
        %v872 = vpack.c.bf16 %v868, %v868
        %v877 = vunpack.c.l.b16 %v869
        %v878 = vunpack.c.l.b16 %v870
        %v879 = vunpack.c.l.b16 %v871
        %v880 = vunpack.c.l.b16 %v872
        %v881 = vrot.slane %v878, 7
        %v882 = vsel %vm270, %v881, %v877
        %v883 = vrot.slane %v879, 6
        %v884 = vsel %vm273, %v883, %v882
        %v885 = vrot.slane %v880, 5
        %v886 = vsel %vm276, %v885, %v884
        %v887 = vpack.c.b16 %v886, %v886
        %v889 = vsel %vm291, %v887, 0
        %891 = vmatprep.subr.bf16.mxu0 0
        %892 = vmatpush1.bf16.msra.mxu0 %v287
        %893 = vmatprep.subr.bf16.mxu0 0
        %894 = vmatpush1.bf16.msra.mxu0 %v288
        %895 = vmatprep.subr.bf16.mxu0 0
        %896 = vmatpush1.bf16.msra.mxu0 0
        %897 = vmatprep.subr.bf16.mxu0 0
        %898 = vmatpush1.bf16.msra.mxu0 0
        %899 = vmatprep.subr.bf16.mxu0 0
        %900 = vmatpush1.bf16.msra.mxu0 0
        %901 = vmatprep.subr.bf16.mxu0 0
        %902 = vmatpush1.bf16.msra.mxu0 0
        %903 = vmatprep.subr.bf16.mxu0 0
        %904 = vmatpush1.bf16.msra.mxu0 0
        %905 = vmatprep.subr.bf16.mxu0 0
        %906 = vmatpush1.bf16.msra.mxu0 0
        %907 = vmatprep.subr.bf16.mxu0 0
        %908 = vmatpush1.bf16.msra.mxu0 0
        %909 = vmatprep.subr.bf16.mxu0 0
        %910 = vmatpush1.bf16.msra.mxu0 0
        %911 = vmatprep.subr.bf16.mxu0 0
        %912 = vmatpush1.bf16.msra.mxu0 0
        %913 = vmatprep.subr.bf16.mxu0 0
        %914 = vmatpush1.bf16.msra.mxu0 0
        %915 = vmatprep.subr.bf16.mxu0 0
        %916 = vmatpush1.bf16.msra.mxu0 0
        %917 = vmatprep.subr.bf16.mxu0 0
        %918 = vmatpush1.bf16.msra.mxu0 0
        %919 = vmatprep.subr.bf16.mxu0 0
        %920 = vmatpush1.bf16.msra.mxu0 0
        %921 = vmatprep.subr.bf16.mxu0 0
        %922 = vmatpush1.bf16.msra.mxu0 0
        %923 = vmatprep.mubr.bf16.mxu0 0
        %924 = vmatmul.mubr.bf16.gmra.mrb[0].mxu0 %v889
        %v925 = vpop.f32.mrb[0].mxu0
        %v926 = vadd.f32 0.0, %v925
        %v927 = vpop.f32.mrb[0].mxu0
        %v928 = vpop.f32.mrb[0].mxu0
        %v929 = vpop.f32.mrb[0].mxu0
        %930 = vdwg.mxu0
        %v931 = vpack.c.bf16 %v926, %v926
        %932 = vmatprep.subr.bf16.mxu0 0
        %933 = vmatpush1.bf16.msra.mxu0 %v344
        %934 = vmatprep.subr.bf16.mxu0 0
        %935 = vmatpush1.bf16.msra.mxu0 %v345
        %936 = vmatprep.subr.bf16.mxu0 0
        %937 = vmatpush1.bf16.msra.mxu0 0
        %938 = vmatprep.subr.bf16.mxu0 0
        %939 = vmatpush1.bf16.msra.mxu0 0
        %940 = vmatprep.subr.bf16.mxu0 0
        %941 = vmatpush1.bf16.msra.mxu0 0
        %942 = vmatprep.subr.bf16.mxu0 0
        %943 = vmatpush1.bf16.msra.mxu0 0
        %944 = vmatprep.subr.bf16.mxu0 0
        %945 = vmatpush1.bf16.msra.mxu0 0
        %946 = vmatprep.subr.bf16.mxu0 0
        %947 = vmatpush1.bf16.msra.mxu0 0
        %948 = vmatprep.subr.bf16.mxu0 0
        %949 = vmatpush1.bf16.msra.mxu0 0
        %950 = vmatprep.subr.bf16.mxu0 0
        %951 = vmatpush1.bf16.msra.mxu0 0
        %952 = vmatprep.subr.bf16.mxu0 0
        %953 = vmatpush1.bf16.msra.mxu0 0
        %954 = vmatprep.subr.bf16.mxu0 0
        %955 = vmatpush1.bf16.msra.mxu0 0
        %956 = vmatprep.subr.bf16.mxu0 0
        %957 = vmatpush1.bf16.msra.mxu0 0
        %958 = vmatprep.subr.bf16.mxu0 0
        %959 = vmatpush1.bf16.msra.mxu0 0
        %960 = vmatprep.subr.bf16.mxu0 0
        %961 = vmatpush1.bf16.msra.mxu0 0
        %962 = vmatprep.subr.bf16.mxu0 0
        %963 = vmatpush1.bf16.msra.mxu0 0
        %964 = vmatprep.mubr.bf16.mxu0 0
        %965 = vmatmul.mubr.bf16.gmra.mrb[0].mxu0 %v889
        %v966 = vpop.f32.mrb[0].mxu0
        %v967 = vadd.f32 0.0, %v966
        %v968 = vpop.f32.mrb[0].mxu0
        %v969 = vpop.f32.mrb[0].mxu0
        %v970 = vpop.f32.mrb[0].mxu0
        %971 = vdwg.mxu0
        %v972 = vpack.c.bf16 %v967, %v967
        %v974 = vsel %vm393, %v931, 0
        %976 = vmatprep.subr.bf16.mxu0 0
        %977 = vmatpush1.bf16.msra.mxu0 %v974
        %978 = vmatprep.subr.bf16.mxu0 0
        %979 = vmatpush1.bf16.msra.mxu0 0
        %980 = vmatprep.subr.bf16.mxu0 0
        %981 = vmatpush1.bf16.msra.mxu0 0
        %982 = vmatprep.subr.bf16.mxu0 0
        %983 = vmatpush1.bf16.msra.mxu0 0
        %984 = vmatprep.subr.bf16.mxu0 0
        %985 = vmatpush1.bf16.msra.mxu0 0
        %986 = vmatprep.subr.bf16.mxu0 0
        %987 = vmatpush1.bf16.msra.mxu0 0
        %988 = vmatprep.subr.bf16.mxu0 0
        %989 = vmatpush1.bf16.msra.mxu0 0
        %990 = vmatprep.subr.bf16.mxu0 0
        %991 = vmatpush1.bf16.msra.mxu0 0
        %992 = vmatprep.subr.bf16.mxu0 0
        %993 = vmatpush1.bf16.msra.mxu0 0
        %994 = vmatprep.subr.bf16.mxu0 0
        %995 = vmatpush1.bf16.msra.mxu0 0
        %996 = vmatprep.subr.bf16.mxu0 0
        %997 = vmatpush1.bf16.msra.mxu0 0
        %998 = vmatprep.subr.bf16.mxu0 0
        %999 = vmatpush1.bf16.msra.mxu0 0
        %1000 = vmatprep.subr.bf16.mxu0 0
        %1001 = vmatpush1.bf16.msra.mxu0 0
        %1002 = vmatprep.subr.bf16.mxu0 0
        %1003 = vmatpush1.bf16.msra.mxu0 0
        %1004 = vmatprep.subr.bf16.mxu0 0
        %1005 = vmatpush1.bf16.msra.mxu0 0
        %1006 = vmatprep.subr.bf16.mxu0 0
        %1007 = vmatpush1.bf16.msra.mxu0 0
        %1008 = vmatprep.mubr.bf16.mxu0 0
        %1009 = vmatmul.mubr.bf16.gmra.mrb[0].mxu0 %v391
        %v1010 = vpop.f32.mrb[0].mxu0
        %v1011 = vadd.f32 0.0, %v1010
        %v1012 = vpop.f32.mrb[0].mxu0
        %v1013 = vpop.f32.mrb[0].mxu0
        %v1014 = vpop.f32.mrb[0].mxu0
        %1015 = vdwg.mxu0
        %v1017 = vsel %vm393, %v972, 0
        %1019 = vmatprep.subr.bf16.mxu0 0
        %1020 = vmatpush1.bf16.msra.mxu0 %v1017
        %1021 = vmatprep.subr.bf16.mxu0 0
        %1022 = vmatpush1.bf16.msra.mxu0 0
        %1023 = vmatprep.subr.bf16.mxu0 0
        %1024 = vmatpush1.bf16.msra.mxu0 0
        %1025 = vmatprep.subr.bf16.mxu0 0
        %1026 = vmatpush1.bf16.msra.mxu0 0
        %1027 = vmatprep.subr.bf16.mxu0 0
        %1028 = vmatpush1.bf16.msra.mxu0 0
        %1029 = vmatprep.subr.bf16.mxu0 0
        %1030 = vmatpush1.bf16.msra.mxu0 0
        %1031 = vmatprep.subr.bf16.mxu0 0
        %1032 = vmatpush1.bf16.msra.mxu0 0
        %1033 = vmatprep.subr.bf16.mxu0 0
        %1034 = vmatpush1.bf16.msra.mxu0 0
        %1035 = vmatprep.subr.bf16.mxu0 0
        %1036 = vmatpush1.bf16.msra.mxu0 0
        %1037 = vmatprep.subr.bf16.mxu0 0
        %1038 = vmatpush1.bf16.msra.mxu0 0
        %1039 = vmatprep.subr.bf16.mxu0 0
        %1040 = vmatpush1.bf16.msra.mxu0 0
        %1041 = vmatprep.subr.bf16.mxu0 0
        %1042 = vmatpush1.bf16.msra.mxu0 0
        %1043 = vmatprep.subr.bf16.mxu0 0
        %1044 = vmatpush1.bf16.msra.mxu0 0
        %1045 = vmatprep.subr.bf16.mxu0 0
        %1046 = vmatpush1.bf16.msra.mxu0 0
        %1047 = vmatprep.subr.bf16.mxu0 0
        %1048 = vmatpush1.bf16.msra.mxu0 0
        %1049 = vmatprep.subr.bf16.mxu0 0
        %1050 = vmatpush1.bf16.msra.mxu0 0
        %1051 = vmatprep.mubr.bf16.mxu0 0
        %1052 = vmatmul.mubr.bf16.gmra.mrb[0].mxu0 %v438
        %v1053 = vpop.f32.mrb[0].mxu0
        %v1054 = vadd.f32 0.0, %v1053
        %v1055 = vpop.f32.mrb[0].mxu0
        %v1056 = vpop.f32.mrb[0].mxu0
        %v1057 = vpop.f32.mrb[0].mxu0
        %1058 = vdwg.mxu0
        %v1061 = vunpack.c.l.s4 1966171168
        %v1062 = vunpack.c.0.s8 %v1061
        %v1063 = vlaneseq
        %v1064 = vshrl.u32 %v1063, 7
        %v1065 = vsub.s32 %v1062, %v1064
        %v1066 = vrot.slane %v1011, %v1065
        %v1067 = vcombine.high %v1066, %v1066
        %v1069 = vunpack.c.l.s4 1966171168
        %v1070 = vunpack.c.0.s8 %v1069
        %v1071 = vlaneseq
        %v1072 = vshrl.u32 %v1071, 7
        %v1073 = vsub.s32 %v1070, %v1072
        %v1074 = vrot.slane %v1066, %v1073
        %v1076 = vunpack.c.l.s4 1966171168
        %v1077 = vunpack.c.0.s8 %v1076
        %v1078 = vlaneseq
        %v1079 = vshrl.u32 %v1078, 7
        %v1080 = vsub.s32 %v1077, %v1079
        %v1081 = vrot.slane %v1067, %v1080
        %v1082 = vcombine.high %v1074, %v1074
        %v1083 = vcombine.high %v1081, %v1081
        %1088 = vst.msk [vmem:[%s217 + $0x2] sm:$0x1] %vm512, %v1074
        %1089 = vst.msk [vmem:[%s217 + $0xa] sm:$0x1] %vm512, %v1081
        %1090 = vst.msk [vmem:[%s217 + $0x12] sm:$0x1] %vm512, %v1082
        %1091 = vst.msk [vmem:[%s217 + $0x1a] sm:$0x1] %vm512, %v1083
        %v1094 = vunpack.c.l.s4 1966171168
        %v1095 = vunpack.c.0.s8 %v1094
        %v1096 = vlaneseq
        %v1097 = vshrl.u32 %v1096, 7
        %v1098 = vsub.s32 %v1095, %v1097
        %v1099 = vrot.slane %v1054, %v1098
        %v1100 = vcombine.high %v1099, %v1099
        %v1102 = vunpack.c.l.s4 1966171168
        %v1103 = vunpack.c.0.s8 %v1102
        %v1104 = vlaneseq
        %v1105 = vshrl.u32 %v1104, 7
        %v1106 = vsub.s32 %v1103, %v1105
        %v1107 = vrot.slane %v1099, %v1106
        %v1109 = vunpack.c.l.s4 1966171168
        %v1110 = vunpack.c.0.s8 %v1109
        %v1111 = vlaneseq
        %v1112 = vshrl.u32 %v1111, 7
        %v1113 = vsub.s32 %v1110, %v1112
        %v1114 = vrot.slane %v1100, %v1113
        %v1115 = vcombine.high %v1107, %v1107
        %v1116 = vcombine.high %v1114, %v1114
        %1121 = vst.msk [vmem:[%s546 + $0x2] sm:$0x1] %vm512, %v1107
        %1122 = vst.msk [vmem:[%s546 + $0xa] sm:$0x1] %vm512, %v1114
        %1123 = vst.msk [vmem:[%s546 + $0x12] sm:$0x1] %vm512, %v1115
        %1124 = vst.msk [vmem:[%s546 + $0x1a] sm:$0x1] %vm512, %v1116
        %v1125 = vld [vmem:[#allocation2] sm:$0xf]
        %v1126 = vadd.f32 %v1125, %v1011
        %1127 = vst.msk [vmem:[#allocation2] sm:$0xf] %vm236, %v1126
        %v1128 = vld [vmem:[%s554] sm:$0xf]
        %v1129 = vadd.f32 %v1128, %v1054
        %1130 = vst.msk [vmem:[%s554] sm:$0xf] %vm236, %v1129
        %v1131 = vld [vmem:[#allocation3] sm:$0xf]
        %v1132 = vmul.f32 %v1011, %v1011
        %v1133 = vadd.f32 %v1131, %v1132
        %1134 = vst.msk [vmem:[#allocation3] sm:$0xf] %vm236, %v1133
        %v1135 = vld [vmem:[%s562] sm:$0xf]
        %v1136 = vmul.f32 %v1054, %v1054
        %v1137 = vadd.f32 %v1135, %v1136
        %1138 = vst.msk [vmem:[%s562] sm:$0xf] %vm236, %v1137
        %v1139 = vld [vmem:[%s222 + $0x3] sm:$0x1]
        %v1140 = vld [vmem:[%s222 + $0xb] sm:$0x1]
        %v1141 = vld [vmem:[%s222 + $0x13] sm:$0x1]
        %v1142 = vld [vmem:[%s222 + $0x1b] sm:$0x1]
        %vm1143 = vcmp.ge.f32.partialorder %v1139, 0.0
        %vm1144 = vcmp.ge.f32.partialorder %v1140, 0.0
        %vm1145 = vcmp.ge.f32.partialorder %v1141, 0.0
        %vm1146 = vcmp.ge.f32.partialorder %v1142, 0.0
        %v1147 = vmul.f32 %v1139, 0.01
        %v1148 = vmul.f32 %v1140, 0.01
        %v1149 = vmul.f32 %v1141, 0.01
        %v1150 = vmul.f32 %v1142, 0.01
        %v1151 = vsel %vm1143, %v1139, %v1147
        %v1152 = vsel %vm1144, %v1140, %v1148
        %v1153 = vsel %vm1145, %v1141, %v1149
        %v1154 = vsel %vm1146, %v1142, %v1150
        %v1155 = vpack.c.bf16 %v1151, %v1151
        %v1156 = vpack.c.bf16 %v1152, %v1152
        %v1157 = vpack.c.bf16 %v1153, %v1153
        %v1158 = vpack.c.bf16 %v1154, %v1154
        %v1163 = vunpack.c.l.b16 %v1155
        %v1164 = vunpack.c.l.b16 %v1156
        %v1165 = vunpack.c.l.b16 %v1157
        %v1166 = vunpack.c.l.b16 %v1158
        %v1167 = vrot.slane %v1164, 7
        %v1168 = vsel %vm270, %v1167, %v1163
        %v1169 = vrot.slane %v1165, 6
        %v1170 = vsel %vm273, %v1169, %v1168
        %v1171 = vrot.slane %v1166, 5
        %v1172 = vsel %vm276, %v1171, %v1170
        %v1173 = vpack.c.b16 %v1172, %v1172
        %v1175 = vsel %vm291, %v1173, 0
        %1177 = vmatprep.subr.bf16.mxu0 0
        %1178 = vmatpush1.bf16.msra.mxu0 %v287
        %1179 = vmatprep.subr.bf16.mxu0 0
        %1180 = vmatpush1.bf16.msra.mxu0 %v288
        %1181 = vmatprep.subr.bf16.mxu0 0
        %1182 = vmatpush1.bf16.msra.mxu0 0
        %1183 = vmatprep.subr.bf16.mxu0 0
        %1184 = vmatpush1.bf16.msra.mxu0 0
        %1185 = vmatprep.subr.bf16.mxu0 0
        %1186 = vmatpush1.bf16.msra.mxu0 0
        %1187 = vmatprep.subr.bf16.mxu0 0
        %1188 = vmatpush1.bf16.msra.mxu0 0
        %1189 = vmatprep.subr.bf16.mxu0 0
        %1190 = vmatpush1.bf16.msra.mxu0 0
        %1191 = vmatprep.subr.bf16.mxu0 0
        %1192 = vmatpush1.bf16.msra.mxu0 0
        %1193 = vmatprep.subr.bf16.mxu0 0
        %1194 = vmatpush1.bf16.msra.mxu0 0
        %1195 = vmatprep.subr.bf16.mxu0 0
        %1196 = vmatpush1.bf16.msra.mxu0 0
        %1197 = vmatprep.subr.bf16.mxu0 0
        %1198 = vmatpush1.bf16.msra.mxu0 0
        %1199 = vmatprep.subr.bf16.mxu0 0
        %1200 = vmatpush1.bf16.msra.mxu0 0
        %1201 = vmatprep.subr.bf16.mxu0 0
        %1202 = vmatpush1.bf16.msra.mxu0 0
        %1203 = vmatprep.subr.bf16.mxu0 0
        %1204 = vmatpush1.bf16.msra.mxu0 0
        %1205 = vmatprep.subr.bf16.mxu0 0
        %1206 = vmatpush1.bf16.msra.mxu0 0
        %1207 = vmatprep.subr.bf16.mxu0 0
        %1208 = vmatpush1.bf16.msra.mxu0 0
        %1209 = vmatprep.mubr.bf16.mxu0 0
        %1210 = vmatmul.mubr.bf16.gmra.mrb[0].mxu0 %v1175
        %v1211 = vpop.f32.mrb[0].mxu0
        %v1212 = vadd.f32 0.0, %v1211
        %v1213 = vpop.f32.mrb[0].mxu0
        %v1214 = vpop.f32.mrb[0].mxu0
        %v1215 = vpop.f32.mrb[0].mxu0
        %1216 = vdwg.mxu0
        %v1217 = vpack.c.bf16 %v1212, %v1212
        %1218 = vmatprep.subr.bf16.mxu0 0
        %1219 = vmatpush1.bf16.msra.mxu0 %v344
        %1220 = vmatprep.subr.bf16.mxu0 0
        %1221 = vmatpush1.bf16.msra.mxu0 %v345
        %1222 = vmatprep.subr.bf16.mxu0 0
        %1223 = vmatpush1.bf16.msra.mxu0 0
        %1224 = vmatprep.subr.bf16.mxu0 0
        %1225 = vmatpush1.bf16.msra.mxu0 0
        %1226 = vmatprep.subr.bf16.mxu0 0
        %1227 = vmatpush1.bf16.msra.mxu0 0
        %1228 = vmatprep.subr.bf16.mxu0 0
        %1229 = vmatpush1.bf16.msra.mxu0 0
        %1230 = vmatprep.subr.bf16.mxu0 0
        %1231 = vmatpush1.bf16.msra.mxu0 0
        %1232 = vmatprep.subr.bf16.mxu0 0
        %1233 = vmatpush1.bf16.msra.mxu0 0
        %1234 = vmatprep.subr.bf16.mxu0 0
        %1235 = vmatpush1.bf16.msra.mxu0 0
        %1236 = vmatprep.subr.bf16.mxu0 0
        %1237 = vmatpush1.bf16.msra.mxu0 0
        %1238 = vmatprep.subr.bf16.mxu0 0
        %1239 = vmatpush1.bf16.msra.mxu0 0
        %1240 = vmatprep.subr.bf16.mxu0 0
        %1241 = vmatpush1.bf16.msra.mxu0 0
        %1242 = vmatprep.subr.bf16.mxu0 0
        %1243 = vmatpush1.bf16.msra.mxu0 0
        %1244 = vmatprep.subr.bf16.mxu0 0
        %1245 = vmatpush1.bf16.msra.mxu0 0
        %1246 = vmatprep.subr.bf16.mxu0 0
        %1247 = vmatpush1.bf16.msra.mxu0 0
        %1248 = vmatprep.subr.bf16.mxu0 0
        %1249 = vmatpush1.bf16.msra.mxu0 0
        %1250 = vmatprep.mubr.bf16.mxu0 0
        %1251 = vmatmul.mubr.bf16.gmra.mrb[0].mxu0 %v1175
        %v1252 = vpop.f32.mrb[0].mxu0
        %v1253 = vadd.f32 0.0, %v1252
        %v1254 = vpop.f32.mrb[0].mxu0
        %v1255 = vpop.f32.mrb[0].mxu0
        %v1256 = vpop.f32.mrb[0].mxu0
        %1257 = vdwg.mxu0
        %v1258 = vpack.c.bf16 %v1253, %v1253
        %v1260 = vsel %vm393, %v1217, 0
        %1262 = vmatprep.subr.bf16.mxu0 0
        %1263 = vmatpush1.bf16.msra.mxu0 %v1260
        %1264 = vmatprep.subr.bf16.mxu0 0
        %1265 = vmatpush1.bf16.msra.mxu0 0
        %1266 = vmatprep.subr.bf16.mxu0 0
        %1267 = vmatpush1.bf16.msra.mxu0 0
        %1268 = vmatprep.subr.bf16.mxu0 0
        %1269 = vmatpush1.bf16.msra.mxu0 0
        %1270 = vmatprep.subr.bf16.mxu0 0
        %1271 = vmatpush1.bf16.msra.mxu0 0
        %1272 = vmatprep.subr.bf16.mxu0 0
        %1273 = vmatpush1.bf16.msra.mxu0 0
        %1274 = vmatprep.subr.bf16.mxu0 0
        %1275 = vmatpush1.bf16.msra.mxu0 0
        %1276 = vmatprep.subr.bf16.mxu0 0
        %1277 = vmatpush1.bf16.msra.mxu0 0
        %1278 = vmatprep.subr.bf16.mxu0 0
        %1279 = vmatpush1.bf16.msra.mxu0 0
        %1280 = vmatprep.subr.bf16.mxu0 0
        %1281 = vmatpush1.bf16.msra.mxu0 0
        %1282 = vmatprep.subr.bf16.mxu0 0
        %1283 = vmatpush1.bf16.msra.mxu0 0
        %1284 = vmatprep.subr.bf16.mxu0 0
        %1285 = vmatpush1.bf16.msra.mxu0 0
        %1286 = vmatprep.subr.bf16.mxu0 0
        %1287 = vmatpush1.bf16.msra.mxu0 0
        %1288 = vmatprep.subr.bf16.mxu0 0
        %1289 = vmatpush1.bf16.msra.mxu0 0
        %1290 = vmatprep.subr.bf16.mxu0 0
        %1291 = vmatpush1.bf16.msra.mxu0 0
        %1292 = vmatprep.subr.bf16.mxu0 0
        %1293 = vmatpush1.bf16.msra.mxu0 0
        %1294 = vmatprep.mubr.bf16.mxu0 0
        %1295 = vmatmul.mubr.bf16.gmra.mrb[0].mxu0 %v391
        %v1296 = vpop.f32.mrb[0].mxu0
        %v1297 = vadd.f32 0.0, %v1296
        %v1298 = vpop.f32.mrb[0].mxu0
        %v1299 = vpop.f32.mrb[0].mxu0
        %v1300 = vpop.f32.mrb[0].mxu0
        %1301 = vdwg.mxu0
        %v1303 = vsel %vm393, %v1258, 0
        %1305 = vmatprep.subr.bf16.mxu0 0
        %1306 = vmatpush1.bf16.msra.mxu0 %v1303
        %1307 = vmatprep.subr.bf16.mxu0 0
        %1308 = vmatpush1.bf16.msra.mxu0 0
        %1309 = vmatprep.subr.bf16.mxu0 0
        %1310 = vmatpush1.bf16.msra.mxu0 0
        %1311 = vmatprep.subr.bf16.mxu0 0
        %1312 = vmatpush1.bf16.msra.mxu0 0
        %1313 = vmatprep.subr.bf16.mxu0 0
        %1314 = vmatpush1.bf16.msra.mxu0 0
        %1315 = vmatprep.subr.bf16.mxu0 0
        %1316 = vmatpush1.bf16.msra.mxu0 0
        %1317 = vmatprep.subr.bf16.mxu0 0
        %1318 = vmatpush1.bf16.msra.mxu0 0
        %1319 = vmatprep.subr.bf16.mxu0 0
        %1320 = vmatpush1.bf16.msra.mxu0 0
        %1321 = vmatprep.subr.bf16.mxu0 0
        %1322 = vmatpush1.bf16.msra.mxu0 0
        %1323 = vmatprep.subr.bf16.mxu0 0
        %1324 = vmatpush1.bf16.msra.mxu0 0
        %1325 = vmatprep.subr.bf16.mxu0 0
        %1326 = vmatpush1.bf16.msra.mxu0 0
        %1327 = vmatprep.subr.bf16.mxu0 0
        %1328 = vmatpush1.bf16.msra.mxu0 0
        %1329 = vmatprep.subr.bf16.mxu0 0
        %1330 = vmatpush1.bf16.msra.mxu0 0
        %1331 = vmatprep.subr.bf16.mxu0 0
        %1332 = vmatpush1.bf16.msra.mxu0 0
        %1333 = vmatprep.subr.bf16.mxu0 0
        %1334 = vmatpush1.bf16.msra.mxu0 0
        %1335 = vmatprep.subr.bf16.mxu0 0
        %1336 = vmatpush1.bf16.msra.mxu0 0
        %1337 = vmatprep.mubr.bf16.mxu0 0
        %1338 = vmatmul.mubr.bf16.gmra.mrb[0].mxu0 %v438
        %v1339 = vpop.f32.mrb[0].mxu0
        %v1340 = vadd.f32 0.0, %v1339
        %v1341 = vpop.f32.mrb[0].mxu0
        %v1342 = vpop.f32.mrb[0].mxu0
        %v1343 = vpop.f32.mrb[0].mxu0
        %1344 = vdwg.mxu0
        %v1347 = vunpack.c.l.s4 1966171168
        %v1348 = vunpack.c.0.s8 %v1347
        %v1349 = vlaneseq
        %v1350 = vshrl.u32 %v1349, 7
        %v1351 = vsub.s32 %v1348, %v1350
        %v1352 = vrot.slane %v1297, %v1351
        %v1353 = vcombine.high %v1352, %v1352
        %v1355 = vunpack.c.l.s4 1966171168
        %v1356 = vunpack.c.0.s8 %v1355
        %v1357 = vlaneseq
        %v1358 = vshrl.u32 %v1357, 7
        %v1359 = vsub.s32 %v1356, %v1358
        %v1360 = vrot.slane %v1352, %v1359
        %v1362 = vunpack.c.l.s4 1966171168
        %v1363 = vunpack.c.0.s8 %v1362
        %v1364 = vlaneseq
        %v1365 = vshrl.u32 %v1364, 7
        %v1366 = vsub.s32 %v1363, %v1365
        %v1367 = vrot.slane %v1353, %v1366
        %v1368 = vcombine.high %v1360, %v1360
        %v1369 = vcombine.high %v1367, %v1367
        %1374 = vst.msk [vmem:[%s217 + $0x3] sm:$0x1] %vm512, %v1360
        %1375 = vst.msk [vmem:[%s217 + $0xb] sm:$0x1] %vm512, %v1367
        %1376 = vst.msk [vmem:[%s217 + $0x13] sm:$0x1] %vm512, %v1368
        %1377 = vst.msk [vmem:[%s217 + $0x1b] sm:$0x1] %vm512, %v1369
        %v1380 = vunpack.c.l.s4 1966171168
        %v1381 = vunpack.c.0.s8 %v1380
        %v1382 = vlaneseq
        %v1383 = vshrl.u32 %v1382, 7
        %v1384 = vsub.s32 %v1381, %v1383
        %v1385 = vrot.slane %v1340, %v1384
        %v1386 = vcombine.high %v1385, %v1385
        %v1388 = vunpack.c.l.s4 1966171168
        %v1389 = vunpack.c.0.s8 %v1388
        %v1390 = vlaneseq
        %v1391 = vshrl.u32 %v1390, 7
        %v1392 = vsub.s32 %v1389, %v1391
        %v1393 = vrot.slane %v1385, %v1392
        %v1395 = vunpack.c.l.s4 1966171168
        %v1396 = vunpack.c.0.s8 %v1395
        %v1397 = vlaneseq
        %v1398 = vshrl.u32 %v1397, 7
        %v1399 = vsub.s32 %v1396, %v1398
        %v1400 = vrot.slane %v1386, %v1399
        %v1401 = vcombine.high %v1393, %v1393
        %v1402 = vcombine.high %v1400, %v1400
        %1407 = vst.msk [vmem:[%s546 + $0x3] sm:$0x1] %vm512, %v1393
        %1408 = vst.msk [vmem:[%s546 + $0xb] sm:$0x1] %vm512, %v1400
        %1409 = vst.msk [vmem:[%s546 + $0x13] sm:$0x1] %vm512, %v1401
        %1410 = vst.msk [vmem:[%s546 + $0x1b] sm:$0x1] %vm512, %v1402
        %v1411 = vld [vmem:[#allocation2] sm:$0xf]
        %v1412 = vadd.f32 %v1411, %v1297
        %1413 = vst.msk [vmem:[#allocation2] sm:$0xf] %vm236, %v1412
        %v1414 = vld [vmem:[%s554] sm:$0xf]
        %v1415 = vadd.f32 %v1414, %v1340
        %1416 = vst.msk [vmem:[%s554] sm:$0xf] %vm236, %v1415
        %v1417 = vld [vmem:[#allocation3] sm:$0xf]
        %v1418 = vmul.f32 %v1297, %v1297
        %v1419 = vadd.f32 %v1417, %v1418
        %1420 = vst.msk [vmem:[#allocation3] sm:$0xf] %vm236, %v1419
        %v1421 = vld [vmem:[%s562] sm:$0xf]
        %v1422 = vmul.f32 %v1340, %v1340
        %v1423 = vadd.f32 %v1421, %v1422
        %1424 = vst.msk [vmem:[%s562] sm:$0xf] %vm236, %v1423
        %v1425 = vld [vmem:[%s222 + $0x4] sm:$0x1]
        %v1426 = vld [vmem:[%s222 + $0xc] sm:$0x1]
        %v1427 = vld [vmem:[%s222 + $0x14] sm:$0x1]
        %v1428 = vld [vmem:[%s222 + $0x1c] sm:$0x1]
        %vm1429 = vcmp.ge.f32.partialorder %v1425, 0.0
        %vm1430 = vcmp.ge.f32.partialorder %v1426, 0.0
        %vm1431 = vcmp.ge.f32.partialorder %v1427, 0.0
        %vm1432 = vcmp.ge.f32.partialorder %v1428, 0.0
        %v1433 = vmul.f32 %v1425, 0.01
        %v1434 = vmul.f32 %v1426, 0.01
        %v1435 = vmul.f32 %v1427, 0.01
        %v1436 = vmul.f32 %v1428, 0.01
        %v1437 = vsel %vm1429, %v1425, %v1433
        %v1438 = vsel %vm1430, %v1426, %v1434
        %v1439 = vsel %vm1431, %v1427, %v1435
        %v1440 = vsel %vm1432, %v1428, %v1436
        %v1441 = vpack.c.bf16 %v1437, %v1437
        %v1442 = vpack.c.bf16 %v1438, %v1438
        %v1443 = vpack.c.bf16 %v1439, %v1439
        %v1444 = vpack.c.bf16 %v1440, %v1440
        %v1449 = vunpack.c.l.b16 %v1441
        %v1450 = vunpack.c.l.b16 %v1442
        %v1451 = vunpack.c.l.b16 %v1443
        %v1452 = vunpack.c.l.b16 %v1444
        %v1453 = vrot.slane %v1450, 7
        %v1454 = vsel %vm270, %v1453, %v1449
        %v1455 = vrot.slane %v1451, 6
        %v1456 = vsel %vm273, %v1455, %v1454
        %v1457 = vrot.slane %v1452, 5
        %v1458 = vsel %vm276, %v1457, %v1456
        %v1459 = vpack.c.b16 %v1458, %v1458
        %v1461 = vsel %vm291, %v1459, 0
        %1463 = vmatprep.subr.bf16.mxu0 0
        %1464 = vmatpush1.bf16.msra.mxu0 %v287
        %1465 = vmatprep.subr.bf16.mxu0 0
        %1466 = vmatpush1.bf16.msra.mxu0 %v288
        %1467 = vmatprep.subr.bf16.mxu0 0
        %1468 = vmatpush1.bf16.msra.mxu0 0
        %1469 = vmatprep.subr.bf16.mxu0 0
        %1470 = vmatpush1.bf16.msra.mxu0 0
        %1471 = vmatprep.subr.bf16.mxu0 0
        %1472 = vmatpush1.bf16.msra.mxu0 0
        %1473 = vmatprep.subr.bf16.mxu0 0
        %1474 = vmatpush1.bf16.msra.mxu0 0
        %1475 = vmatprep.subr.bf16.mxu0 0
        %1476 = vmatpush1.bf16.msra.mxu0 0
        %1477 = vmatprep.subr.bf16.mxu0 0
        %1478 = vmatpush1.bf16.msra.mxu0 0
        %1479 = vmatprep.subr.bf16.mxu0 0
        %1480 = vmatpush1.bf16.msra.mxu0 0
        %1481 = vmatprep.subr.bf16.mxu0 0
        %1482 = vmatpush1.bf16.msra.mxu0 0
        %1483 = vmatprep.subr.bf16.mxu0 0
        %1484 = vmatpush1.bf16.msra.mxu0 0
        %1485 = vmatprep.subr.bf16.mxu0 0
        %1486 = vmatpush1.bf16.msra.mxu0 0
        %1487 = vmatprep.subr.bf16.mxu0 0
        %1488 = vmatpush1.bf16.msra.mxu0 0
        %1489 = vmatprep.subr.bf16.mxu0 0
        %1490 = vmatpush1.bf16.msra.mxu0 0
        %1491 = vmatprep.subr.bf16.mxu0 0
        %1492 = vmatpush1.bf16.msra.mxu0 0
        %1493 = vmatprep.subr.bf16.mxu0 0
        %1494 = vmatpush1.bf16.msra.mxu0 0
        %1495 = vmatprep.mubr.bf16.mxu0 0
        %1496 = vmatmul.mubr.bf16.gmra.mrb[0].mxu0 %v1461
        %v1497 = vpop.f32.mrb[0].mxu0
        %v1498 = vadd.f32 0.0, %v1497
        %v1499 = vpop.f32.mrb[0].mxu0
        %v1500 = vpop.f32.mrb[0].mxu0
        %v1501 = vpop.f32.mrb[0].mxu0
        %1502 = vdwg.mxu0
        %v1503 = vpack.c.bf16 %v1498, %v1498
        %1504 = vmatprep.subr.bf16.mxu0 0
        %1505 = vmatpush1.bf16.msra.mxu0 %v344
        %1506 = vmatprep.subr.bf16.mxu0 0
        %1507 = vmatpush1.bf16.msra.mxu0 %v345
        %1508 = vmatprep.subr.bf16.mxu0 0
        %1509 = vmatpush1.bf16.msra.mxu0 0
        %1510 = vmatprep.subr.bf16.mxu0 0
        %1511 = vmatpush1.bf16.msra.mxu0 0
        %1512 = vmatprep.subr.bf16.mxu0 0
        %1513 = vmatpush1.bf16.msra.mxu0 0
        %1514 = vmatprep.subr.bf16.mxu0 0
        %1515 = vmatpush1.bf16.msra.mxu0 0
        %1516 = vmatprep.subr.bf16.mxu0 0
        %1517 = vmatpush1.bf16.msra.mxu0 0
        %1518 = vmatprep.subr.bf16.mxu0 0
        %1519 = vmatpush1.bf16.msra.mxu0 0
        %1520 = vmatprep.subr.bf16.mxu0 0
        %1521 = vmatpush1.bf16.msra.mxu0 0
        %1522 = vmatprep.subr.bf16.mxu0 0
        %1523 = vmatpush1.bf16.msra.mxu0 0
        %1524 = vmatprep.subr.bf16.mxu0 0
        %1525 = vmatpush1.bf16.msra.mxu0 0
        %1526 = vmatprep.subr.bf16.mxu0 0
        %1527 = vmatpush1.bf16.msra.mxu0 0
        %1528 = vmatprep.subr.bf16.mxu0 0
        %1529 = vmatpush1.bf16.msra.mxu0 0
        %1530 = vmatprep.subr.bf16.mxu0 0
        %1531 = vmatpush1.bf16.msra.mxu0 0
        %1532 = vmatprep.subr.bf16.mxu0 0
        %1533 = vmatpush1.bf16.msra.mxu0 0
        %1534 = vmatprep.subr.bf16.mxu0 0
        %1535 = vmatpush1.bf16.msra.mxu0 0
        %1536 = vmatprep.mubr.bf16.mxu0 0
        %1537 = vmatmul.mubr.bf16.gmra.mrb[0].mxu0 %v1461
        %v1538 = vpop.f32.mrb[0].mxu0
        %v1539 = vadd.f32 0.0, %v1538
        %v1540 = vpop.f32.mrb[0].mxu0
        %v1541 = vpop.f32.mrb[0].mxu0
        %v1542 = vpop.f32.mrb[0].mxu0
        %1543 = vdwg.mxu0
        %v1544 = vpack.c.bf16 %v1539, %v1539
        %v1546 = vsel %vm393, %v1503, 0
        %1548 = vmatprep.subr.bf16.mxu0 0
        %1549 = vmatpush1.bf16.msra.mxu0 %v1546
        %1550 = vmatprep.subr.bf16.mxu0 0
        %1551 = vmatpush1.bf16.msra.mxu0 0
        %1552 = vmatprep.subr.bf16.mxu0 0
        %1553 = vmatpush1.bf16.msra.mxu0 0
        %1554 = vmatprep.subr.bf16.mxu0 0
        %1555 = vmatpush1.bf16.msra.mxu0 0
        %1556 = vmatprep.subr.bf16.mxu0 0
        %1557 = vmatpush1.bf16.msra.mxu0 0
        %1558 = vmatprep.subr.bf16.mxu0 0
        %1559 = vmatpush1.bf16.msra.mxu0 0
        %1560 = vmatprep.subr.bf16.mxu0 0
        %1561 = vmatpush1.bf16.msra.mxu0 0
        %1562 = vmatprep.subr.bf16.mxu0 0
        %1563 = vmatpush1.bf16.msra.mxu0 0
        %1564 = vmatprep.subr.bf16.mxu0 0
        %1565 = vmatpush1.bf16.msra.mxu0 0
        %1566 = vmatprep.subr.bf16.mxu0 0
        %1567 = vmatpush1.bf16.msra.mxu0 0
        %1568 = vmatprep.subr.bf16.mxu0 0
        %1569 = vmatpush1.bf16.msra.mxu0 0
        %1570 = vmatprep.subr.bf16.mxu0 0
        %1571 = vmatpush1.bf16.msra.mxu0 0
        %1572 = vmatprep.subr.bf16.mxu0 0
        %1573 = vmatpush1.bf16.msra.mxu0 0
        %1574 = vmatprep.subr.bf16.mxu0 0
        %1575 = vmatpush1.bf16.msra.mxu0 0
        %1576 = vmatprep.subr.bf16.mxu0 0
        %1577 = vmatpush1.bf16.msra.mxu0 0
        %1578 = vmatprep.subr.bf16.mxu0 0
        %1579 = vmatpush1.bf16.msra.mxu0 0
        %1580 = vmatprep.mubr.bf16.mxu0 0
        %1581 = vmatmul.mubr.bf16.gmra.mrb[0].mxu0 %v391
        %v1582 = vpop.f32.mrb[0].mxu0
        %v1583 = vadd.f32 0.0, %v1582
        %v1584 = vpop.f32.mrb[0].mxu0
        %v1585 = vpop.f32.mrb[0].mxu0
        %v1586 = vpop.f32.mrb[0].mxu0
        %1587 = vdwg.mxu0
        %v1589 = vsel %vm393, %v1544, 0
        %1591 = vmatprep.subr.bf16.mxu0 0
        %1592 = vmatpush1.bf16.msra.mxu0 %v1589
        %1593 = vmatprep.subr.bf16.mxu0 0
        %1594 = vmatpush1.bf16.msra.mxu0 0
        %1595 = vmatprep.subr.bf16.mxu0 0
        %1596 = vmatpush1.bf16.msra.mxu0 0
        %1597 = vmatprep.subr.bf16.mxu0 0
        %1598 = vmatpush1.bf16.msra.mxu0 0
        %1599 = vmatprep.subr.bf16.mxu0 0
        %1600 = vmatpush1.bf16.msra.mxu0 0
        %1601 = vmatprep.subr.bf16.mxu0 0
        %1602 = vmatpush1.bf16.msra.mxu0 0
        %1603 = vmatprep.subr.bf16.mxu0 0
        %1604 = vmatpush1.bf16.msra.mxu0 0
        %1605 = vmatprep.subr.bf16.mxu0 0
        %1606 = vmatpush1.bf16.msra.mxu0 0
        %1607 = vmatprep.subr.bf16.mxu0 0
        %1608 = vmatpush1.bf16.msra.mxu0 0
        %1609 = vmatprep.subr.bf16.mxu0 0
        %1610 = vmatpush1.bf16.msra.mxu0 0
        %1611 = vmatprep.subr.bf16.mxu0 0
        %1612 = vmatpush1.bf16.msra.mxu0 0
        %1613 = vmatprep.subr.bf16.mxu0 0
        %1614 = vmatpush1.bf16.msra.mxu0 0
        %1615 = vmatprep.subr.bf16.mxu0 0
        %1616 = vmatpush1.bf16.msra.mxu0 0
        %1617 = vmatprep.subr.bf16.mxu0 0
        %1618 = vmatpush1.bf16.msra.mxu0 0
        %1619 = vmatprep.subr.bf16.mxu0 0
        %1620 = vmatpush1.bf16.msra.mxu0 0
        %1621 = vmatprep.subr.bf16.mxu0 0
        %1622 = vmatpush1.bf16.msra.mxu0 0
        %1623 = vmatprep.mubr.bf16.mxu0 0
        %1624 = vmatmul.mubr.bf16.gmra.mrb[0].mxu0 %v438
        %v1625 = vpop.f32.mrb[0].mxu0
        %v1626 = vadd.f32 0.0, %v1625
        %v1627 = vpop.f32.mrb[0].mxu0
        %v1628 = vpop.f32.mrb[0].mxu0
        %v1629 = vpop.f32.mrb[0].mxu0
        %1630 = vdwg.mxu0
        %v1633 = vunpack.c.l.s4 1966171168
        %v1634 = vunpack.c.0.s8 %v1633
        %v1635 = vlaneseq
        %v1636 = vshrl.u32 %v1635, 7
        %v1637 = vsub.s32 %v1634, %v1636
        %v1638 = vrot.slane %v1583, %v1637
        %v1639 = vcombine.high %v1638, %v1638
        %v1641 = vunpack.c.l.s4 1966171168
        %v1642 = vunpack.c.0.s8 %v1641
        %v1643 = vlaneseq
        %v1644 = vshrl.u32 %v1643, 7
        %v1645 = vsub.s32 %v1642, %v1644
        %v1646 = vrot.slane %v1638, %v1645
        %v1648 = vunpack.c.l.s4 1966171168
        %v1649 = vunpack.c.0.s8 %v1648
        %v1650 = vlaneseq
        %v1651 = vshrl.u32 %v1650, 7
        %v1652 = vsub.s32 %v1649, %v1651
        %v1653 = vrot.slane %v1639, %v1652
        %v1654 = vcombine.high %v1646, %v1646
        %v1655 = vcombine.high %v1653, %v1653
        %1660 = vst.msk [vmem:[%s217 + $0x4] sm:$0x1] %vm512, %v1646
        %1661 = vst.msk [vmem:[%s217 + $0xc] sm:$0x1] %vm512, %v1653
        %1662 = vst.msk [vmem:[%s217 + $0x14] sm:$0x1] %vm512, %v1654
        %1663 = vst.msk [vmem:[%s217 + $0x1c] sm:$0x1] %vm512, %v1655
        %v1666 = vunpack.c.l.s4 1966171168
        %v1667 = vunpack.c.0.s8 %v1666
        %v1668 = vlaneseq
        %v1669 = vshrl.u32 %v1668, 7
        %v1670 = vsub.s32 %v1667, %v1669
        %v1671 = vrot.slane %v1626, %v1670
        %v1672 = vcombine.high %v1671, %v1671
        %v1674 = vunpack.c.l.s4 1966171168
        %v1675 = vunpack.c.0.s8 %v1674
        %v1676 = vlaneseq
        %v1677 = vshrl.u32 %v1676, 7
        %v1678 = vsub.s32 %v1675, %v1677
        %v1679 = vrot.slane %v1671, %v1678
        %v1681 = vunpack.c.l.s4 1966171168
        %v1682 = vunpack.c.0.s8 %v1681
        %v1683 = vlaneseq
        %v1684 = vshrl.u32 %v1683, 7
        %v1685 = vsub.s32 %v1682, %v1684
        %v1686 = vrot.slane %v1672, %v1685
        %v1687 = vcombine.high %v1679, %v1679
        %v1688 = vcombine.high %v1686, %v1686
        %1693 = vst.msk [vmem:[%s546 + $0x4] sm:$0x1] %vm512, %v1679
        %1694 = vst.msk [vmem:[%s546 + $0xc] sm:$0x1] %vm512, %v1686
        %1695 = vst.msk [vmem:[%s546 + $0x14] sm:$0x1] %vm512, %v1687
        %1696 = vst.msk [vmem:[%s546 + $0x1c] sm:$0x1] %vm512, %v1688
        %v1697 = vld [vmem:[#allocation2] sm:$0xf]
        %v1698 = vadd.f32 %v1697, %v1583
        %1699 = vst.msk [vmem:[#allocation2] sm:$0xf] %vm236, %v1698
        %v1700 = vld [vmem:[%s554] sm:$0xf]
        %v1701 = vadd.f32 %v1700, %v1626
        %1702 = vst.msk [vmem:[%s554] sm:$0xf] %vm236, %v1701
        %v1703 = vld [vmem:[#allocation3] sm:$0xf]
        %v1704 = vmul.f32 %v1583, %v1583
        %v1705 = vadd.f32 %v1703, %v1704
        %1706 = vst.msk [vmem:[#allocation3] sm:$0xf] %vm236, %v1705
        %v1707 = vld [vmem:[%s562] sm:$0xf]
        %v1708 = vmul.f32 %v1626, %v1626
        %v1709 = vadd.f32 %v1707, %v1708
        %1710 = vst.msk [vmem:[%s562] sm:$0xf] %vm236, %v1709
        %v1711 = vld [vmem:[%s222 + $0x5] sm:$0x1]
        %v1712 = vld [vmem:[%s222 + $0xd] sm:$0x1]
        %v1713 = vld [vmem:[%s222 + $0x15] sm:$0x1]
        %v1714 = vld [vmem:[%s222 + $0x1d] sm:$0x1]
        %vm1715 = vcmp.ge.f32.partialorder %v1711, 0.0
        %vm1716 = vcmp.ge.f32.partialorder %v1712, 0.0
        %vm1717 = vcmp.ge.f32.partialorder %v1713, 0.0
        %vm1718 = vcmp.ge.f32.partialorder %v1714, 0.0
        %v1719 = vmul.f32 %v1711, 0.01
        %v1720 = vmul.f32 %v1712, 0.01
        %v1721 = vmul.f32 %v1713, 0.01
        %v1722 = vmul.f32 %v1714, 0.01
        %v1723 = vsel %vm1715, %v1711, %v1719
        %v1724 = vsel %vm1716, %v1712, %v1720
        %v1725 = vsel %vm1717, %v1713, %v1721
        %v1726 = vsel %vm1718, %v1714, %v1722
        %v1727 = vpack.c.bf16 %v1723, %v1723
        %v1728 = vpack.c.bf16 %v1724, %v1724
        %v1729 = vpack.c.bf16 %v1725, %v1725
        %v1730 = vpack.c.bf16 %v1726, %v1726
        %v1735 = vunpack.c.l.b16 %v1727
        %v1736 = vunpack.c.l.b16 %v1728
        %v1737 = vunpack.c.l.b16 %v1729
        %v1738 = vunpack.c.l.b16 %v1730
        %v1739 = vrot.slane %v1736, 7
        %v1740 = vsel %vm270, %v1739, %v1735
        %v1741 = vrot.slane %v1737, 6
        %v1742 = vsel %vm273, %v1741, %v1740
        %v1743 = vrot.slane %v1738, 5
        %v1744 = vsel %vm276, %v1743, %v1742
        %v1745 = vpack.c.b16 %v1744, %v1744
        %v1747 = vsel %vm291, %v1745, 0
        %1749 = vmatprep.subr.bf16.mxu0 0
        %1750 = vmatpush1.bf16.msra.mxu0 %v287
        %1751 = vmatprep.subr.bf16.mxu0 0
        %1752 = vmatpush1.bf16.msra.mxu0 %v288
        %1753 = vmatprep.subr.bf16.mxu0 0
        %1754 = vmatpush1.bf16.msra.mxu0 0
        %1755 = vmatprep.subr.bf16.mxu0 0
        %1756 = vmatpush1.bf16.msra.mxu0 0
        %1757 = vmatprep.subr.bf16.mxu0 0
        %1758 = vmatpush1.bf16.msra.mxu0 0
        %1759 = vmatprep.subr.bf16.mxu0 0
        %1760 = vmatpush1.bf16.msra.mxu0 0
        %1761 = vmatprep.subr.bf16.mxu0 0
        %1762 = vmatpush1.bf16.msra.mxu0 0
        %1763 = vmatprep.subr.bf16.mxu0 0
        %1764 = vmatpush1.bf16.msra.mxu0 0
        %1765 = vmatprep.subr.bf16.mxu0 0
        %1766 = vmatpush1.bf16.msra.mxu0 0
        %1767 = vmatprep.subr.bf16.mxu0 0
        %1768 = vmatpush1.bf16.msra.mxu0 0
        %1769 = vmatprep.subr.bf16.mxu0 0
        %1770 = vmatpush1.bf16.msra.mxu0 0
        %1771 = vmatprep.subr.bf16.mxu0 0
        %1772 = vmatpush1.bf16.msra.mxu0 0
        %1773 = vmatprep.subr.bf16.mxu0 0
        %1774 = vmatpush1.bf16.msra.mxu0 0
        %1775 = vmatprep.subr.bf16.mxu0 0
        %1776 = vmatpush1.bf16.msra.mxu0 0
        %1777 = vmatprep.subr.bf16.mxu0 0
        %1778 = vmatpush1.bf16.msra.mxu0 0
        %1779 = vmatprep.subr.bf16.mxu0 0
        %1780 = vmatpush1.bf16.msra.mxu0 0
        %1781 = vmatprep.mubr.bf16.mxu0 0
        %1782 = vmatmul.mubr.bf16.gmra.mrb[0].mxu0 %v1747
        %v1783 = vpop.f32.mrb[0].mxu0
        %v1784 = vadd.f32 0.0, %v1783
        %v1785 = vpop.f32.mrb[0].mxu0
        %v1786 = vpop.f32.mrb[0].mxu0
        %v1787 = vpop.f32.mrb[0].mxu0
        %1788 = vdwg.mxu0
        %v1789 = vpack.c.bf16 %v1784, %v1784
        %1790 = vmatprep.subr.bf16.mxu0 0
        %1791 = vmatpush1.bf16.msra.mxu0 %v344
        %1792 = vmatprep.subr.bf16.mxu0 0
        %1793 = vmatpush1.bf16.msra.mxu0 %v345
        %1794 = vmatprep.subr.bf16.mxu0 0
        %1795 = vmatpush1.bf16.msra.mxu0 0
        %1796 = vmatprep.subr.bf16.mxu0 0
        %1797 = vmatpush1.bf16.msra.mxu0 0
        %1798 = vmatprep.subr.bf16.mxu0 0
        %1799 = vmatpush1.bf16.msra.mxu0 0
        %1800 = vmatprep.subr.bf16.mxu0 0
        %1801 = vmatpush1.bf16.msra.mxu0 0
        %1802 = vmatprep.subr.bf16.mxu0 0
        %1803 = vmatpush1.bf16.msra.mxu0 0
        %1804 = vmatprep.subr.bf16.mxu0 0
        %1805 = vmatpush1.bf16.msra.mxu0 0
        %1806 = vmatprep.subr.bf16.mxu0 0
        %1807 = vmatpush1.bf16.msra.mxu0 0
        %1808 = vmatprep.subr.bf16.mxu0 0
        %1809 = vmatpush1.bf16.msra.mxu0 0
        %1810 = vmatprep.subr.bf16.mxu0 0
        %1811 = vmatpush1.bf16.msra.mxu0 0
        %1812 = vmatprep.subr.bf16.mxu0 0
        %1813 = vmatpush1.bf16.msra.mxu0 0
        %1814 = vmatprep.subr.bf16.mxu0 0
        %1815 = vmatpush1.bf16.msra.mxu0 0
        %1816 = vmatprep.subr.bf16.mxu0 0
        %1817 = vmatpush1.bf16.msra.mxu0 0
        %1818 = vmatprep.subr.bf16.mxu0 0
        %1819 = vmatpush1.bf16.msra.mxu0 0
        %1820 = vmatprep.subr.bf16.mxu0 0
        %1821 = vmatpush1.bf16.msra.mxu0 0
        %1822 = vmatprep.mubr.bf16.mxu0 0
        %1823 = vmatmul.mubr.bf16.gmra.mrb[0].mxu0 %v1747
        %v1824 = vpop.f32.mrb[0].mxu0
        %v1825 = vadd.f32 0.0, %v1824
        %v1826 = vpop.f32.mrb[0].mxu0
        %v1827 = vpop.f32.mrb[0].mxu0
        %v1828 = vpop.f32.mrb[0].mxu0
        %1829 = vdwg.mxu0
        %v1830 = vpack.c.bf16 %v1825, %v1825
        %v1832 = vsel %vm393, %v1789, 0
        %1834 = vmatprep.subr.bf16.mxu0 0
        %1835 = vmatpush1.bf16.msra.mxu0 %v1832
        %1836 = vmatprep.subr.bf16.mxu0 0
        %1837 = vmatpush1.bf16.msra.mxu0 0
        %1838 = vmatprep.subr.bf16.mxu0 0
        %1839 = vmatpush1.bf16.msra.mxu0 0
        %1840 = vmatprep.subr.bf16.mxu0 0
        %1841 = vmatpush1.bf16.msra.mxu0 0
        %1842 = vmatprep.subr.bf16.mxu0 0
        %1843 = vmatpush1.bf16.msra.mxu0 0
        %1844 = vmatprep.subr.bf16.mxu0 0
        %1845 = vmatpush1.bf16.msra.mxu0 0
        %1846 = vmatprep.subr.bf16.mxu0 0
        %1847 = vmatpush1.bf16.msra.mxu0 0
        %1848 = vmatprep.subr.bf16.mxu0 0
        %1849 = vmatpush1.bf16.msra.mxu0 0
        %1850 = vmatprep.subr.bf16.mxu0 0
        %1851 = vmatpush1.bf16.msra.mxu0 0
        %1852 = vmatprep.subr.bf16.mxu0 0
        %1853 = vmatpush1.bf16.msra.mxu0 0
        %1854 = vmatprep.subr.bf16.mxu0 0
        %1855 = vmatpush1.bf16.msra.mxu0 0
        %1856 = vmatprep.subr.bf16.mxu0 0
        %1857 = vmatpush1.bf16.msra.mxu0 0
        %1858 = vmatprep.subr.bf16.mxu0 0
        %1859 = vmatpush1.bf16.msra.mxu0 0
        %1860 = vmatprep.subr.bf16.mxu0 0
        %1861 = vmatpush1.bf16.msra.mxu0 0
        %1862 = vmatprep.subr.bf16.mxu0 0
        %1863 = vmatpush1.bf16.msra.mxu0 0
        %1864 = vmatprep.subr.bf16.mxu0 0
        %1865 = vmatpush1.bf16.msra.mxu0 0
        %1866 = vmatprep.mubr.bf16.mxu0 0
        %1867 = vmatmul.mubr.bf16.gmra.mrb[0].mxu0 %v391
        %v1868 = vpop.f32.mrb[0].mxu0
        %v1869 = vadd.f32 0.0, %v1868
        %v1870 = vpop.f32.mrb[0].mxu0
        %v1871 = vpop.f32.mrb[0].mxu0
        %v1872 = vpop.f32.mrb[0].mxu0
        %1873 = vdwg.mxu0
        %v1875 = vsel %vm393, %v1830, 0
        %1877 = vmatprep.subr.bf16.mxu0 0
        %1878 = vmatpush1.bf16.msra.mxu0 %v1875
        %1879 = vmatprep.subr.bf16.mxu0 0
        %1880 = vmatpush1.bf16.msra.mxu0 0
        %1881 = vmatprep.subr.bf16.mxu0 0
        %1882 = vmatpush1.bf16.msra.mxu0 0
        %1883 = vmatprep.subr.bf16.mxu0 0
        %1884 = vmatpush1.bf16.msra.mxu0 0
        %1885 = vmatprep.subr.bf16.mxu0 0
        %1886 = vmatpush1.bf16.msra.mxu0 0
        %1887 = vmatprep.subr.bf16.mxu0 0
        %1888 = vmatpush1.bf16.msra.mxu0 0
        %1889 = vmatprep.subr.bf16.mxu0 0
        %1890 = vmatpush1.bf16.msra.mxu0 0
        %1891 = vmatprep.subr.bf16.mxu0 0
        %1892 = vmatpush1.bf16.msra.mxu0 0
        %1893 = vmatprep.subr.bf16.mxu0 0
        %1894 = vmatpush1.bf16.msra.mxu0 0
        %1895 = vmatprep.subr.bf16.mxu0 0
        %1896 = vmatpush1.bf16.msra.mxu0 0
        %1897 = vmatprep.subr.bf16.mxu0 0
        %1898 = vmatpush1.bf16.msra.mxu0 0
        %1899 = vmatprep.subr.bf16.mxu0 0
        %1900 = vmatpush1.bf16.msra.mxu0 0
        %1901 = vmatprep.subr.bf16.mxu0 0
        %1902 = vmatpush1.bf16.msra.mxu0 0
        %1903 = vmatprep.subr.bf16.mxu0 0
        %1904 = vmatpush1.bf16.msra.mxu0 0
        %1905 = vmatprep.subr.bf16.mxu0 0
        %1906 = vmatpush1.bf16.msra.mxu0 0
        %1907 = vmatprep.subr.bf16.mxu0 0
        %1908 = vmatpush1.bf16.msra.mxu0 0
        %1909 = vmatprep.mubr.bf16.mxu0 0
        %1910 = vmatmul.mubr.bf16.gmra.mrb[0].mxu0 %v438
        %v1911 = vpop.f32.mrb[0].mxu0
        %v1912 = vadd.f32 0.0, %v1911
        %v1913 = vpop.f32.mrb[0].mxu0
        %v1914 = vpop.f32.mrb[0].mxu0
        %v1915 = vpop.f32.mrb[0].mxu0
        %1916 = vdwg.mxu0
        %v1919 = vunpack.c.l.s4 1966171168
        %v1920 = vunpack.c.0.s8 %v1919
        %v1921 = vlaneseq
        %v1922 = vshrl.u32 %v1921, 7
        %v1923 = vsub.s32 %v1920, %v1922
        %v1924 = vrot.slane %v1869, %v1923
        %v1925 = vcombine.high %v1924, %v1924
        %v1927 = vunpack.c.l.s4 1966171168
        %v1928 = vunpack.c.0.s8 %v1927
        %v1929 = vlaneseq
        %v1930 = vshrl.u32 %v1929, 7
        %v1931 = vsub.s32 %v1928, %v1930
        %v1932 = vrot.slane %v1924, %v1931
        %v1934 = vunpack.c.l.s4 1966171168
        %v1935 = vunpack.c.0.s8 %v1934
        %v1936 = vlaneseq
        %v1937 = vshrl.u32 %v1936, 7
        %v1938 = vsub.s32 %v1935, %v1937
        %v1939 = vrot.slane %v1925, %v1938
        %v1940 = vcombine.high %v1932, %v1932
        %v1941 = vcombine.high %v1939, %v1939
        %1946 = vst.msk [vmem:[%s217 + $0x5] sm:$0x1] %vm512, %v1932
        %1947 = vst.msk [vmem:[%s217 + $0xd] sm:$0x1] %vm512, %v1939
        %1948 = vst.msk [vmem:[%s217 + $0x15] sm:$0x1] %vm512, %v1940
        %1949 = vst.msk [vmem:[%s217 + $0x1d] sm:$0x1] %vm512, %v1941
        %v1952 = vunpack.c.l.s4 1966171168
        %v1953 = vunpack.c.0.s8 %v1952
        %v1954 = vlaneseq
        %v1955 = vshrl.u32 %v1954, 7
        %v1956 = vsub.s32 %v1953, %v1955
        %v1957 = vrot.slane %v1912, %v1956
        %v1958 = vcombine.high %v1957, %v1957
        %v1960 = vunpack.c.l.s4 1966171168
        %v1961 = vunpack.c.0.s8 %v1960
        %v1962 = vlaneseq
        %v1963 = vshrl.u32 %v1962, 7
        %v1964 = vsub.s32 %v1961, %v1963
        %v1965 = vrot.slane %v1957, %v1964
        %v1967 = vunpack.c.l.s4 1966171168
        %v1968 = vunpack.c.0.s8 %v1967
        %v1969 = vlaneseq
        %v1970 = vshrl.u32 %v1969, 7
        %v1971 = vsub.s32 %v1968, %v1970
        %v1972 = vrot.slane %v1958, %v1971
        %v1973 = vcombine.high %v1965, %v1965
        %v1974 = vcombine.high %v1972, %v1972
        %1979 = vst.msk [vmem:[%s546 + $0x5] sm:$0x1] %vm512, %v1965
        %1980 = vst.msk [vmem:[%s546 + $0xd] sm:$0x1] %vm512, %v1972
        %1981 = vst.msk [vmem:[%s546 + $0x15] sm:$0x1] %vm512, %v1973
        %1982 = vst.msk [vmem:[%s546 + $0x1d] sm:$0x1] %vm512, %v1974
        %v1983 = vld [vmem:[#allocation2] sm:$0xf]
        %v1984 = vadd.f32 %v1983, %v1869
        %1985 = vst.msk [vmem:[#allocation2] sm:$0xf] %vm236, %v1984
        %v1986 = vld [vmem:[%s554] sm:$0xf]
        %v1987 = vadd.f32 %v1986, %v1912
        %1988 = vst.msk [vmem:[%s554] sm:$0xf] %vm236, %v1987
        %v1989 = vld [vmem:[#allocation3] sm:$0xf]
        %v1990 = vmul.f32 %v1869, %v1869
        %v1991 = vadd.f32 %v1989, %v1990
        %1992 = vst.msk [vmem:[#allocation3] sm:$0xf] %vm236, %v1991
        %v1993 = vld [vmem:[%s562] sm:$0xf]
        %v1994 = vmul.f32 %v1912, %v1912
        %v1995 = vadd.f32 %v1993, %v1994
        %1996 = vst.msk [vmem:[%s562] sm:$0xf] %vm236, %v1995
        %v1997 = vld [vmem:[%s222 + $0x6] sm:$0x1]
        %v1998 = vld [vmem:[%s222 + $0xe] sm:$0x1]
        %v1999 = vld [vmem:[%s222 + $0x16] sm:$0x1]
        %v2000 = vld [vmem:[%s222 + $0x1e] sm:$0x1]
        %vm2001 = vcmp.ge.f32.partialorder %v1997, 0.0
        %vm2002 = vcmp.ge.f32.partialorder %v1998, 0.0
        %vm2003 = vcmp.ge.f32.partialorder %v1999, 0.0
        %vm2004 = vcmp.ge.f32.partialorder %v2000, 0.0
        %v2005 = vmul.f32 %v1997, 0.01
        %v2006 = vmul.f32 %v1998, 0.01
        %v2007 = vmul.f32 %v1999, 0.01
        %v2008 = vmul.f32 %v2000, 0.01
        %v2009 = vsel %vm2001, %v1997, %v2005
        %v2010 = vsel %vm2002, %v1998, %v2006
        %v2011 = vsel %vm2003, %v1999, %v2007
        %v2012 = vsel %vm2004, %v2000, %v2008
        %v2013 = vpack.c.bf16 %v2009, %v2009
        %v2014 = vpack.c.bf16 %v2010, %v2010
        %v2015 = vpack.c.bf16 %v2011, %v2011
        %v2016 = vpack.c.bf16 %v2012, %v2012
        %v2021 = vunpack.c.l.b16 %v2013
        %v2022 = vunpack.c.l.b16 %v2014
        %v2023 = vunpack.c.l.b16 %v2015
        %v2024 = vunpack.c.l.b16 %v2016
        %v2025 = vrot.slane %v2022, 7
        %v2026 = vsel %vm270, %v2025, %v2021
        %v2027 = vrot.slane %v2023, 6
        %v2028 = vsel %vm273, %v2027, %v2026
        %v2029 = vrot.slane %v2024, 5
        %v2030 = vsel %vm276, %v2029, %v2028
        %v2031 = vpack.c.b16 %v2030, %v2030
        %v2033 = vsel %vm291, %v2031, 0
        %2035 = vmatprep.subr.bf16.mxu0 0
        %2036 = vmatpush1.bf16.msra.mxu0 %v287
        %2037 = vmatprep.subr.bf16.mxu0 0
        %2038 = vmatpush1.bf16.msra.mxu0 %v288
        %2039 = vmatprep.subr.bf16.mxu0 0
        %2040 = vmatpush1.bf16.msra.mxu0 0
        %2041 = vmatprep.subr.bf16.mxu0 0
        %2042 = vmatpush1.bf16.msra.mxu0 0
        %2043 = vmatprep.subr.bf16.mxu0 0
        %2044 = vmatpush1.bf16.msra.mxu0 0
        %2045 = vmatprep.subr.bf16.mxu0 0
        %2046 = vmatpush1.bf16.msra.mxu0 0
        %2047 = vmatprep.subr.bf16.mxu0 0
        %2048 = vmatpush1.bf16.msra.mxu0 0
        %2049 = vmatprep.subr.bf16.mxu0 0
        %2050 = vmatpush1.bf16.msra.mxu0 0
        %2051 = vmatprep.subr.bf16.mxu0 0
        %2052 = vmatpush1.bf16.msra.mxu0 0
        %2053 = vmatprep.subr.bf16.mxu0 0
        %2054 = vmatpush1.bf16.msra.mxu0 0
        %2055 = vmatprep.subr.bf16.mxu0 0
        %2056 = vmatpush1.bf16.msra.mxu0 0
        %2057 = vmatprep.subr.bf16.mxu0 0
        %2058 = vmatpush1.bf16.msra.mxu0 0
        %2059 = vmatprep.subr.bf16.mxu0 0
        %2060 = vmatpush1.bf16.msra.mxu0 0
        %2061 = vmatprep.subr.bf16.mxu0 0
        %2062 = vmatpush1.bf16.msra.mxu0 0
        %2063 = vmatprep.subr.bf16.mxu0 0
        %2064 = vmatpush1.bf16.msra.mxu0 0
        %2065 = vmatprep.subr.bf16.mxu0 0
        %2066 = vmatpush1.bf16.msra.mxu0 0
        %2067 = vmatprep.mubr.bf16.mxu0 0
        %2068 = vmatmul.mubr.bf16.gmra.mrb[0].mxu0 %v2033
        %v2069 = vpop.f32.mrb[0].mxu0
        %v2070 = vadd.f32 0.0, %v2069
        %v2071 = vpop.f32.mrb[0].mxu0
        %v2072 = vpop.f32.mrb[0].mxu0
        %v2073 = vpop.f32.mrb[0].mxu0
        %2074 = vdwg.mxu0
        %v2075 = vpack.c.bf16 %v2070, %v2070
        %2076 = vmatprep.subr.bf16.mxu0 0
        %2077 = vmatpush1.bf16.msra.mxu0 %v344
        %2078 = vmatprep.subr.bf16.mxu0 0
        %2079 = vmatpush1.bf16.msra.mxu0 %v345
        %2080 = vmatprep.subr.bf16.mxu0 0
        %2081 = vmatpush1.bf16.msra.mxu0 0
        %2082 = vmatprep.subr.bf16.mxu0 0
        %2083 = vmatpush1.bf16.msra.mxu0 0
        %2084 = vmatprep.subr.bf16.mxu0 0
        %2085 = vmatpush1.bf16.msra.mxu0 0
        %2086 = vmatprep.subr.bf16.mxu0 0
        %2087 = vmatpush1.bf16.msra.mxu0 0
        %2088 = vmatprep.subr.bf16.mxu0 0
        %2089 = vmatpush1.bf16.msra.mxu0 0
        %2090 = vmatprep.subr.bf16.mxu0 0
        %2091 = vmatpush1.bf16.msra.mxu0 0
        %2092 = vmatprep.subr.bf16.mxu0 0
        %2093 = vmatpush1.bf16.msra.mxu0 0
        %2094 = vmatprep.subr.bf16.mxu0 0
        %2095 = vmatpush1.bf16.msra.mxu0 0
        %2096 = vmatprep.subr.bf16.mxu0 0
        %2097 = vmatpush1.bf16.msra.mxu0 0
        %2098 = vmatprep.subr.bf16.mxu0 0
        %2099 = vmatpush1.bf16.msra.mxu0 0
        %2100 = vmatprep.subr.bf16.mxu0 0
        %2101 = vmatpush1.bf16.msra.mxu0 0
        %2102 = vmatprep.subr.bf16.mxu0 0
        %2103 = vmatpush1.bf16.msra.mxu0 0
        %2104 = vmatprep.subr.bf16.mxu0 0
        %2105 = vmatpush1.bf16.msra.mxu0 0
        %2106 = vmatprep.subr.bf16.mxu0 0
        %2107 = vmatpush1.bf16.msra.mxu0 0
        %2108 = vmatprep.mubr.bf16.mxu0 0
        %2109 = vmatmul.mubr.bf16.gmra.mrb[0].mxu0 %v2033
        %v2110 = vpop.f32.mrb[0].mxu0
        %v2111 = vadd.f32 0.0, %v2110
        %v2112 = vpop.f32.mrb[0].mxu0
        %v2113 = vpop.f32.mrb[0].mxu0
        %v2114 = vpop.f32.mrb[0].mxu0
        %2115 = vdwg.mxu0
        %v2116 = vpack.c.bf16 %v2111, %v2111
        %v2118 = vsel %vm393, %v2075, 0
        %2120 = vmatprep.subr.bf16.mxu0 0
        %2121 = vmatpush1.bf16.msra.mxu0 %v2118
        %2122 = vmatprep.subr.bf16.mxu0 0
        %2123 = vmatpush1.bf16.msra.mxu0 0
        %2124 = vmatprep.subr.bf16.mxu0 0
        %2125 = vmatpush1.bf16.msra.mxu0 0
        %2126 = vmatprep.subr.bf16.mxu0 0
        %2127 = vmatpush1.bf16.msra.mxu0 0
        %2128 = vmatprep.subr.bf16.mxu0 0
        %2129 = vmatpush1.bf16.msra.mxu0 0
        %2130 = vmatprep.subr.bf16.mxu0 0
        %2131 = vmatpush1.bf16.msra.mxu0 0
        %2132 = vmatprep.subr.bf16.mxu0 0
        %2133 = vmatpush1.bf16.msra.mxu0 0
        %2134 = vmatprep.subr.bf16.mxu0 0
        %2135 = vmatpush1.bf16.msra.mxu0 0
        %2136 = vmatprep.subr.bf16.mxu0 0
        %2137 = vmatpush1.bf16.msra.mxu0 0
        %2138 = vmatprep.subr.bf16.mxu0 0
        %2139 = vmatpush1.bf16.msra.mxu0 0
        %2140 = vmatprep.subr.bf16.mxu0 0
        %2141 = vmatpush1.bf16.msra.mxu0 0
        %2142 = vmatprep.subr.bf16.mxu0 0
        %2143 = vmatpush1.bf16.msra.mxu0 0
        %2144 = vmatprep.subr.bf16.mxu0 0
        %2145 = vmatpush1.bf16.msra.mxu0 0
        %2146 = vmatprep.subr.bf16.mxu0 0
        %2147 = vmatpush1.bf16.msra.mxu0 0
        %2148 = vmatprep.subr.bf16.mxu0 0
        %2149 = vmatpush1.bf16.msra.mxu0 0
        %2150 = vmatprep.subr.bf16.mxu0 0
        %2151 = vmatpush1.bf16.msra.mxu0 0
        %2152 = vmatprep.mubr.bf16.mxu0 0
        %2153 = vmatmul.mubr.bf16.gmra.mrb[0].mxu0 %v391
        %v2154 = vpop.f32.mrb[0].mxu0
        %v2155 = vadd.f32 0.0, %v2154
        %v2156 = vpop.f32.mrb[0].mxu0
        %v2157 = vpop.f32.mrb[0].mxu0
        %v2158 = vpop.f32.mrb[0].mxu0
        %2159 = vdwg.mxu0
        %v2161 = vsel %vm393, %v2116, 0
        %2163 = vmatprep.subr.bf16.mxu0 0
        %2164 = vmatpush1.bf16.msra.mxu0 %v2161
        %2165 = vmatprep.subr.bf16.mxu0 0
        %2166 = vmatpush1.bf16.msra.mxu0 0
        %2167 = vmatprep.subr.bf16.mxu0 0
        %2168 = vmatpush1.bf16.msra.mxu0 0
        %2169 = vmatprep.subr.bf16.mxu0 0
        %2170 = vmatpush1.bf16.msra.mxu0 0
        %2171 = vmatprep.subr.bf16.mxu0 0
        %2172 = vmatpush1.bf16.msra.mxu0 0
        %2173 = vmatprep.subr.bf16.mxu0 0
        %2174 = vmatpush1.bf16.msra.mxu0 0
        %2175 = vmatprep.subr.bf16.mxu0 0
        %2176 = vmatpush1.bf16.msra.mxu0 0
        %2177 = vmatprep.subr.bf16.mxu0 0
        %2178 = vmatpush1.bf16.msra.mxu0 0
        %2179 = vmatprep.subr.bf16.mxu0 0
        %2180 = vmatpush1.bf16.msra.mxu0 0
        %2181 = vmatprep.subr.bf16.mxu0 0
        %2182 = vmatpush1.bf16.msra.mxu0 0
        %2183 = vmatprep.subr.bf16.mxu0 0
        %2184 = vmatpush1.bf16.msra.mxu0 0
        %2185 = vmatprep.subr.bf16.mxu0 0
        %2186 = vmatpush1.bf16.msra.mxu0 0
        %2187 = vmatprep.subr.bf16.mxu0 0
        %2188 = vmatpush1.bf16.msra.mxu0 0
        %2189 = vmatprep.subr.bf16.mxu0 0
        %2190 = vmatpush1.bf16.msra.mxu0 0
        %2191 = vmatprep.subr.bf16.mxu0 0
        %2192 = vmatpush1.bf16.msra.mxu0 0
        %2193 = vmatprep.subr.bf16.mxu0 0
        %2194 = vmatpush1.bf16.msra.mxu0 0
        %2195 = vmatprep.mubr.bf16.mxu0 0
        %2196 = vmatmul.mubr.bf16.gmra.mrb[0].mxu0 %v438
        %v2197 = vpop.f32.mrb[0].mxu0
        %v2198 = vadd.f32 0.0, %v2197
        %v2199 = vpop.f32.mrb[0].mxu0
        %v2200 = vpop.f32.mrb[0].mxu0
        %v2201 = vpop.f32.mrb[0].mxu0
        %2202 = vdwg.mxu0
        %v2205 = vunpack.c.l.s4 1966171168
        %v2206 = vunpack.c.0.s8 %v2205
        %v2207 = vlaneseq
        %v2208 = vshrl.u32 %v2207, 7
        %v2209 = vsub.s32 %v2206, %v2208
        %v2210 = vrot.slane %v2155, %v2209
        %v2211 = vcombine.high %v2210, %v2210
        %v2213 = vunpack.c.l.s4 1966171168
        %v2214 = vunpack.c.0.s8 %v2213
        %v2215 = vlaneseq
        %v2216 = vshrl.u32 %v2215, 7
        %v2217 = vsub.s32 %v2214, %v2216
        %v2218 = vrot.slane %v2210, %v2217
        %v2220 = vunpack.c.l.s4 1966171168
        %v2221 = vunpack.c.0.s8 %v2220
        %v2222 = vlaneseq
        %v2223 = vshrl.u32 %v2222, 7
        %v2224 = vsub.s32 %v2221, %v2223
        %v2225 = vrot.slane %v2211, %v2224
        %v2226 = vcombine.high %v2218, %v2218
        %v2227 = vcombine.high %v2225, %v2225
        %2232 = vst.msk [vmem:[%s217 + $0x6] sm:$0x1] %vm512, %v2218
        %2233 = vst.msk [vmem:[%s217 + $0xe] sm:$0x1] %vm512, %v2225
        %2234 = vst.msk [vmem:[%s217 + $0x16] sm:$0x1] %vm512, %v2226
        %2235 = vst.msk [vmem:[%s217 + $0x1e] sm:$0x1] %vm512, %v2227
        %v2238 = vunpack.c.l.s4 1966171168
        %v2239 = vunpack.c.0.s8 %v2238
        %v2240 = vlaneseq
        %v2241 = vshrl.u32 %v2240, 7
        %v2242 = vsub.s32 %v2239, %v2241
        %v2243 = vrot.slane %v2198, %v2242
        %v2244 = vcombine.high %v2243, %v2243
        %v2246 = vunpack.c.l.s4 1966171168
        %v2247 = vunpack.c.0.s8 %v2246
        %v2248 = vlaneseq
        %v2249 = vshrl.u32 %v2248, 7
        %v2250 = vsub.s32 %v2247, %v2249
        %v2251 = vrot.slane %v2243, %v2250
        %v2253 = vunpack.c.l.s4 1966171168
        %v2254 = vunpack.c.0.s8 %v2253
        %v2255 = vlaneseq
        %v2256 = vshrl.u32 %v2255, 7
        %v2257 = vsub.s32 %v2254, %v2256
        %v2258 = vrot.slane %v2244, %v2257
        %v2259 = vcombine.high %v2251, %v2251
        %v2260 = vcombine.high %v2258, %v2258
        %2265 = vst.msk [vmem:[%s546 + $0x6] sm:$0x1] %vm512, %v2251
        %2266 = vst.msk [vmem:[%s546 + $0xe] sm:$0x1] %vm512, %v2258
        %2267 = vst.msk [vmem:[%s546 + $0x16] sm:$0x1] %vm512, %v2259
        %2268 = vst.msk [vmem:[%s546 + $0x1e] sm:$0x1] %vm512, %v2260
        %v2269 = vld [vmem:[#allocation2] sm:$0xf]
        %v2270 = vadd.f32 %v2269, %v2155
        %2271 = vst.msk [vmem:[#allocation2] sm:$0xf] %vm236, %v2270
        %v2272 = vld [vmem:[%s554] sm:$0xf]
        %v2273 = vadd.f32 %v2272, %v2198
        %2274 = vst.msk [vmem:[%s554] sm:$0xf] %vm236, %v2273
        %v2275 = vld [vmem:[#allocation3] sm:$0xf]
        %v2276 = vmul.f32 %v2155, %v2155
        %v2277 = vadd.f32 %v2275, %v2276
        %2278 = vst.msk [vmem:[#allocation3] sm:$0xf] %vm236, %v2277
        %v2279 = vld [vmem:[%s562] sm:$0xf]
        %v2280 = vmul.f32 %v2198, %v2198
        %v2281 = vadd.f32 %v2279, %v2280
        %2282 = vst.msk [vmem:[%s562] sm:$0xf] %vm236, %v2281
        %v2283 = vld [vmem:[%s222 + $0x7] sm:$0x1]
        %v2284 = vld [vmem:[%s222 + $0xf] sm:$0x1]
        %v2285 = vld [vmem:[%s222 + $0x17] sm:$0x1]
        %v2286 = vld [vmem:[%s222 + $0x1f] sm:$0x1]
        %vm2287 = vcmp.ge.f32.partialorder %v2283, 0.0
        %vm2288 = vcmp.ge.f32.partialorder %v2284, 0.0
        %vm2289 = vcmp.ge.f32.partialorder %v2285, 0.0
        %vm2290 = vcmp.ge.f32.partialorder %v2286, 0.0
        %v2291 = vmul.f32 %v2283, 0.01
        %v2292 = vmul.f32 %v2284, 0.01
        %v2293 = vmul.f32 %v2285, 0.01
        %v2294 = vmul.f32 %v2286, 0.01
        %v2295 = vsel %vm2287, %v2283, %v2291
        %v2296 = vsel %vm2288, %v2284, %v2292
        %v2297 = vsel %vm2289, %v2285, %v2293
        %v2298 = vsel %vm2290, %v2286, %v2294
        %v2299 = vpack.c.bf16 %v2295, %v2295
        %v2300 = vpack.c.bf16 %v2296, %v2296
        %v2301 = vpack.c.bf16 %v2297, %v2297
        %v2302 = vpack.c.bf16 %v2298, %v2298
        %v2307 = vunpack.c.l.b16 %v2299
        %v2308 = vunpack.c.l.b16 %v2300
        %v2309 = vunpack.c.l.b16 %v2301
        %v2310 = vunpack.c.l.b16 %v2302
        %v2311 = vrot.slane %v2308, 7
        %v2312 = vsel %vm270, %v2311, %v2307
        %v2313 = vrot.slane %v2309, 6
        %v2314 = vsel %vm273, %v2313, %v2312
        %v2315 = vrot.slane %v2310, 5
        %v2316 = vsel %vm276, %v2315, %v2314
        %v2317 = vpack.c.b16 %v2316, %v2316
        %v2319 = vsel %vm291, %v2317, 0
        %2321 = vmatprep.subr.bf16.mxu0 0
        %2322 = vmatpush1.bf16.msra.mxu0 %v287
        %2323 = vmatprep.subr.bf16.mxu0 0
        %2324 = vmatpush1.bf16.msra.mxu0 %v288
        %2325 = vmatprep.subr.bf16.mxu0 0
        %2326 = vmatpush1.bf16.msra.mxu0 0
        %2327 = vmatprep.subr.bf16.mxu0 0
        %2328 = vmatpush1.bf16.msra.mxu0 0
        %2329 = vmatprep.subr.bf16.mxu0 0
        %2330 = vmatpush1.bf16.msra.mxu0 0
        %2331 = vmatprep.subr.bf16.mxu0 0
        %2332 = vmatpush1.bf16.msra.mxu0 0
        %2333 = vmatprep.subr.bf16.mxu0 0
        %2334 = vmatpush1.bf16.msra.mxu0 0
        %2335 = vmatprep.subr.bf16.mxu0 0
        %2336 = vmatpush1.bf16.msra.mxu0 0
        %2337 = vmatprep.subr.bf16.mxu0 0
        %2338 = vmatpush1.bf16.msra.mxu0 0
        %2339 = vmatprep.subr.bf16.mxu0 0
        %2340 = vmatpush1.bf16.msra.mxu0 0
        %2341 = vmatprep.subr.bf16.mxu0 0
        %2342 = vmatpush1.bf16.msra.mxu0 0
        %2343 = vmatprep.subr.bf16.mxu0 0
        %2344 = vmatpush1.bf16.msra.mxu0 0
        %2345 = vmatprep.subr.bf16.mxu0 0
        %2346 = vmatpush1.bf16.msra.mxu0 0
        %2347 = vmatprep.subr.bf16.mxu0 0
        %2348 = vmatpush1.bf16.msra.mxu0 0
        %2349 = vmatprep.subr.bf16.mxu0 0
        %2350 = vmatpush1.bf16.msra.mxu0 0
        %2351 = vmatprep.subr.bf16.mxu0 0
        %2352 = vmatpush1.bf16.msra.mxu0 0
        %2353 = vmatprep.mubr.bf16.mxu0 0
        %2354 = vmatmul.mubr.bf16.gmra.mrb[0].mxu0 %v2319
        %v2355 = vpop.f32.mrb[0].mxu0
        %v2356 = vadd.f32 0.0, %v2355
        %v2357 = vpop.f32.mrb[0].mxu0
        %v2358 = vpop.f32.mrb[0].mxu0
        %v2359 = vpop.f32.mrb[0].mxu0
        %2360 = vdwg.mxu0
        %v2361 = vpack.c.bf16 %v2356, %v2356
        %2362 = vmatprep.subr.bf16.mxu0 0
        %2363 = vmatpush1.bf16.msra.mxu0 %v344
        %2364 = vmatprep.subr.bf16.mxu0 0
        %2365 = vmatpush1.bf16.msra.mxu0 %v345
        %2366 = vmatprep.subr.bf16.mxu0 0
        %2367 = vmatpush1.bf16.msra.mxu0 0
        %2368 = vmatprep.subr.bf16.mxu0 0
        %2369 = vmatpush1.bf16.msra.mxu0 0
        %2370 = vmatprep.subr.bf16.mxu0 0
        %2371 = vmatpush1.bf16.msra.mxu0 0
        %2372 = vmatprep.subr.bf16.mxu0 0
        %2373 = vmatpush1.bf16.msra.mxu0 0
        %2374 = vmatprep.subr.bf16.mxu0 0
        %2375 = vmatpush1.bf16.msra.mxu0 0
        %2376 = vmatprep.subr.bf16.mxu0 0
        %2377 = vmatpush1.bf16.msra.mxu0 0
        %2378 = vmatprep.subr.bf16.mxu0 0
        %2379 = vmatpush1.bf16.msra.mxu0 0
        %2380 = vmatprep.subr.bf16.mxu0 0
        %2381 = vmatpush1.bf16.msra.mxu0 0
        %2382 = vmatprep.subr.bf16.mxu0 0
        %2383 = vmatpush1.bf16.msra.mxu0 0
        %2384 = vmatprep.subr.bf16.mxu0 0
        %2385 = vmatpush1.bf16.msra.mxu0 0
        %2386 = vmatprep.subr.bf16.mxu0 0
        %2387 = vmatpush1.bf16.msra.mxu0 0
        %2388 = vmatprep.subr.bf16.mxu0 0
        %2389 = vmatpush1.bf16.msra.mxu0 0
        %2390 = vmatprep.subr.bf16.mxu0 0
        %2391 = vmatpush1.bf16.msra.mxu0 0
        %2392 = vmatprep.subr.bf16.mxu0 0
        %2393 = vmatpush1.bf16.msra.mxu0 0
        %2394 = vmatprep.mubr.bf16.mxu0 0
        %2395 = vmatmul.mubr.bf16.gmra.mrb[0].mxu0 %v2319
        %v2396 = vpop.f32.mrb[0].mxu0
        %v2397 = vadd.f32 0.0, %v2396
        %v2398 = vpop.f32.mrb[0].mxu0
        %v2399 = vpop.f32.mrb[0].mxu0
        %v2400 = vpop.f32.mrb[0].mxu0
        %2401 = vdwg.mxu0
        %v2402 = vpack.c.bf16 %v2397, %v2397
        %v2404 = vsel %vm393, %v2361, 0
        %2406 = vmatprep.subr.bf16.mxu0 0
        %2407 = vmatpush1.bf16.msra.mxu0 %v2404
        %2408 = vmatprep.subr.bf16.mxu0 0
        %2409 = vmatpush1.bf16.msra.mxu0 0
        %2410 = vmatprep.subr.bf16.mxu0 0
        %2411 = vmatpush1.bf16.msra.mxu0 0
        %2412 = vmatprep.subr.bf16.mxu0 0
        %2413 = vmatpush1.bf16.msra.mxu0 0
        %2414 = vmatprep.subr.bf16.mxu0 0
        %2415 = vmatpush1.bf16.msra.mxu0 0
        %2416 = vmatprep.subr.bf16.mxu0 0
        %2417 = vmatpush1.bf16.msra.mxu0 0
        %2418 = vmatprep.subr.bf16.mxu0 0
        %2419 = vmatpush1.bf16.msra.mxu0 0
        %2420 = vmatprep.subr.bf16.mxu0 0
        %2421 = vmatpush1.bf16.msra.mxu0 0
        %2422 = vmatprep.subr.bf16.mxu0 0
        %2423 = vmatpush1.bf16.msra.mxu0 0
        %2424 = vmatprep.subr.bf16.mxu0 0
        %2425 = vmatpush1.bf16.msra.mxu0 0
        %2426 = vmatprep.subr.bf16.mxu0 0
        %2427 = vmatpush1.bf16.msra.mxu0 0
        %2428 = vmatprep.subr.bf16.mxu0 0
        %2429 = vmatpush1.bf16.msra.mxu0 0
        %2430 = vmatprep.subr.bf16.mxu0 0
        %2431 = vmatpush1.bf16.msra.mxu0 0
        %2432 = vmatprep.subr.bf16.mxu0 0
        %2433 = vmatpush1.bf16.msra.mxu0 0
        %2434 = vmatprep.subr.bf16.mxu0 0
        %2435 = vmatpush1.bf16.msra.mxu0 0
        %2436 = vmatprep.subr.bf16.mxu0 0
        %2437 = vmatpush1.bf16.msra.mxu0 0
        %2438 = vmatprep.mubr.bf16.mxu0 0
        %2439 = vmatmul.mubr.bf16.gmra.mrb[0].mxu0 %v391
        %v2440 = vpop.f32.mrb[0].mxu0
        %v2441 = vadd.f32 0.0, %v2440
        %v2442 = vpop.f32.mrb[0].mxu0
        %v2443 = vpop.f32.mrb[0].mxu0
        %v2444 = vpop.f32.mrb[0].mxu0
        %2445 = vdwg.mxu0
        %v2447 = vsel %vm393, %v2402, 0
        %2449 = vmatprep.subr.bf16.mxu0 0
        %2450 = vmatpush1.bf16.msra.mxu0 %v2447
        %2451 = vmatprep.subr.bf16.mxu0 0
        %2452 = vmatpush1.bf16.msra.mxu0 0
        %2453 = vmatprep.subr.bf16.mxu0 0
        %2454 = vmatpush1.bf16.msra.mxu0 0
        %2455 = vmatprep.subr.bf16.mxu0 0
        %2456 = vmatpush1.bf16.msra.mxu0 0
        %2457 = vmatprep.subr.bf16.mxu0 0
        %2458 = vmatpush1.bf16.msra.mxu0 0
        %2459 = vmatprep.subr.bf16.mxu0 0
        %2460 = vmatpush1.bf16.msra.mxu0 0
        %2461 = vmatprep.subr.bf16.mxu0 0
        %2462 = vmatpush1.bf16.msra.mxu0 0
        %2463 = vmatprep.subr.bf16.mxu0 0
        %2464 = vmatpush1.bf16.msra.mxu0 0
        %2465 = vmatprep.subr.bf16.mxu0 0
        %2466 = vmatpush1.bf16.msra.mxu0 0
        %2467 = vmatprep.subr.bf16.mxu0 0
        %2468 = vmatpush1.bf16.msra.mxu0 0
        %2469 = vmatprep.subr.bf16.mxu0 0
        %2470 = vmatpush1.bf16.msra.mxu0 0
        %2471 = vmatprep.subr.bf16.mxu0 0
        %2472 = vmatpush1.bf16.msra.mxu0 0
        %2473 = vmatprep.subr.bf16.mxu0 0
        %2474 = vmatpush1.bf16.msra.mxu0 0
        %2475 = vmatprep.subr.bf16.mxu0 0
        %2476 = vmatpush1.bf16.msra.mxu0 0
        %2477 = vmatprep.subr.bf16.mxu0 0
        %2478 = vmatpush1.bf16.msra.mxu0 0
        %2479 = vmatprep.subr.bf16.mxu0 0
        %2480 = vmatpush1.bf16.msra.mxu0 0
        %2481 = vmatprep.mubr.bf16.mxu0 0
        %2482 = vmatmul.mubr.bf16.gmra.mrb[0].mxu0 %v438
        %v2483 = vpop.f32.mrb[0].mxu0
        %v2484 = vadd.f32 0.0, %v2483
        %v2485 = vpop.f32.mrb[0].mxu0
        %v2486 = vpop.f32.mrb[0].mxu0
        %v2487 = vpop.f32.mrb[0].mxu0
        %2488 = vdwg.mxu0
        %v2491 = vunpack.c.l.s4 1966171168
        %v2492 = vunpack.c.0.s8 %v2491
        %v2493 = vlaneseq
        %v2494 = vshrl.u32 %v2493, 7
        %v2495 = vsub.s32 %v2492, %v2494
        %v2496 = vrot.slane %v2441, %v2495
        %v2497 = vcombine.high %v2496, %v2496
        %v2499 = vunpack.c.l.s4 1966171168
        %v2500 = vunpack.c.0.s8 %v2499
        %v2501 = vlaneseq
        %v2502 = vshrl.u32 %v2501, 7
        %v2503 = vsub.s32 %v2500, %v2502
        %v2504 = vrot.slane %v2496, %v2503
        %v2506 = vunpack.c.l.s4 1966171168
        %v2507 = vunpack.c.0.s8 %v2506
        %v2508 = vlaneseq
        %v2509 = vshrl.u32 %v2508, 7
        %v2510 = vsub.s32 %v2507, %v2509
        %v2511 = vrot.slane %v2497, %v2510
        %v2512 = vcombine.high %v2504, %v2504
        %v2513 = vcombine.high %v2511, %v2511
        %2518 = vst.msk [vmem:[%s217 + $0x7] sm:$0x1] %vm512, %v2504
        %2519 = vst.msk [vmem:[%s217 + $0xf] sm:$0x1] %vm512, %v2511
        %2520 = vst.msk [vmem:[%s217 + $0x17] sm:$0x1] %vm512, %v2512
        %2521 = vst.msk [vmem:[%s217 + $0x1f] sm:$0x1] %vm512, %v2513
        %v2524 = vunpack.c.l.s4 1966171168
        %v2525 = vunpack.c.0.s8 %v2524
        %v2526 = vlaneseq
        %v2527 = vshrl.u32 %v2526, 7
        %v2528 = vsub.s32 %v2525, %v2527
        %v2529 = vrot.slane %v2484, %v2528
        %v2530 = vcombine.high %v2529, %v2529
        %v2532 = vunpack.c.l.s4 1966171168
        %v2533 = vunpack.c.0.s8 %v2532
        %v2534 = vlaneseq
        %v2535 = vshrl.u32 %v2534, 7
        %v2536 = vsub.s32 %v2533, %v2535
        %v2537 = vrot.slane %v2529, %v2536
        %v2539 = vunpack.c.l.s4 1966171168
        %v2540 = vunpack.c.0.s8 %v2539
        %v2541 = vlaneseq
        %v2542 = vshrl.u32 %v2541, 7
        %v2543 = vsub.s32 %v2540, %v2542
        %v2544 = vrot.slane %v2530, %v2543
        %v2545 = vcombine.high %v2537, %v2537
        %v2546 = vcombine.high %v2544, %v2544
        %2551 = vst.msk [vmem:[%s546 + $0x7] sm:$0x1] %vm512, %v2537
        %2552 = vst.msk [vmem:[%s546 + $0xf] sm:$0x1] %vm512, %v2544
        %2553 = vst.msk [vmem:[%s546 + $0x17] sm:$0x1] %vm512, %v2545
        %2554 = vst.msk [vmem:[%s546 + $0x1f] sm:$0x1] %vm512, %v2546
        %v2555 = vld [vmem:[#allocation2] sm:$0xf]
        %v2556 = vadd.f32 %v2555, %v2441
        %2557 = vst.msk [vmem:[#allocation2] sm:$0xf] %vm236, %v2556
        %v2558 = vld [vmem:[%s554] sm:$0xf]
        %v2559 = vadd.f32 %v2558, %v2484
        %2560 = vst.msk [vmem:[%s554] sm:$0xf] %vm236, %v2559
        %v2561 = vld [vmem:[#allocation3] sm:$0xf]
        %v2562 = vmul.f32 %v2441, %v2441
        %v2563 = vadd.f32 %v2561, %v2562
        %2564 = vst.msk [vmem:[#allocation3] sm:$0xf] %vm236, %v2563
        %v2565 = vld [vmem:[%s562] sm:$0xf]
        %v2566 = vmul.f32 %v2484, %v2484
        %v2567 = vadd.f32 %v2565, %v2566
        %2568 = vst.msk [vmem:[%s562] sm:$0xf] %vm236, %v2567
        %v2569 = vld [vmem:[#allocation2] sm:$0xf]
        %v2570 = vld [vmem:[#allocation2 + $0x4] sm:$0xf]
        %v2571 = vsel %vm236, %v2569, 0.0
        %2572 = vadd.xlane.f32.xlu0 %v2571
        %v2573 = vpop.xlane.xlu0 %2572
        %v2574 = vsel %vm236, %v2570, 0.0
        %2575 = vadd.xlane.f32.xlu0 %v2574
        %v2576 = vpop.xlane.xlu0 %2575
        %v2577 = vld [vmem:[#allocation3] sm:$0xf]
        %v2578 = vld [vmem:[#allocation3 + $0x4] sm:$0xf]
        %v2579 = vsel %vm236, %v2577, 0.0
        %2580 = vadd.xlane.f32.xlu0 %v2579
        %v2581 = vpop.xlane.xlu0 %2580
        %v2582 = vsel %vm236, %v2578, 0.0
        %2583 = vadd.xlane.f32.xlu0 %v2582
        %v2584 = vpop.xlane.xlu0 %2583
        %v2585 = vmul.f32 %v2573, 0.015625
        %v2586 = vmul.f32 %v2576, 0.015625
        %v2587 = vmul.f32 %v2581, 0.015625
        %v2588 = vmul.f32 %v2584, 0.015625
        %v2589 = vmul.f32 %v2585, %v2585
        %v2590 = vmul.f32 %v2586, %v2586
        %v2591 = vsub.f32 %v2587, %v2589
        %v2592 = vsub.f32 %v2588, %v2590
        %v2593 = vmax.f32 %v2591, 0.0
        %v2594 = vmax.f32 %v2592, 0.0
        %v2595 = vadd.f32 %v2593, 1e-05
        %v2596 = vadd.f32 %v2594, 1e-05
        %v2597 = vrsqrt.pop %v2595
        %v2598 = vrsqrt.pop %v2596
        %v2599 = vld [vmem:[%s3] sm:$0xf]
        %v2600 = vld [vmem:[%s3 + $0x4] sm:$0xf]
        %v2601 = vmul.f32 %v2597, %v2599
        %v2602 = vmul.f32 %v2598, %v2600
        %v2603 = vld [vmem:[%s4] sm:$0xf]
        %v2604 = vld [vmem:[%s4 + $0x4] sm:$0xf]
        %v2605 = vmul.f32 %v2585, %v2601
        %v2606 = vmul.f32 %v2586, %v2602
        %v2607 = vsub.f32 %v2603, %v2605
        %v2608 = vsub.f32 %v2604, %v2606
        %2610 = vset.pattern.permute.xlu0 0
        %2611 = vperm.xlu0 %2610, %v2601
        %v2612 = vpop.permute.xlu0 %2611
        %2614 = vset.pattern.permute.xlu0 0
        %2615 = vperm.xlu0 %2614, %v2602
        %v2616 = vpop.permute.xlu0 %2615
        %2618 = vset.pattern.permute.xlu0 0
        %2619 = vperm.xlu0 %2618, %v2607
        %v2620 = vpop.permute.xlu0 %2619
        %2622 = vset.pattern.permute.xlu0 0
        %2623 = vperm.xlu0 %2622, %v2608
        %v2624 = vpop.permute.xlu0 %2623
        %v2625 = vld [vmem:[%s217] sm:$0x1]
        %v2626 = vld [vmem:[%s217 + $0x8] sm:$0x1]
        %v2627 = vld [vmem:[%s217 + $0x10] sm:$0x1]
        %v2628 = vld [vmem:[%s217 + $0x18] sm:$0x1]
        %v2629 = vld [vmem:[%s217 + $0x20] sm:$0x1]
        %v2630 = vld [vmem:[%s217 + $0x28] sm:$0x1]
        %v2631 = vld [vmem:[%s217 + $0x30] sm:$0x1]
        %v2632 = vld [vmem:[%s217 + $0x38] sm:$0x1]
        %v2633 = vrot.slane %v2612, 1
        %v2634 = vrot.slane %v2612, 2
        %v2635 = vrot.slane %v2612, 3
        %v2636 = vrot.slane %v2616, 1
        %v2637 = vrot.slane %v2616, 2
        %v2638 = vrot.slane %v2616, 3
        %v2647 = vmul.f32 %v2625, %v2612
        %v2648 = vmul.f32 %v2626, %v2633
        %v2649 = vmul.f32 %v2627, %v2634
        %v2650 = vmul.f32 %v2628, %v2635
        %v2651 = vmul.f32 %v2629, %v2616
        %v2652 = vmul.f32 %v2630, %v2636
        %v2653 = vmul.f32 %v2631, %v2637
        %v2654 = vmul.f32 %v2632, %v2638
        %v2655 = vrot.slane %v2620, 1
        %v2656 = vrot.slane %v2620, 2
        %v2657 = vrot.slane %v2620, 3
        %v2658 = vrot.slane %v2624, 1
        %v2659 = vrot.slane %v2624, 2
        %v2660 = vrot.slane %v2624, 3
        %v2669 = vadd.f32 %v2647, %v2620
        %v2670 = vadd.f32 %v2648, %v2655
        %v2671 = vadd.f32 %v2649, %v2656
        %v2672 = vadd.f32 %v2650, %v2657
        %v2673 = vadd.f32 %v2651, %v2624
        %v2674 = vadd.f32 %v2652, %v2658
        %v2675 = vadd.f32 %v2653, %v2659
        %v2676 = vadd.f32 %v2654, %v2660
        %2677 = vst.msk [vmem:[%s217] sm:$0x1] %vm512, %v2669
        %2678 = vst.msk [vmem:[%s217 + $0x8] sm:$0x1] %vm512, %v2670
        %2679 = vst.msk [vmem:[%s217 + $0x10] sm:$0x1] %vm512, %v2671
        %2680 = vst.msk [vmem:[%s217 + $0x18] sm:$0x1] %vm512, %v2672
        %2681 = vst.msk [vmem:[%s217 + $0x20] sm:$0x1] %vm512, %v2673
        %2682 = vst.msk [vmem:[%s217 + $0x28] sm:$0x1] %vm512, %v2674
        %2683 = vst.msk [vmem:[%s217 + $0x30] sm:$0x1] %vm512, %v2675
        %2684 = vst.msk [vmem:[%s217 + $0x38] sm:$0x1] %vm512, %v2676
        %v2685 = vld [vmem:[%s217 + $0x1] sm:$0x1]
        %v2686 = vld [vmem:[%s217 + $0x9] sm:$0x1]
        %v2687 = vld [vmem:[%s217 + $0x11] sm:$0x1]
        %v2688 = vld [vmem:[%s217 + $0x19] sm:$0x1]
        %v2689 = vld [vmem:[%s217 + $0x21] sm:$0x1]
        %v2690 = vld [vmem:[%s217 + $0x29] sm:$0x1]
        %v2691 = vld [vmem:[%s217 + $0x31] sm:$0x1]
        %v2692 = vld [vmem:[%s217 + $0x39] sm:$0x1]
        %v2693 = vmul.f32 %v2685, %v2612
        %v2694 = vmul.f32 %v2686, %v2633
        %v2695 = vmul.f32 %v2687, %v2634
        %v2696 = vmul.f32 %v2688, %v2635
        %v2697 = vmul.f32 %v2689, %v2616
        %v2698 = vmul.f32 %v2690, %v2636
        %v2699 = vmul.f32 %v2691, %v2637
        %v2700 = vmul.f32 %v2692, %v2638
        %v2701 = vadd.f32 %v2693, %v2620
        %v2702 = vadd.f32 %v2694, %v2655
        %v2703 = vadd.f32 %v2695, %v2656
        %v2704 = vadd.f32 %v2696, %v2657
        %v2705 = vadd.f32 %v2697, %v2624
        %v2706 = vadd.f32 %v2698, %v2658
        %v2707 = vadd.f32 %v2699, %v2659
        %v2708 = vadd.f32 %v2700, %v2660
        %2709 = vst.msk [vmem:[%s217 + $0x1] sm:$0x1] %vm512, %v2701
        %2710 = vst.msk [vmem:[%s217 + $0x9] sm:$0x1] %vm512, %v2702
        %2711 = vst.msk [vmem:[%s217 + $0x11] sm:$0x1] %vm512, %v2703
        %2712 = vst.msk [vmem:[%s217 + $0x19] sm:$0x1] %vm512, %v2704
        %2713 = vst.msk [vmem:[%s217 + $0x21] sm:$0x1] %vm512, %v2705
        %2714 = vst.msk [vmem:[%s217 + $0x29] sm:$0x1] %vm512, %v2706
        %2715 = vst.msk [vmem:[%s217 + $0x31] sm:$0x1] %vm512, %v2707
        %2716 = vst.msk [vmem:[%s217 + $0x39] sm:$0x1] %vm512, %v2708
        %v2717 = vld [vmem:[%s217 + $0x2] sm:$0x1]
        %v2718 = vld [vmem:[%s217 + $0xa] sm:$0x1]
        %v2719 = vld [vmem:[%s217 + $0x12] sm:$0x1]
        %v2720 = vld [vmem:[%s217 + $0x1a] sm:$0x1]
        %v2721 = vld [vmem:[%s217 + $0x22] sm:$0x1]
        %v2722 = vld [vmem:[%s217 + $0x2a] sm:$0x1]
        %v2723 = vld [vmem:[%s217 + $0x32] sm:$0x1]
        %v2724 = vld [vmem:[%s217 + $0x3a] sm:$0x1]
        %v2725 = vmul.f32 %v2717, %v2612
        %v2726 = vmul.f32 %v2718, %v2633
        %v2727 = vmul.f32 %v2719, %v2634
        %v2728 = vmul.f32 %v2720, %v2635
        %v2729 = vmul.f32 %v2721, %v2616
        %v2730 = vmul.f32 %v2722, %v2636
        %v2731 = vmul.f32 %v2723, %v2637
        %v2732 = vmul.f32 %v2724, %v2638
        %v2733 = vadd.f32 %v2725, %v2620
        %v2734 = vadd.f32 %v2726, %v2655
        %v2735 = vadd.f32 %v2727, %v2656
        %v2736 = vadd.f32 %v2728, %v2657
        %v2737 = vadd.f32 %v2729, %v2624
        %v2738 = vadd.f32 %v2730, %v2658
        %v2739 = vadd.f32 %v2731, %v2659
        %v2740 = vadd.f32 %v2732, %v2660
        %2741 = vst.msk [vmem:[%s217 + $0x2] sm:$0x1] %vm512, %v2733
        %2742 = vst.msk [vmem:[%s217 + $0xa] sm:$0x1] %vm512, %v2734
        %2743 = vst.msk [vmem:[%s217 + $0x12] sm:$0x1] %vm512, %v2735
        %2744 = vst.msk [vmem:[%s217 + $0x1a] sm:$0x1] %vm512, %v2736
        %2745 = vst.msk [vmem:[%s217 + $0x22] sm:$0x1] %vm512, %v2737
        %2746 = vst.msk [vmem:[%s217 + $0x2a] sm:$0x1] %vm512, %v2738
        %2747 = vst.msk [vmem:[%s217 + $0x32] sm:$0x1] %vm512, %v2739
        %2748 = vst.msk [vmem:[%s217 + $0x3a] sm:$0x1] %vm512, %v2740
        %v2749 = vld [vmem:[%s217 + $0x3] sm:$0x1]
        %v2750 = vld [vmem:[%s217 + $0xb] sm:$0x1]
        %v2751 = vld [vmem:[%s217 + $0x13] sm:$0x1]
        %v2752 = vld [vmem:[%s217 + $0x1b] sm:$0x1]
        %v2753 = vld [vmem:[%s217 + $0x23] sm:$0x1]
        %v2754 = vld [vmem:[%s217 + $0x2b] sm:$0x1]
        %v2755 = vld [vmem:[%s217 + $0x33] sm:$0x1]
        %v2756 = vld [vmem:[%s217 + $0x3b] sm:$0x1]
        %v2757 = vmul.f32 %v2749, %v2612
        %v2758 = vmul.f32 %v2750, %v2633
        %v2759 = vmul.f32 %v2751, %v2634
        %v2760 = vmul.f32 %v2752, %v2635
        %v2761 = vmul.f32 %v2753, %v2616
        %v2762 = vmul.f32 %v2754, %v2636
        %v2763 = vmul.f32 %v2755, %v2637
        %v2764 = vmul.f32 %v2756, %v2638
        %v2765 = vadd.f32 %v2757, %v2620
        %v2766 = vadd.f32 %v2758, %v2655
        %v2767 = vadd.f32 %v2759, %v2656
        %v2768 = vadd.f32 %v2760, %v2657
        %v2769 = vadd.f32 %v2761, %v2624
        %v2770 = vadd.f32 %v2762, %v2658
        %v2771 = vadd.f32 %v2763, %v2659
        %v2772 = vadd.f32 %v2764, %v2660
        %2773 = vst.msk [vmem:[%s217 + $0x3] sm:$0x1] %vm512, %v2765
        %2774 = vst.msk [vmem:[%s217 + $0xb] sm:$0x1] %vm512, %v2766
        %2775 = vst.msk [vmem:[%s217 + $0x13] sm:$0x1] %vm512, %v2767
        %2776 = vst.msk [vmem:[%s217 + $0x1b] sm:$0x1] %vm512, %v2768
        %2777 = vst.msk [vmem:[%s217 + $0x23] sm:$0x1] %vm512, %v2769
        %2778 = vst.msk [vmem:[%s217 + $0x2b] sm:$0x1] %vm512, %v2770
        %2779 = vst.msk [vmem:[%s217 + $0x33] sm:$0x1] %vm512, %v2771
        %2780 = vst.msk [vmem:[%s217 + $0x3b] sm:$0x1] %vm512, %v2772
        %v2781 = vld [vmem:[%s217 + $0x4] sm:$0x1]
        %v2782 = vld [vmem:[%s217 + $0xc] sm:$0x1]
        %v2783 = vld [vmem:[%s217 + $0x14] sm:$0x1]
        %v2784 = vld [vmem:[%s217 + $0x1c] sm:$0x1]
        %v2785 = vld [vmem:[%s217 + $0x24] sm:$0x1]
        %v2786 = vld [vmem:[%s217 + $0x2c] sm:$0x1]
        %v2787 = vld [vmem:[%s217 + $0x34] sm:$0x1]
        %v2788 = vld [vmem:[%s217 + $0x3c] sm:$0x1]
        %v2789 = vmul.f32 %v2781, %v2612
        %v2790 = vmul.f32 %v2782, %v2633
        %v2791 = vmul.f32 %v2783, %v2634
        %v2792 = vmul.f32 %v2784, %v2635
        %v2793 = vmul.f32 %v2785, %v2616
        %v2794 = vmul.f32 %v2786, %v2636
        %v2795 = vmul.f32 %v2787, %v2637
        %v2796 = vmul.f32 %v2788, %v2638
        %v2797 = vadd.f32 %v2789, %v2620
        %v2798 = vadd.f32 %v2790, %v2655
        %v2799 = vadd.f32 %v2791, %v2656
        %v2800 = vadd.f32 %v2792, %v2657
        %v2801 = vadd.f32 %v2793, %v2624
        %v2802 = vadd.f32 %v2794, %v2658
        %v2803 = vadd.f32 %v2795, %v2659
        %v2804 = vadd.f32 %v2796, %v2660
        %2805 = vst.msk [vmem:[%s217 + $0x4] sm:$0x1] %vm512, %v2797
        %2806 = vst.msk [vmem:[%s217 + $0xc] sm:$0x1] %vm512, %v2798
        %2807 = vst.msk [vmem:[%s217 + $0x14] sm:$0x1] %vm512, %v2799
        %2808 = vst.msk [vmem:[%s217 + $0x1c] sm:$0x1] %vm512, %v2800
        %2809 = vst.msk [vmem:[%s217 + $0x24] sm:$0x1] %vm512, %v2801
        %2810 = vst.msk [vmem:[%s217 + $0x2c] sm:$0x1] %vm512, %v2802
        %2811 = vst.msk [vmem:[%s217 + $0x34] sm:$0x1] %vm512, %v2803
        %2812 = vst.msk [vmem:[%s217 + $0x3c] sm:$0x1] %vm512, %v2804
        %v2813 = vld [vmem:[%s217 + $0x5] sm:$0x1]
        %v2814 = vld [vmem:[%s217 + $0xd] sm:$0x1]
        %v2815 = vld [vmem:[%s217 + $0x15] sm:$0x1]
        %v2816 = vld [vmem:[%s217 + $0x1d] sm:$0x1]
        %v2817 = vld [vmem:[%s217 + $0x25] sm:$0x1]
        %v2818 = vld [vmem:[%s217 + $0x2d] sm:$0x1]
        %v2819 = vld [vmem:[%s217 + $0x35] sm:$0x1]
        %v2820 = vld [vmem:[%s217 + $0x3d] sm:$0x1]
        %v2821 = vmul.f32 %v2813, %v2612
        %v2822 = vmul.f32 %v2814, %v2633
        %v2823 = vmul.f32 %v2815, %v2634
        %v2824 = vmul.f32 %v2816, %v2635
        %v2825 = vmul.f32 %v2817, %v2616
        %v2826 = vmul.f32 %v2818, %v2636
        %v2827 = vmul.f32 %v2819, %v2637
        %v2828 = vmul.f32 %v2820, %v2638
        %v2829 = vadd.f32 %v2821, %v2620
        %v2830 = vadd.f32 %v2822, %v2655
        %v2831 = vadd.f32 %v2823, %v2656
        %v2832 = vadd.f32 %v2824, %v2657
        %v2833 = vadd.f32 %v2825, %v2624
        %v2834 = vadd.f32 %v2826, %v2658
        %v2835 = vadd.f32 %v2827, %v2659
        %v2836 = vadd.f32 %v2828, %v2660
        %2837 = vst.msk [vmem:[%s217 + $0x5] sm:$0x1] %vm512, %v2829
        %2838 = vst.msk [vmem:[%s217 + $0xd] sm:$0x1] %vm512, %v2830
        %2839 = vst.msk [vmem:[%s217 + $0x15] sm:$0x1] %vm512, %v2831
        %2840 = vst.msk [vmem:[%s217 + $0x1d] sm:$0x1] %vm512, %v2832
        %2841 = vst.msk [vmem:[%s217 + $0x25] sm:$0x1] %vm512, %v2833
        %2842 = vst.msk [vmem:[%s217 + $0x2d] sm:$0x1] %vm512, %v2834
        %2843 = vst.msk [vmem:[%s217 + $0x35] sm:$0x1] %vm512, %v2835
        %2844 = vst.msk [vmem:[%s217 + $0x3d] sm:$0x1] %vm512, %v2836
        %v2845 = vld [vmem:[%s217 + $0x6] sm:$0x1]
        %v2846 = vld [vmem:[%s217 + $0xe] sm:$0x1]
        %v2847 = vld [vmem:[%s217 + $0x16] sm:$0x1]
        %v2848 = vld [vmem:[%s217 + $0x1e] sm:$0x1]
        %v2849 = vld [vmem:[%s217 + $0x26] sm:$0x1]
        %v2850 = vld [vmem:[%s217 + $0x2e] sm:$0x1]
        %v2851 = vld [vmem:[%s217 + $0x36] sm:$0x1]
        %v2852 = vld [vmem:[%s217 + $0x3e] sm:$0x1]
        %v2853 = vmul.f32 %v2845, %v2612
        %v2854 = vmul.f32 %v2846, %v2633
        %v2855 = vmul.f32 %v2847, %v2634
        %v2856 = vmul.f32 %v2848, %v2635
        %v2857 = vmul.f32 %v2849, %v2616
        %v2858 = vmul.f32 %v2850, %v2636
        %v2859 = vmul.f32 %v2851, %v2637
        %v2860 = vmul.f32 %v2852, %v2638
        %v2861 = vadd.f32 %v2853, %v2620
        %v2862 = vadd.f32 %v2854, %v2655
        %v2863 = vadd.f32 %v2855, %v2656
        %v2864 = vadd.f32 %v2856, %v2657
        %v2865 = vadd.f32 %v2857, %v2624
        %v2866 = vadd.f32 %v2858, %v2658
        %v2867 = vadd.f32 %v2859, %v2659
        %v2868 = vadd.f32 %v2860, %v2660
        %2869 = vst.msk [vmem:[%s217 + $0x6] sm:$0x1] %vm512, %v2861
        %2870 = vst.msk [vmem:[%s217 + $0xe] sm:$0x1] %vm512, %v2862
        %2871 = vst.msk [vmem:[%s217 + $0x16] sm:$0x1] %vm512, %v2863
        %2872 = vst.msk [vmem:[%s217 + $0x1e] sm:$0x1] %vm512, %v2864
        %2873 = vst.msk [vmem:[%s217 + $0x26] sm:$0x1] %vm512, %v2865
        %2874 = vst.msk [vmem:[%s217 + $0x2e] sm:$0x1] %vm512, %v2866
        %2875 = vst.msk [vmem:[%s217 + $0x36] sm:$0x1] %vm512, %v2867
        %2876 = vst.msk [vmem:[%s217 + $0x3e] sm:$0x1] %vm512, %v2868
        %v2877 = vld [vmem:[%s217 + $0x7] sm:$0x1]
        %v2878 = vld [vmem:[%s217 + $0xf] sm:$0x1]
        %v2879 = vld [vmem:[%s217 + $0x17] sm:$0x1]
        %v2880 = vld [vmem:[%s217 + $0x1f] sm:$0x1]
        %v2881 = vld [vmem:[%s217 + $0x27] sm:$0x1]
        %v2882 = vld [vmem:[%s217 + $0x2f] sm:$0x1]
        %v2883 = vld [vmem:[%s217 + $0x37] sm:$0x1]
        %v2884 = vld [vmem:[%s217 + $0x3f] sm:$0x1]
        %v2885 = vmul.f32 %v2877, %v2612
        %v2886 = vmul.f32 %v2878, %v2633
        %v2887 = vmul.f32 %v2879, %v2634
        %v2888 = vmul.f32 %v2880, %v2635
        %v2889 = vmul.f32 %v2881, %v2616
        %v2890 = vmul.f32 %v2882, %v2636
        %v2891 = vmul.f32 %v2883, %v2637
        %v2892 = vmul.f32 %v2884, %v2638
        %v2893 = vadd.f32 %v2885, %v2620
        %v2894 = vadd.f32 %v2886, %v2655
        %v2895 = vadd.f32 %v2887, %v2656
        %v2896 = vadd.f32 %v2888, %v2657
        %v2897 = vadd.f32 %v2889, %v2624
        %v2898 = vadd.f32 %v2890, %v2658
        %v2899 = vadd.f32 %v2891, %v2659
        %v2900 = vadd.f32 %v2892, %v2660
        %2901 = vst.msk [vmem:[%s217 + $0x7] sm:$0x1] %vm512, %v2893
        %2902 = vst.msk [vmem:[%s217 + $0xf] sm:$0x1] %vm512, %v2894
        %2903 = vst.msk [vmem:[%s217 + $0x17] sm:$0x1] %vm512, %v2895
        %2904 = vst.msk [vmem:[%s217 + $0x1f] sm:$0x1] %vm512, %v2896
        %2905 = vst.msk [vmem:[%s217 + $0x27] sm:$0x1] %vm512, %v2897
        %2906 = vst.msk [vmem:[%s217 + $0x2f] sm:$0x1] %vm512, %v2898
        %2907 = vst.msk [vmem:[%s217 + $0x37] sm:$0x1] %vm512, %v2899
        %2908 = vst.msk [vmem:[%s217 + $0x3f] sm:$0x1] %vm512, %v2900
        %s2909 = sand.u32 %s137, 1
        %s2910 = scalar_lea.sflag [#allocation5], %s2909
        %s2911 = sand.u32 %s137, 1
        %s2912 = smul.addr %s2911, 64
        %s2913 = scalar_lea.vmem [#allocation4], %s2912
        // Predicated region
        $region41: #{factorized_reduce.1} parent=39 // pred_check
          %p2914 = pneg %p147
        $region42: #{factorized_reduce.1} parent=39 // pred_check_branch
          %2916 = sbr.rel (%p2914) target = $region44
        $region43: #{factorized_reduce.1} parent=39 // pred_region
          %s2918 = ssub.s32 1024, 1024
          %2919 = vsyncadd %s2910, %s2918
          %s2920 = smul.addr %s19, 8
          %s2921 = smul.addr %s2920, 128
          %s2922 = scalar_lea.hbm %s5, %s2921
          %s2923 = sshll.u32 %s2913, 4
          %s2924 = int_to_ptr.vmem [resolvable:$true] %s2923
          %2929 = dma.vmem_to_hbm [thread:$0]  %s2924, 1024, %s2922, %s2910, 128, 128, 8
        $region44: #{factorized_reduce.1} parent=39 // pred_fallthru
          _
      $region40: #{factorized_reduce.1} parent=5 // pred_fallthru
        _
      %p2930 = scmp.le.s32.totalorder 2, %s14
      // Predicated region
      $region45: #{factorized_reduce.1} parent=5 // pred_check
        %p2931 = pneg %p2930
      $region46: #{factorized_reduce.1} parent=5 // pred_check_branch
        %2933 = sbr.rel (%p2931) target = $region48
      $region47: #{factorized_reduce.1} parent=5 // pred_region
        %s2934 = ssub.s32 %s14, 2
        // Predicated region
        $region49: #{factorized_reduce.1} parent=47 // pred_check
          %p2935 = pneg %p153
        $region50: #{factorized_reduce.1} parent=47 // pred_check_branch
          %2937 = sbr.rel (%p2935) target = $region52
        $region51: #{factorized_reduce.1} parent=47 // pred_region
          %s2938 = sand.u32 %s138, 1
          %s2939 = scalar_lea.sflag [#allocation5], %s2938
          %s2940 = sand.u32 %s138, 1
          %s2941 = smul.addr %s2940, 64
          %s2942 = scalar_lea.vmem [#allocation4], %s2941
          %2943 = dma.done %s2939, 1024
        $region52: #{factorized_reduce.1} parent=47 // pred_fallthru
          _
      $region48: #{factorized_reduce.1} parent=5 // pred_fallthru
        _
    $region6: #{factorized_reduce.1} parent=1 // loop_footer
      %s18 = sadd.s32 1, %s14
    $region7: #{factorized_reduce.1} parent=1 // loop_footer_branch
      %13 = sbr.rel target = $region3
    $region8: #{factorized_reduce.1} parent=1 // loop_exit
      _
    %2944 = vsyncpa [#allocation5], 1
    %s2945 = scalar_lea.sflag [#allocation5], 1
    %2946 = vsyncpa %s2945, 1

</llo_original>
